<compile_context>
chip_gen: v5e
topology: v5e:2x2
jax: 0.10.0
libtpu: 0.0.40
codegen_flags: <defaults>
</compile_context>

<pallas_src>
import functools

import jax
import jax.numpy as jnp
from jax.experimental import pallas as pl
from jax.experimental.pallas import tpu as pltpu


def _round_up(x, m):
    return (x + m - 1) // m * m


def _fit_tiles(n, t_req, align):
    """Pick (n_pad, tile, num_tiles) with tile % align == 0, minimizing padding
    while staying near the requested tile size (prefers the smaller tile on
    ties so tm never balloons past the vreg-friendly range)."""
    n_al = _round_up(max(n, 1), align)
    t_req = max(align, min(_round_up(t_req, align), n_al))
    base = -(-n_al // t_req)
    cands = []
    for num in {base, max(1, base - 1)}:
        t = _round_up(-(-n_al // num), align)
        cands.append((num * t, t, num))
    n_pad, t, num = min(cands)
    return n_pad, t, num


def _gcn_kernel(a_ref, z_ref, b1_ref, w2_ref, b2_ref, o_ref, acc_ref, *, tk):
    """One (row-tile, K-tile) grid step of
         sigmoid( (tanh( A @ (X @ W1.T) + b1 )) . w2 + b2 ).

    Inner loop (every K step): bf16 A tile @ resident bf16 Z slice, f32 acc.
    Epilogue (last K step only): +b1, tanh, H->1 VPU reduction, sigmoid.
    """
    k = pl.program_id(1)

    @pl.when(k == 0)
    def _():
        acc_ref[...] = jnp.zeros_like(acc_ref)

    k_start = pl.multiple_of(k * tk, tk)
    z_blk = z_ref[pl.ds(k_start, tk), :]                       # (tk, H) bf16
    acc_ref[...] += jnp.dot(a_ref[...], z_blk,
                            preferred_element_type=jnp.float32)

    @pl.when(k == pl.num_programs(1) - 1)
    def _():
        h = jnp.tanh(acc_ref[...] + b1_ref[...])               # (tm, H) f32
        # H -> 1 projection: VPU multiply + lane reduce (avoid 1-wide MXU matmul).
        y = jnp.sum(h * w2_ref[...], axis=-1, keepdims=True) + b2_ref[0]
        o_ref[...] = jax.nn.sigmoid(y)


def build_norm_adjacency(edge_index, edge_attr, num_nodes,
                         n_pad_rows=None, n_pad_cols=None, dtype=jnp.float32):
    """Matches the module's GCNConv: add self loops (attr=1.0), deg = unweighted
    out-degree over `row` (incl. self loops), norm = deg^-1/2[row]*deg^-1/2[col],
    'add' aggregation at the target -> A[col, row] += edge_attr * norm.

    Scatters directly into the (n_pad_rows, n_pad_cols) buffer in f32 and casts
    once, so no separate pad/copy pass is needed."""
    n = num_nodes
    n_pad_rows = n if n_pad_rows is None else n_pad_rows
    n_pad_cols = n if n_pad_cols is None else n_pad_cols

    loop_idx = jnp.arange(n, dtype=edge_index.dtype)
    row = jnp.concatenate([edge_index[0], loop_idx])
    col = jnp.concatenate([edge_index[1], loop_idx])
    attr = jnp.concatenate(
        [edge_attr.astype(jnp.float32), jnp.ones((n,), jnp.float32)])

    deg = jnp.zeros((n,), jnp.float32).at[row].add(1.0)
    deg_inv_sqrt = deg ** -0.5
    deg_inv_sqrt = jnp.where(jnp.isinf(deg_inv_sqrt), 0.0, deg_inv_sqrt)
    norm = deg_inv_sqrt[row] * deg_inv_sqrt[col]
    w = attr * norm

    a = jnp.zeros((n_pad_rows, n_pad_cols), jnp.float32).at[col, row].add(w)
    return a.astype(dtype)


def gcn_forward(x, edge_index, edge_attr, w1, b1, w2, b2, *, tm=256, tk=2048):
    n, _ = x.shape
    h = w1.shape[0]                     # w1 is (H, F) PyTorch-style

    # --- tile sizing / padding (rows and cols decoupled; padding kept small).
    n_pad_m, tm, num_m = _fit_tiles(n, tm, 16)     # output/row dim
    n_pad_k, tk, num_k = _fit_tiles(n, tk, 128)    # reduction dim (A lanes)

    # Dense normalized adjacency built directly at padded shape, bf16 stream.
    a_bf = build_norm_adjacency(edge_index, edge_attr, n,
                                n_pad_rows=n_pad_m, n_pad_cols=n_pad_k,
                                dtype=jnp.bfloat16)

    # Hoisted GCNConv linear: Z = X @ W1.T  (exactly equivalent by associativity).
    z = x.astype(jnp.float32) @ w1.T.astype(jnp.float32)             # (n, H)
    z_bf = jnp.zeros((n_pad_k, h), jnp.bfloat16).at[:n, :].set(
        z.astype(jnp.bfloat16))

    b1_2d = b1.reshape(1, h).astype(jnp.float32)     # (1, H) resident
    w2_2d = w2.reshape(1, h).astype(jnp.float32)     # (1, H) resident
    b2_1d = b2.reshape(1).astype(jnp.float32)        # (1,) scalar in SMEM

    # VMEM budget: double-buffered A tiles + resident Z + acc + headroom.
    # TODO(synk): for very large N, Z residency / the 48 MiB cap would be
    # exceeded — stream Z per K-tile (or switch to the sparse SpMM path).
    a_bytes = 2 * tm * tk * 2
    z_bytes = 2 * n_pad_k * h * 2
    need = a_bytes + z_bytes + tm * h * 4 + (2 << 20)
    vmem_limit = int(min(max(need, 32 * 1024 * 1024), 48 * 1024 * 1024))

    grid = (num_m, num_k)

    out = pl.pallas_call(
        functools.partial(_gcn_kernel, tk=tk),
        out_shape=jax.ShapeDtypeStruct((n_pad_m, 1), jnp.float32),
        grid_spec=pltpu.PrefetchScalarGridSpec(
            num_scalar_prefetch=0,
            grid=grid,
            in_specs=[
                pl.BlockSpec((tm, tk), lambda i, k: (i, k)),          # A tile (streamed)
                pl.BlockSpec((n_pad_k, h), lambda i, k: (0, 0)),      # Z fully resident
                pl.BlockSpec((1, h), lambda i, k: (0, 0)),            # b1 resident
                pl.BlockSpec((1, h), lambda i, k: (0, 0)),            # w2 row resident
                pl.BlockSpec(memory_space=pltpu.MemorySpace.SMEM),    # b2 scalar
            ],
            out_specs=pl.BlockSpec((tm, 1), lambda i, k: (i, 0)),
            scratch_shapes=[pltpu.VMEM((tm, h), jnp.float32)],        # A@Z accumulator
        ),
        compiler_params=pltpu.CompilerParams(
            dimension_semantics=("parallel", "arbitrary"),
            vmem_limit_bytes=vmem_limit,
        ),
    )(a_bf, z_bf, b1_2d, w2_2d, b2_1d)

    return out[:n]


def reference_forward(x, edge_index, edge_attr, w1, b1, w2, b2):
    a = build_norm_adjacency(edge_index, edge_attr, x.shape[0],
                             dtype=jnp.float32)
    hid = jnp.tanh(a @ x @ w1.T + b1)
    return jax.nn.sigmoid(hid @ w2.T + b2)


if __name__ == "__main__":
    key = jax.random.PRNGKey(0)
    # nodes (deliberately not tile-aligned to exercise padding), input_dim,
    # hidden_dim, num edges
    N, F_IN, H, E = 1000, 16, 32, 4096

    k1, k2, k3, k4, k5, k6, k7 = jax.random.split(key, 7)
    x = jax.random.normal(k1, (N, F_IN), dtype=jnp.float32)
    edge_index = jax.random.randint(k2, (2, E), 0, N, dtype=jnp.int32)
    edge_attr = jax.random.uniform(k3, (E,), dtype=jnp.float32)

    # GCNConv(input_dim, hidden_dim).lin : Linear(F_IN, H)
    w1 = jax.random.normal(k4, (H, F_IN), dtype=jnp.float32) * 0.1
    b1 = jax.random.normal(k5, (H,), dtype=jnp.float32) * 0.1
    # GCN.lin : Linear(H, 1)
    w2 = jax.random.normal(k6, (1, H), dtype=jnp.float32) * 0.1
    b2 = jax.random.normal(k7, (1,), dtype=jnp.float32) * 0.1

    ref = reference_forward(x, edge_index, edge_attr, w1, b1, w2, b2)

    # 1) perf-default tiles (tm=256, tk clamps to a single K step at this N)
    out_default = jax.block_until_ready(
        gcn_forward(x, edge_index, edge_attr, w1, b1, w2, b2))
    # 2) small tiles to exercise the multi-step K reduction + row padding
    out_tiled = jax.block_until_ready(
        gcn_forward(x, edge_index, edge_attr, w1, b1, w2, b2, tm=128, tk=256))

    for out in (out_default, out_tiled):
        assert out.shape == (N, 1)
        max_err = float(jnp.max(jnp.abs(out - ref)))
        assert max_err < 1e-2, f"mismatch vs reference: max abs err {max_err}"

    print("KERNEL_OK")
</pallas_src>

<mosaic_0001>
module attributes {stable_mosaic.version = 11 : i64} {
  func.func @_gcn_kernel(%arg0: i32, %arg1: i32, %arg2: memref<336x1024xbf16, #tpu.memory_space<vmem>>, %arg3: memref<1024x32xbf16, #tpu.memory_space<vmem>>, %arg4: memref<1x32xf32, #tpu.memory_space<vmem>>, %arg5: memref<1x32xf32, #tpu.memory_space<vmem>>, %arg6: memref<1xf32, #tpu.memory_space<smem>>, %arg7: memref<336x1xf32, #tpu.memory_space<vmem>>, %arg8: memref<336x32xf32, #tpu.memory_space<vmem>>) attributes {dimension_semantics = [#tpu.dimension_semantics<parallel>, #tpu.dimension_semantics<arbitrary>], iteration_bounds = array<i64: 3, 1>, scalar_prefetch = 0 : i64, scratch_operands = 1 : i64, tpu.core_type = #tpu.core_type<tc>, window_params = [{transform_indices = @transform_0, window_bounds = array<i64: 336, 1024>}, {pipeline_mode = #tpu.pipeline_mode<synchronous>, transform_indices = @transform_1, window_bounds = array<i64: 1024, 32>}, {pipeline_mode = #tpu.pipeline_mode<synchronous>, transform_indices = @transform_2, window_bounds = array<i64: 1, 32>}, {pipeline_mode = #tpu.pipeline_mode<synchronous>, transform_indices = @transform_3, window_bounds = array<i64: 1, 32>}, {transform_indices = @transform_4, window_bounds = array<i64: 1>}, {transform_indices = @transform_5, window_bounds = array<i64: 336, 1>}]} {
    %c0_i32 = arith.constant 0 : i32
    %0 = arith.cmpi eq, %arg1, %c0_i32 : i32
    %1 = arith.extui %0 : i1 to i32
    %c0_i32_0 = arith.constant 0 : i32
    %2 = arith.cmpi ne, %1, %c0_i32_0 : i32
    scf.if %2 {
      %cst_9 = arith.constant 0.000000e+00 : f32
      %15 = vector.broadcast %cst_9 : f32 to vector<336x32xf32>
      %c0_10 = arith.constant 0 : index
      %c0_11 = arith.constant 0 : index
      %16 = vector.load %arg8[%c0_10, %c0_11] : memref<336x32xf32, #tpu.memory_space<vmem>>, vector<336x32xf32>
      tpu.vector_store %arg8[%c0_10, %c0_11], %15 {strides = array<i32>} : memref<336x32xf32, #tpu.memory_space<vmem>>, vector<336x32xf32>,
    } else {
    }
    %c1024_i32 = arith.constant 1024 : i32
    %3 = arith.muli %arg1, %c1024_i32 : i32
    %4 = tpu.assume_multiple %3, 1024 : i32
    %5 = arith.index_cast %4 : i32 to index
    %c0 = arith.constant 0 : index
    %6 = vector.load %arg3[%5, %c0] : memref<1024x32xbf16, #tpu.memory_space<vmem>>, vector<1024x32xbf16>
    %c0_1 = arith.constant 0 : index
    %c0_2 = arith.constant 0 : index
    %7 = vector.load %arg8[%c0_1, %c0_2] : memref<336x32xf32, #tpu.memory_space<vmem>>, vector<336x32xf32>
    %c0_3 = arith.constant 0 : index
    %c0_4 = arith.constant 0 : index
    %8 = vector.load %arg2[%c0_3, %c0_4] : memref<336x1024xbf16, #tpu.memory_space<vmem>>, vector<336x1024xbf16>
    %cst = arith.constant dense<0.000000e+00> : vector<336x32xf32>
    %9 = tpu.matmul %8, %6, %cst {dimension_numbers = #tpu.dot_dimension_numbers<[1], [0], [0], [1], [0, 0, 1, 1], [], []>} : vector<336x1024xbf16>, vector<1024x32xbf16>, vector<336x32xf32> -> vector<336x32xf32>
    %10 = arith.addf %7, %9 : vector<336x32xf32>
    %c0_5 = arith.constant 0 : index
    %c0_6 = arith.constant 0 : index
    %11 = vector.load %arg8[%c0_5, %c0_6] : memref<336x32xf32, #tpu.memory_space<vmem>>, vector<336x32xf32>
    tpu.vector_store %arg8[%c0_5, %c0_6], %10 {strides = array<i32>} : memref<336x32xf32, #tpu.memory_space<vmem>>, vector<336x32xf32>,
    %c0_i32_7 = arith.constant 0 : i32
    %12 = arith.cmpi eq, %arg1, %c0_i32_7 : i32
    %13 = arith.extui %12 : i1 to i32
    %c0_i32_8 = arith.constant 0 : i32
    %14 = arith.cmpi ne, %13, %c0_i32_8 : i32
    scf.if %14 {
      %c0_9 = arith.constant 0 : index
      %c0_10 = arith.constant 0 : index
      %15 = vector.load %arg8[%c0_9, %c0_10] : memref<336x32xf32, #tpu.memory_space<vmem>>, vector<336x32xf32>
      %c0_11 = arith.constant 0 : index
      %c0_12 = arith.constant 0 : index
      %16 = vector.load %arg4[%c0_11, %c0_12] : memref<1x32xf32, #tpu.memory_space<vmem>>, vector<1x32xf32>
      %17 = vector.broadcast %16 : vector<1x32xf32> to vector<336x32xf32>
      %18 = arith.addf %15, %17 : vector<336x32xf32>
      %19 = math.tanh %18 : vector<336x32xf32>
      %c0_13 = arith.constant 0 : index
      %c0_14 = arith.constant 0 : index
      %20 = vector.load %arg5[%c0_13, %c0_14] : memref<1x32xf32, #tpu.memory_space<vmem>>, vector<1x32xf32>
      %21 = vector.broadcast %20 : vector<1x32xf32> to vector<336x32xf32>
      %22 = arith.mulf %19, %21 : vector<336x32xf32>
      %cst_15 = arith.constant dense<0.000000e+00> : vector<336xf32>
      %23 = vector.multi_reduction <add>, %22, %cst_15 [1] : vector<336x32xf32> to vector<336xf32>
      %24 = vector.shape_cast %23 : vector<336xf32> to vector<336x1xf32>
      %c0_16 = arith.constant 0 : index
      %25 = memref.load %arg6[%c0_16] : memref<1xf32, #tpu.memory_space<smem>>
      %26 = vector.broadcast %25 : f32 to vector<336x1xf32>
      %27 = arith.addf %24, %26 : vector<336x1xf32>
      %28 = arith.negf %27 : vector<336x1xf32>
      %29 = math.exp %28 : vector<336x1xf32>
      %cst_17 = arith.constant 1.000000e+00 : f32
      %30 = vector.broadcast %cst_17 : f32 to vector<336x1xf32>
      %31 = arith.addf %30, %29 : vector<336x1xf32>
      %32 = arith.divf %30, %31 : vector<336x1xf32>
      %c0_18 = arith.constant 0 : index
      %c0_19 = arith.constant 0 : index
      %33 = vector.load %arg7[%c0_18, %c0_19] : memref<336x1xf32, #tpu.memory_space<vmem>>, vector<336x1xf32>
      tpu.vector_store %arg7[%c0_18, %c0_19], %32 {strides = array<i32>} : memref<336x1xf32, #tpu.memory_space<vmem>>, vector<336x1xf32>,
    } else {
    }
    return
  }
  func.func @transform_0(%arg0: i32, %arg1: i32) -> (i32, i32) {
    %c0_i32 = arith.constant 0 : i32
    return %arg0, %arg1 : i32, i32
  }
  func.func @transform_1(%arg0: i32, %arg1: i32) -> (i32, i32) {
    %c0_i32 = arith.constant 0 : i32
    %c0_i32_0 = arith.constant 0 : i32
    %c0_i32_1 = arith.constant 0 : i32
    return %c0_i32, %c0_i32_0 : i32, i32
  }
  func.func @transform_2(%arg0: i32, %arg1: i32) -> (i32, i32) {
    %c0_i32 = arith.constant 0 : i32
    %c0_i32_0 = arith.constant 0 : i32
    %c0_i32_1 = arith.constant 0 : i32
    return %c0_i32, %c0_i32_0 : i32, i32
  }
  func.func @transform_3(%arg0: i32, %arg1: i32) -> (i32, i32) {
    %c0_i32 = arith.constant 0 : i32
    %c0_i32_0 = arith.constant 0 : i32
    %c0_i32_1 = arith.constant 0 : i32
    return %c0_i32, %c0_i32_0 : i32, i32
  }
  func.func @transform_4(%arg0: i32, %arg1: i32) -> i32 {
    %c0_i32 = arith.constant 0 : i32
    %c0_i32_0 = arith.constant 0 : i32
    return %c0_i32 : i32
  }
  func.func @transform_5(%arg0: i32, %arg1: i32) -> (i32, i32) {
    %c0_i32 = arith.constant 0 : i32
    %c0_i32_0 = arith.constant 0 : i32
    return %arg0, %c0_i32 : i32, i32
  }
}

</mosaic_0001>

<llo_original>
// kernel: tpu_custom_call.1
$region0: #{tpu_custom_call.1}
  #allocation0 [shape = 'u32[]', space=smem, size = 0x4, offset = 0x4, fixed_abs, tag = 'smem constant byte address 0x4 - core index']
  #allocation1 [shape = 'u32[72,128]{1,0:T(1,128)}', space=vmem, size = 0x9000, scoped, tag = 'internal scratch']
  #allocation2 [shape = 'f32[336,32]{1,0:T(8,128)}', space=vmem, size = 0x2a000, scoped, tag = 'scratch operand']
  #allocation3 [shape = 'f32[1]{0:T(128)S(6)}', space=smem, size = 0x200, scoped, tag = 'scoped memory for tpu_custom_call.1']
  %s0 = inlined_call_operand.hbm [shape: bf16[1008,1024], index: 0, kind: input, shape index: {}]
  %s1 = inlined_call_operand.vmem [shape: bf16[1024,32], index: 1, kind: input, shape index: {}]
  %s2 = inlined_call_operand.hbm [shape: f32[1,32], index: 2, kind: input, shape index: {}]
  %s3 = inlined_call_operand.hbm [shape: f32[1,32], index: 3, kind: input, shape index: {}]
  %s4 = inlined_call_operand.<no memory space> [shape: f32[1], index: 4, kind: input, shape index: {}]
  %s5 = inlined_call_operand.vmem [shape: f32[1008,1], index: 5, kind: output, shape index: {}]
  %s6 = sld [smem:[#allocation0]]
  $region73: #{tpu_custom_call.1} parent=0
    _
  %s8 = ssub.s32 1, %s6
  %s9 = scalar_select 0, %s8, %s6
  %10 = sst [smem:[#allocation3]] %s4
  $region1: #{tpu_custom_call.1} parent=0
    #allocation4 [shape = 'u8[1376256]{0}', space=vmem, size = 0x150000, scoped, tag = 'input window, operand 0']
    #allocation5 [shape = 's32[2]{0}', space=sflag, size = 0x8, scoped, tag = 'scoped memory for tpu_custom_call.1']
    #allocation6 [shape = 'u8[512]{0}', space=vmem, size = 0x400, scoped, tag = 'input window, operand 2, single buffered']
    #allocation7 [shape = 's32[1]{0}', space=sflag, size = 0x4, scoped, tag = 'scoped memory for tpu_custom_call.1']
    #allocation8 [shape = 'u8[512]{0}', space=vmem, size = 0x400, scoped, tag = 'input window, operand 3, single buffered']
    %11 = vsyncpa [#allocation5], 0
    %s12 = scalar_lea.sflag [#allocation5], 1
    %13 = vsyncpa %s12, 0
    %14 = vsyncpa [#allocation7], 0
    loop: start=0, step=1, limit=5
    $region2: #{tpu_custom_call.1} parent=1 // loop_pre_header
      _
    $region3: #{tpu_custom_call.1} parent=1 // loop_header
      %s16 = sphi 0, %s20
      %p17 = scmp.ge.s32.totalorder %s16, 5
      %s23 = sphi 0, %s35
      %s24 = sphi 0, %s31
      %s25 = sphi 0, %s23
      %s26 = sphi 0, %s24
      %s27 = sphi 0, %s25
      %s28 = sphi 0, %s26
      %s40 = sphi 0, %s42
      %s43 = sphi 0, %s40
      %s44 = sphi 0, %s43
      %s60 = sphi 0, %s44
      %s64 = sphi 0, %s64
      %s66 = sphi 0, %s64
      %s67 = sphi 0, %s66
      %s81 = sphi 0, %s67
      %s85 = sphi 0, %s85
      %s87 = sphi 0, %s85
      %s88 = sphi 0, %s87
      %s102 = sphi 0, %s88
      %s106 = sphi 0, %s106
      %s108 = sphi 0, %s106
      %s109 = sphi 0, %s108
      %s123 = sphi 0, %s109
      %s127 = sphi 0, %s127
      %s129 = sphi 0, %s127
      %s130 = sphi 0, %s129
      %s144 = sphi 0, %s130
      %s150 = sphi 0, %s152
      %s153 = sphi 0, %s150
      %s154 = sphi 0, %s153
      %s170 = sphi 0, %s154
    $region4: #{tpu_custom_call.1} parent=1 // loop_header_branch
      %19 = sbr.rel (%p17) target = $region8
    $region5: #{tpu_custom_call.1} parent=1 // loop_body
      %s21 = ssub.s32 %s16, 1
      %s22 = ssub.s32 %s16, 2
      %s29 = sadd.s32 1, %s24
      %p30 = scmp.ge.s32.totalorder %s29, 1
      %s31 = scalar_select %p30, 0, %s29
      %s32 = sadd.s32 1, %s23
      %s33 = scalar_select %p30, %s32, %s23
      %p34 = scmp.ge.s32.totalorder %s33, 3
      %s35 = scalar_select %p34, 0, %s33
      %s36 = ssub.s32 %s23, %s35
      %s37 = ssub.s32 %s24, %s31
      %s38 = sor.u32 %s36, %s37
      %p39 = scmp.eq.s32.totalorder %s38, 0
      %s41 = sadd.s32 %s40, 1
      %s42 = scalar_select %p39, %s40, %s41
      %p45 = pneg %p39
      %p46 = scmp.eq.s32.totalorder %s16, 2
      %p47 = por %p45, %p46
      %p48 = scmp.ne.s32.totalorder %s40, %s43
      %p49 = scmp.eq.s32.totalorder %s16, 0
      %p50 = por %p48, %p49
      %p51 = scmp.ne.s32.totalorder %s40, %s43
      %p52 = scmp.eq.s32.totalorder %s21, 2
      %p53 = por %p51, %p52
      %p54 = scmp.ne.s32.totalorder %s43, %s44
      %p55 = scmp.eq.s32.totalorder %s21, 0
      %p56 = por %p54, %p55
      %p57 = scmp.ne.s32.totalorder %s43, %s44
      %p58 = scmp.eq.s32.totalorder %s22, 2
      %p59 = por %p57, %p58
      %p61 = scmp.ne.s32.totalorder %s44, %s60
      %p62 = scmp.eq.s32.totalorder %s22, 0
      %p63 = por %p61, %p62
      %s65 = sadd.s32 %s64, 1
      %p68 = scmp.eq.s32.totalorder %s16, 2
      %p69 = scmp.ne.s32.totalorder %s64, %s66
      %p70 = scmp.eq.s32.totalorder %s16, 0
      %p71 = por %p69, %p70
      %p72 = scmp.ne.s32.totalorder %s64, %s66
      %p73 = scmp.eq.s32.totalorder %s21, 2
      %p74 = por %p72, %p73
      %p75 = scmp.ne.s32.totalorder %s66, %s67
      %p76 = scmp.eq.s32.totalorder %s21, 0
      %p77 = por %p75, %p76
      %p78 = scmp.ne.s32.totalorder %s66, %s67
      %p79 = scmp.eq.s32.totalorder %s22, 2
      %p80 = por %p78, %p79
      %p82 = scmp.ne.s32.totalorder %s67, %s81
      %p83 = scmp.eq.s32.totalorder %s22, 0
      %p84 = por %p82, %p83
      %s86 = sadd.s32 %s85, 1
      %p89 = scmp.eq.s32.totalorder %s16, 2
      %p90 = scmp.ne.s32.totalorder %s85, %s87
      %p91 = scmp.eq.s32.totalorder %s16, 0
      %p92 = por %p90, %p91
      %p93 = scmp.ne.s32.totalorder %s85, %s87
      %p94 = scmp.eq.s32.totalorder %s21, 2
      %p95 = por %p93, %p94
      %p96 = scmp.ne.s32.totalorder %s87, %s88
      %p97 = scmp.eq.s32.totalorder %s21, 0
      %p98 = por %p96, %p97
      %p99 = scmp.ne.s32.totalorder %s87, %s88
      %p100 = scmp.eq.s32.totalorder %s22, 2
      %p101 = por %p99, %p100
      %p103 = scmp.ne.s32.totalorder %s88, %s102
      %p104 = scmp.eq.s32.totalorder %s22, 0
      %p105 = por %p103, %p104
      %s107 = sadd.s32 %s106, 1
      %p110 = scmp.eq.s32.totalorder %s16, 2
      %p111 = scmp.ne.s32.totalorder %s106, %s108
      %p112 = scmp.eq.s32.totalorder %s16, 0
      %p113 = por %p111, %p112
      %p114 = scmp.ne.s32.totalorder %s106, %s108
      %p115 = scmp.eq.s32.totalorder %s21, 2
      %p116 = por %p114, %p115
      %p117 = scmp.ne.s32.totalorder %s108, %s109
      %p118 = scmp.eq.s32.totalorder %s21, 0
      %p119 = por %p117, %p118
      %p120 = scmp.ne.s32.totalorder %s108, %s109
      %p121 = scmp.eq.s32.totalorder %s22, 2
      %p122 = por %p120, %p121
      %p124 = scmp.ne.s32.totalorder %s109, %s123
      %p125 = scmp.eq.s32.totalorder %s22, 0
      %p126 = por %p124, %p125
      %s128 = sadd.s32 %s127, 1
      %p131 = scmp.eq.s32.totalorder %s16, 2
      %p132 = scmp.ne.s32.totalorder %s127, %s129
      %p133 = scmp.eq.s32.totalorder %s16, 0
      %p134 = por %p132, %p133
      %p135 = scmp.ne.s32.totalorder %s127, %s129
      %p136 = scmp.eq.s32.totalorder %s21, 2
      %p137 = por %p135, %p136
      %p138 = scmp.ne.s32.totalorder %s129, %s130
      %p139 = scmp.eq.s32.totalorder %s21, 0
      %p140 = por %p138, %p139
      %p141 = scmp.ne.s32.totalorder %s129, %s130
      %p142 = scmp.eq.s32.totalorder %s22, 2
      %p143 = por %p141, %p142
      %p145 = scmp.ne.s32.totalorder %s130, %s144
      %p146 = scmp.eq.s32.totalorder %s22, 0
      %p147 = por %p145, %p146
      %s148 = ssub.s32 %s23, %s35
      %p149 = scmp.eq.s32.totalorder %s148, 0
      %s151 = sadd.s32 %s150, 1
      %s152 = scalar_select %p149, %s150, %s151
      %p155 = pneg %p149
      %p156 = scmp.eq.s32.totalorder %s16, 2
      %p157 = por %p155, %p156
      %p158 = scmp.ne.s32.totalorder %s150, %s153
      %p159 = scmp.eq.s32.totalorder %s16, 0
      %p160 = por %p158, %p159
      %p161 = scmp.ne.s32.totalorder %s150, %s153
      %p162 = scmp.eq.s32.totalorder %s21, 2
      %p163 = por %p161, %p162
      %p164 = scmp.ne.s32.totalorder %s153, %s154
      %p165 = scmp.eq.s32.totalorder %s21, 0
      %p166 = por %p164, %p165
      %p167 = scmp.ne.s32.totalorder %s153, %s154
      %p168 = scmp.eq.s32.totalorder %s22, 2
      %p169 = por %p167, %p168
      %p171 = scmp.ne.s32.totalorder %s154, %s170
      %p172 = scmp.eq.s32.totalorder %s22, 0
      %p173 = por %p171, %p172
      %p174 = scmp.le.s32.totalorder 1, %s16
      %p175 = scmp.lt.s32.totalorder %s16, 4
      %p176 = pnand %p174, %p175
      %p177 = pneg %p176
      // Predicated region
      $region9: #{tpu_custom_call.1} parent=5 // pred_check
        _
      $region10: #{tpu_custom_call.1} parent=5 // pred_check_branch
        %179 = sbr.rel (%p176) target = $region12
      $region11: #{tpu_custom_call.1} parent=5 // pred_region
        %s180 = ssub.s32 %s16, 1
        // Predicated region
        $region13: #{tpu_custom_call.1} parent=11 // pred_check
          %p181 = pneg %p77
        $region14: #{tpu_custom_call.1} parent=11 // pred_check_branch
          %183 = sbr.rel (%p181) target = $region16
        $region15: #{tpu_custom_call.1} parent=11 // pred_region
          _
        $region16: #{tpu_custom_call.1} parent=11 // pred_fallthru
          _
        // Predicated region
        $region17: #{tpu_custom_call.1} parent=11 // pred_check
          %p184 = pneg %p98
        $region18: #{tpu_custom_call.1} parent=11 // pred_check_branch
          %186 = sbr.rel (%p184) target = $region20
        $region19: #{tpu_custom_call.1} parent=11 // pred_region
          %188 = vsyncadd [#allocation7], 0
          %s190 = sshll.u32 %s2, 4
          %s191 = int_to_ptr.hbm [resolvable:$true] %s190
          %s192 = sshll.u32 [#allocation6], 4
          %s193 = int_to_ptr.vmem [resolvable:$true] %s192
          %195 = dma.hbm_to_vmem [thread:$0]  %s191, 16, %s193, [#allocation7]
        $region20: #{tpu_custom_call.1} parent=11 // pred_fallthru
          _
        // Predicated region
        $region21: #{tpu_custom_call.1} parent=11 // pred_check
          %p196 = pneg %p119
        $region22: #{tpu_custom_call.1} parent=11 // pred_check_branch
          %198 = sbr.rel (%p196) target = $region24
        $region23: #{tpu_custom_call.1} parent=11 // pred_region
          %200 = vsyncadd [#allocation7], 0
          %s202 = sshll.u32 %s3, 4
          %s203 = int_to_ptr.hbm [resolvable:$true] %s202
          %s204 = sshll.u32 [#allocation8], 4
          %s205 = int_to_ptr.vmem [resolvable:$true] %s204
          %207 = dma.hbm_to_vmem [thread:$0]  %s203, 16, %s205, [#allocation7]
        $region24: #{tpu_custom_call.1} parent=11 // pred_fallthru
          _
        // Predicated region
        $region25: #{tpu_custom_call.1} parent=11 // pred_check
          %p208 = pneg %p140
        $region26: #{tpu_custom_call.1} parent=11 // pred_check_branch
          %210 = sbr.rel (%p208) target = $region28
        $region27: #{tpu_custom_call.1} parent=11 // pred_region
          _
        $region28: #{tpu_custom_call.1} parent=11 // pred_fallthru
          _
      $region12: #{tpu_custom_call.1} parent=5 // pred_fallthru
        _
      %p211 = scmp.lt.s32.totalorder %s16, 3
      // Predicated region
      $region29: #{tpu_custom_call.1} parent=5 // pred_check
        %p212 = pneg %p211
      $region30: #{tpu_custom_call.1} parent=5 // pred_check_branch
        %214 = sbr.rel (%p212) target = $region32
      $region31: #{tpu_custom_call.1} parent=5 // pred_region
        // Predicated region
        $region33: #{tpu_custom_call.1} parent=31 // pred_check
          %p215 = pneg %p50
        $region34: #{tpu_custom_call.1} parent=31 // pred_check_branch
          %217 = sbr.rel (%p215) target = $region36
        $region35: #{tpu_custom_call.1} parent=31 // pred_region
          %s218 = sand.u32 %s40, 1
          %s219 = scalar_lea.sflag [#allocation5], %s218
          %s220 = sand.u32 %s40, 1
          %s221 = smul.addr %s220, 1344
          %s222 = scalar_lea.vmem [#allocation4], %s221
          %s223 = smul.u32 42, %s23
          %s224 = smul.u32 8, %s24
          %226 = vsyncadd %s219, 0
          %s227 = smul.addr %s223, 8
          %s228 = sadd.s32 %s224, %s227
          %s229 = smul.addr %s228, 4
          %s230 = scalar_lea.hbm %s0, %s229
          %s231 = sshll.u32 %s230, 4
          %s232 = int_to_ptr.hbm [resolvable:$true] %s231
          %s233 = sshll.u32 %s222, 4
          %s234 = int_to_ptr.vmem [resolvable:$true] %s233
          %239 = dma.hbm_to_vmem [thread:$0]  %s232, 21504, %s234, %s219, 512, 512, 32
        $region36: #{tpu_custom_call.1} parent=31 // pred_fallthru
          _
      $region32: #{tpu_custom_call.1} parent=5 // pred_fallthru
        _
      %p240 = scmp.le.s32.totalorder 1, %s16
      %p241 = scmp.lt.s32.totalorder %s16, 4
      %p242 = pnand %p240, %p241
      %p243 = pneg %p242
      // Predicated region
      $region37: #{tpu_custom_call.1} parent=5 // pred_check
        _
      $region38: #{tpu_custom_call.1} parent=5 // pred_check_branch
        %245 = sbr.rel (%p242) target = $region40
      $region39: #{tpu_custom_call.1} parent=5 // pred_region
        %s246 = ssub.s32 %s16, 1
        %s247 = sand.u32 %s43, 1
        %s248 = scalar_lea.sflag [#allocation5], %s247
        %s249 = sand.u32 %s43, 1
        %s250 = smul.addr %s249, 1344
        %s251 = scalar_lea.vmem [#allocation4], %s250
        // Predicated region
        $region41: #{tpu_custom_call.1} parent=39 // pred_check
          %p252 = pneg %p56
        $region42: #{tpu_custom_call.1} parent=39 // pred_check_branch
          %254 = sbr.rel (%p252) target = $region44
        $region43: #{tpu_custom_call.1} parent=39 // pred_region
          %256 = dma.done %s248, 21504
        $region44: #{tpu_custom_call.1} parent=39 // pred_fallthru
          _
        // Predicated region
        $region45: #{tpu_custom_call.1} parent=39 // pred_check
          %p257 = pneg %p98
        $region46: #{tpu_custom_call.1} parent=39 // pred_check_branch
          %259 = sbr.rel (%p257) target = $region48
        $region47: #{tpu_custom_call.1} parent=39 // pred_region
          %261 = dma.done [#allocation7], 16
        $region48: #{tpu_custom_call.1} parent=39 // pred_fallthru
          _
        // Predicated region
        $region49: #{tpu_custom_call.1} parent=39 // pred_check
          %p262 = pneg %p119
        $region50: #{tpu_custom_call.1} parent=39 // pred_check_branch
          %264 = sbr.rel (%p262) target = $region52
        $region51: #{tpu_custom_call.1} parent=39 // pred_region
          %266 = dma.done [#allocation7], 16
        $region52: #{tpu_custom_call.1} parent=39 // pred_fallthru
          _
        %s267 = sand.u32 %s43, 1
        %s268 = scalar_lea.sflag [#allocation5], %s267
        %s269 = sand.u32 %s43, 1
        %s270 = smul.addr %s269, 1344
        %s271 = scalar_lea.vmem [#allocation4], %s270
        %p272 = pneg %p56
        %p273 = pneg %p53
        %p274 = pneg %p77
        %p275 = pneg %p74
        %p276 = pneg %p98
        %p277 = pneg %p95
        %p278 = pneg %p119
        %p279 = pneg %p116
        %p280 = pneg %p140
        %p281 = pneg %p137
        %p282 = pneg %p166
        %p283 = pneg %p163
        %s284 = smul.u32 42, %s25
        %p285 = scmp.lt.s32.totalorder %s284, 125
        %s286 = scalar_select %p285, %s284, 125
        %s287 = smul.addr %s286, 8
        %s288 = scalar_lea.vmem %s5, %s287
        %s289 = smul.u32 42, %s25
        %s290 = smul.u32 8, %s26
        %s291 = smul.u32 42, %s25
        %p292 = scmp.lt.s32.totalorder %s291, 125
        %s293 = scalar_select %p292, %s291, 125
        %s294 = smul.addr %s293, 8
        %s295 = scalar_lea.vmem %s5, %s294
        %s296 = smul.u32 42, %s25
        %p297 = scmp.eq.s32.totalorder %s26, 0
        // Predicated region
        $region53: #{tpu_custom_call.1} parent=39 // pred_check
          %p298 = pneg %p297
        $region54: #{tpu_custom_call.1} parent=39 // pred_check_branch
          %300 = sbr.rel (%p298) target = $region56
        $region55: #{tpu_custom_call.1} parent=39 // pred_region
          %vm301 = vcmask 261120
          %302 = vst.msk [vmem:[#allocation2] sm:$0xff] %vm301, 0.0
          %303 = vst.msk [vmem:[#allocation2 + $0x8] sm:$0xff] %vm301, 0.0
          %304 = vst.msk [vmem:[#allocation2 + $0x10] sm:$0xff] %vm301, 0.0
          %305 = vst.msk [vmem:[#allocation2 + $0x18] sm:$0xff] %vm301, 0.0
          %306 = vst.msk [vmem:[#allocation2 + $0x20] sm:$0xff] %vm301, 0.0
          %307 = vst.msk [vmem:[#allocation2 + $0x28] sm:$0xff] %vm301, 0.0
          %308 = vst.msk [vmem:[#allocation2 + $0x30] sm:$0xff] %vm301, 0.0
          %309 = vst.msk [vmem:[#allocation2 + $0x38] sm:$0xff] %vm301, 0.0
          %310 = vst.msk [vmem:[#allocation2 + $0x40] sm:$0xff] %vm301, 0.0
          %311 = vst.msk [vmem:[#allocation2 + $0x48] sm:$0xff] %vm301, 0.0
          %312 = vst.msk [vmem:[#allocation2 + $0x50] sm:$0xff] %vm301, 0.0
          %313 = vst.msk [vmem:[#allocation2 + $0x58] sm:$0xff] %vm301, 0.0
          %314 = vst.msk [vmem:[#allocation2 + $0x60] sm:$0xff] %vm301, 0.0
          %315 = vst.msk [vmem:[#allocation2 + $0x68] sm:$0xff] %vm301, 0.0
          %316 = vst.msk [vmem:[#allocation2 + $0x70] sm:$0xff] %vm301, 0.0
          %317 = vst.msk [vmem:[#allocation2 + $0x78] sm:$0xff] %vm301, 0.0
          %318 = vst.msk [vmem:[#allocation2 + $0x80] sm:$0xff] %vm301, 0.0
          %319 = vst.msk [vmem:[#allocation2 + $0x88] sm:$0xff] %vm301, 0.0
          %320 = vst.msk [vmem:[#allocation2 + $0x90] sm:$0xff] %vm301, 0.0
          %321 = vst.msk [vmem:[#allocation2 + $0x98] sm:$0xff] %vm301, 0.0
          %322 = vst.msk [vmem:[#allocation2 + $0xa0] sm:$0xff] %vm301, 0.0
          %323 = vst.msk [vmem:[#allocation2 + $0xa8] sm:$0xff] %vm301, 0.0
          %324 = vst.msk [vmem:[#allocation2 + $0xb0] sm:$0xff] %vm301, 0.0
          %325 = vst.msk [vmem:[#allocation2 + $0xb8] sm:$0xff] %vm301, 0.0
          %326 = vst.msk [vmem:[#allocation2 + $0xc0] sm:$0xff] %vm301, 0.0
          %327 = vst.msk [vmem:[#allocation2 + $0xc8] sm:$0xff] %vm301, 0.0
          %328 = vst.msk [vmem:[#allocation2 + $0xd0] sm:$0xff] %vm301, 0.0
          %329 = vst.msk [vmem:[#allocation2 + $0xd8] sm:$0xff] %vm301, 0.0
          %330 = vst.msk [vmem:[#allocation2 + $0xe0] sm:$0xff] %vm301, 0.0
          %331 = vst.msk [vmem:[#allocation2 + $0xe8] sm:$0xff] %vm301, 0.0
          %332 = vst.msk [vmem:[#allocation2 + $0xf0] sm:$0xff] %vm301, 0.0
          %333 = vst.msk [vmem:[#allocation2 + $0xf8] sm:$0xff] %vm301, 0.0
          %334 = vst.msk [vmem:[#allocation2 + $0x100] sm:$0xff] %vm301, 0.0
          %335 = vst.msk [vmem:[#allocation2 + $0x108] sm:$0xff] %vm301, 0.0
          %336 = vst.msk [vmem:[#allocation2 + $0x110] sm:$0xff] %vm301, 0.0
          %337 = vst.msk [vmem:[#allocation2 + $0x118] sm:$0xff] %vm301, 0.0
          %338 = vst.msk [vmem:[#allocation2 + $0x120] sm:$0xff] %vm301, 0.0
          %339 = vst.msk [vmem:[#allocation2 + $0x128] sm:$0xff] %vm301, 0.0
          %340 = vst.msk [vmem:[#allocation2 + $0x130] sm:$0xff] %vm301, 0.0
          %341 = vst.msk [vmem:[#allocation2 + $0x138] sm:$0xff] %vm301, 0.0
          %342 = vst.msk [vmem:[#allocation2 + $0x140] sm:$0xff] %vm301, 0.0
          %343 = vst.msk [vmem:[#allocation2 + $0x148] sm:$0xff] %vm301, 0.0
        $region56: #{tpu_custom_call.1} parent=39 // pred_fallthru
          _
        %s344 = smul.u32 %s26, 1024
        %s345 = sshra.s32 %s344, 3
        %s346 = sand.u32 %s344, 7
        %s347 = smul.addr %s345, 4
        %s348 = scalar_lea.vmem %s1, %s347
        %v349 = vld [vmem:[%s348] sm:$0xf]
        %v350 = vld [vmem:[%s348 + $0x4] sm:$0xf]
        %v351 = vld [vmem:[%s348 + $0x8] sm:$0xf]
        %v352 = vld [vmem:[%s348 + $0xc] sm:$0xf]
        %v353 = vld [vmem:[%s348 + $0x10] sm:$0xf]
        %v354 = vld [vmem:[%s348 + $0x14] sm:$0xf]
        %v355 = vld [vmem:[%s348 + $0x18] sm:$0xf]
        %v356 = vld [vmem:[%s348 + $0x1c] sm:$0xf]
        %v357 = vld [vmem:[%s348 + $0x20] sm:$0xf]
        %v358 = vld [vmem:[%s348 + $0x24] sm:$0xf]
        %v359 = vld [vmem:[%s348 + $0x28] sm:$0xf]
        %v360 = vld [vmem:[%s348 + $0x2c] sm:$0xf]
        %v361 = vld [vmem:[%s348 + $0x30] sm:$0xf]
        %v362 = vld [vmem:[%s348 + $0x34] sm:$0xf]
        %v363 = vld [vmem:[%s348 + $0x38] sm:$0xf]
        %v364 = vld [vmem:[%s348 + $0x3c] sm:$0xf]
        %v365 = vld [vmem:[%s348 + $0x40] sm:$0xf]
        %v366 = vld [vmem:[%s348 + $0x44] sm:$0xf]
        %v367 = vld [vmem:[%s348 + $0x48] sm:$0xf]
        %v368 = vld [vmem:[%s348 + $0x4c] sm:$0xf]
        %v369 = vld [vmem:[%s348 + $0x50] sm:$0xf]
        %v370 = vld [vmem:[%s348 + $0x54] sm:$0xf]
        %v371 = vld [vmem:[%s348 + $0x58] sm:$0xf]
        %v372 = vld [vmem:[%s348 + $0x5c] sm:$0xf]
        %v373 = vld [vmem:[%s348 + $0x60] sm:$0xf]
        %v374 = vld [vmem:[%s348 + $0x64] sm:$0xf]
        %v375 = vld [vmem:[%s348 + $0x68] sm:$0xf]
        %v376 = vld [vmem:[%s348 + $0x6c] sm:$0xf]
        %v377 = vld [vmem:[%s348 + $0x70] sm:$0xf]
        %v378 = vld [vmem:[%s348 + $0x74] sm:$0xf]
        %v379 = vld [vmem:[%s348 + $0x78] sm:$0xf]
        %v380 = vld [vmem:[%s348 + $0x7c] sm:$0xf]
        %v381 = vld [vmem:[%s348 + $0x80] sm:$0xf]
        %v382 = vld [vmem:[%s348 + $0x84] sm:$0xf]
        %v383 = vld [vmem:[%s348 + $0x88] sm:$0xf]
        %v384 = vld [vmem:[%s348 + $0x8c] sm:$0xf]
        %v385 = vld [vmem:[%s348 + $0x90] sm:$0xf]
        %v386 = vld [vmem:[%s348 + $0x94] sm:$0xf]
        %v387 = vld [vmem:[%s348 + $0x98] sm:$0xf]
        %v388 = vld [vmem:[%s348 + $0x9c] sm:$0xf]
        %v389 = vld [vmem:[%s348 + $0xa0] sm:$0xf]
        %v390 = vld [vmem:[%s348 + $0xa4] sm:$0xf]
        %v391 = vld [vmem:[%s348 + $0xa8] sm:$0xf]
        %v392 = vld [vmem:[%s348 + $0xac] sm:$0xf]
        %v393 = vld [vmem:[%s348 + $0xb0] sm:$0xf]
        %v394 = vld [vmem:[%s348 + $0xb4] sm:$0xf]
        %v395 = vld [vmem:[%s348 + $0xb8] sm:$0xf]
        %v396 = vld [vmem:[%s348 + $0xbc] sm:$0xf]
        %v397 = vld [vmem:[%s348 + $0xc0] sm:$0xf]
        %v398 = vld [vmem:[%s348 + $0xc4] sm:$0xf]
        %v399 = vld [vmem:[%s348 + $0xc8] sm:$0xf]
        %v400 = vld [vmem:[%s348 + $0xcc] sm:$0xf]
        %v401 = vld [vmem:[%s348 + $0xd0] sm:$0xf]
        %v402 = vld [vmem:[%s348 + $0xd4] sm:$0xf]
        %v403 = vld [vmem:[%s348 + $0xd8] sm:$0xf]
        %v404 = vld [vmem:[%s348 + $0xdc] sm:$0xf]
        %v405 = vld [vmem:[%s348 + $0xe0] sm:$0xf]
        %v406 = vld [vmem:[%s348 + $0xe4] sm:$0xf]
        %v407 = vld [vmem:[%s348 + $0xe8] sm:$0xf]
        %v408 = vld [vmem:[%s348 + $0xec] sm:$0xf]
        %v409 = vld [vmem:[%s348 + $0xf0] sm:$0xf]
        %v410 = vld [vmem:[%s348 + $0xf4] sm:$0xf]
        %v411 = vld [vmem:[%s348 + $0xf8] sm:$0xf]
        %v412 = vld [vmem:[%s348 + $0xfc] sm:$0xf]
        %v413 = vld [vmem:[%s348 + $0x100] sm:$0xf]
        %v414 = vld [vmem:[%s348 + $0x104] sm:$0xf]
        %v415 = vld [vmem:[%s348 + $0x108] sm:$0xf]
        %v416 = vld [vmem:[%s348 + $0x10c] sm:$0xf]
        %v417 = vld [vmem:[%s348 + $0x110] sm:$0xf]
        %v418 = vld [vmem:[%s348 + $0x114] sm:$0xf]
        %v419 = vld [vmem:[%s348 + $0x118] sm:$0xf]
        %v420 = vld [vmem:[%s348 + $0x11c] sm:$0xf]
        %v421 = vld [vmem:[%s348 + $0x120] sm:$0xf]
        %v422 = vld [vmem:[%s348 + $0x124] sm:$0xf]
        %v423 = vld [vmem:[%s348 + $0x128] sm:$0xf]
        %v424 = vld [vmem:[%s348 + $0x12c] sm:$0xf]
        %v425 = vld [vmem:[%s348 + $0x130] sm:$0xf]
        %v426 = vld [vmem:[%s348 + $0x134] sm:$0xf]
        %v427 = vld [vmem:[%s348 + $0x138] sm:$0xf]
        %v428 = vld [vmem:[%s348 + $0x13c] sm:$0xf]
        %v429 = vld [vmem:[%s348 + $0x140] sm:$0xf]
        %v430 = vld [vmem:[%s348 + $0x144] sm:$0xf]
        %v431 = vld [vmem:[%s348 + $0x148] sm:$0xf]
        %v432 = vld [vmem:[%s348 + $0x14c] sm:$0xf]
        %v433 = vld [vmem:[%s348 + $0x150] sm:$0xf]
        %v434 = vld [vmem:[%s348 + $0x154] sm:$0xf]
        %v435 = vld [vmem:[%s348 + $0x158] sm:$0xf]
        %v436 = vld [vmem:[%s348 + $0x15c] sm:$0xf]
        %v437 = vld [vmem:[%s348 + $0x160] sm:$0xf]
        %v438 = vld [vmem:[%s348 + $0x164] sm:$0xf]
        %v439 = vld [vmem:[%s348 + $0x168] sm:$0xf]
        %v440 = vld [vmem:[%s348 + $0x16c] sm:$0xf]
        %v441 = vld [vmem:[%s348 + $0x170] sm:$0xf]
        %v442 = vld [vmem:[%s348 + $0x174] sm:$0xf]
        %v443 = vld [vmem:[%s348 + $0x178] sm:$0xf]
        %v444 = vld [vmem:[%s348 + $0x17c] sm:$0xf]
        %v445 = vld [vmem:[%s348 + $0x180] sm:$0xf]
        %v446 = vld [vmem:[%s348 + $0x184] sm:$0xf]
        %v447 = vld [vmem:[%s348 + $0x188] sm:$0xf]
        %v448 = vld [vmem:[%s348 + $0x18c] sm:$0xf]
        %v449 = vld [vmem:[%s348 + $0x190] sm:$0xf]
        %v450 = vld [vmem:[%s348 + $0x194] sm:$0xf]
        %v451 = vld [vmem:[%s348 + $0x198] sm:$0xf]
        %v452 = vld [vmem:[%s348 + $0x19c] sm:$0xf]
        %v453 = vld [vmem:[%s348 + $0x1a0] sm:$0xf]
        %v454 = vld [vmem:[%s348 + $0x1a4] sm:$0xf]
        %v455 = vld [vmem:[%s348 + $0x1a8] sm:$0xf]
        %v456 = vld [vmem:[%s348 + $0x1ac] sm:$0xf]
        %v457 = vld [vmem:[%s348 + $0x1b0] sm:$0xf]
        %v458 = vld [vmem:[%s348 + $0x1b4] sm:$0xf]
        %v459 = vld [vmem:[%s348 + $0x1b8] sm:$0xf]
        %v460 = vld [vmem:[%s348 + $0x1bc] sm:$0xf]
        %v461 = vld [vmem:[%s348 + $0x1c0] sm:$0xf]
        %v462 = vld [vmem:[%s348 + $0x1c4] sm:$0xf]
        %v463 = vld [vmem:[%s348 + $0x1c8] sm:$0xf]
        %v464 = vld [vmem:[%s348 + $0x1cc] sm:$0xf]
        %v465 = vld [vmem:[%s348 + $0x1d0] sm:$0xf]
        %v466 = vld [vmem:[%s348 + $0x1d4] sm:$0xf]
        %v467 = vld [vmem:[%s348 + $0x1d8] sm:$0xf]
        %v468 = vld [vmem:[%s348 + $0x1dc] sm:$0xf]
        %v469 = vld [vmem:[%s348 + $0x1e0] sm:$0xf]
        %v470 = vld [vmem:[%s348 + $0x1e4] sm:$0xf]
        %v471 = vld [vmem:[%s348 + $0x1e8] sm:$0xf]
        %v472 = vld [vmem:[%s348 + $0x1ec] sm:$0xf]
        %v473 = vld [vmem:[%s348 + $0x1f0] sm:$0xf]
        %v474 = vld [vmem:[%s348 + $0x1f4] sm:$0xf]
        %v475 = vld [vmem:[%s348 + $0x1f8] sm:$0xf]
        %v476 = vld [vmem:[%s348 + $0x1fc] sm:$0xf]
        %v477 = vld [vmem:[#allocation2] sm:$0xff]
        %v478 = vld [vmem:[#allocation2 + $0x8] sm:$0xff]
        %v479 = vld [vmem:[#allocation2 + $0x10] sm:$0xff]
        %v480 = vld [vmem:[#allocation2 + $0x18] sm:$0xff]
        %v481 = vld [vmem:[#allocation2 + $0x20] sm:$0xff]
        %v482 = vld [vmem:[#allocation2 + $0x28] sm:$0xff]
        %v483 = vld [vmem:[#allocation2 + $0x30] sm:$0xff]
        %v484 = vld [vmem:[#allocation2 + $0x38] sm:$0xff]
        %v485 = vld [vmem:[#allocation2 + $0x40] sm:$0xff]
        %v486 = vld [vmem:[#allocation2 + $0x48] sm:$0xff]
        %v487 = vld [vmem:[#allocation2 + $0x50] sm:$0xff]
        %v488 = vld [vmem:[#allocation2 + $0x58] sm:$0xff]
        %v489 = vld [vmem:[#allocation2 + $0x60] sm:$0xff]
        %v490 = vld [vmem:[#allocation2 + $0x68] sm:$0xff]
        %v491 = vld [vmem:[#allocation2 + $0x70] sm:$0xff]
        %v492 = vld [vmem:[#allocation2 + $0x78] sm:$0xff]
        %v493 = vld [vmem:[#allocation2 + $0x80] sm:$0xff]
        %v494 = vld [vmem:[#allocation2 + $0x88] sm:$0xff]
        %v495 = vld [vmem:[#allocation2 + $0x90] sm:$0xff]
        %v496 = vld [vmem:[#allocation2 + $0x98] sm:$0xff]
        %v497 = vld [vmem:[#allocation2 + $0xa0] sm:$0xff]
        %v498 = vld [vmem:[#allocation2 + $0xa8] sm:$0xff]
        %v499 = vld [vmem:[#allocation2 + $0xb0] sm:$0xff]
        %v500 = vld [vmem:[#allocation2 + $0xb8] sm:$0xff]
        %v501 = vld [vmem:[#allocation2 + $0xc0] sm:$0xff]
        %v502 = vld [vmem:[#allocation2 + $0xc8] sm:$0xff]
        %v503 = vld [vmem:[#allocation2 + $0xd0] sm:$0xff]
        %v504 = vld [vmem:[#allocation2 + $0xd8] sm:$0xff]
        %v505 = vld [vmem:[#allocation2 + $0xe0] sm:$0xff]
        %v506 = vld [vmem:[#allocation2 + $0xe8] sm:$0xff]
        %v507 = vld [vmem:[#allocation2 + $0xf0] sm:$0xff]
        %v508 = vld [vmem:[#allocation2 + $0xf8] sm:$0xff]
        %v509 = vld [vmem:[#allocation2 + $0x100] sm:$0xff]
        %v510 = vld [vmem:[#allocation2 + $0x108] sm:$0xff]
        %v511 = vld [vmem:[#allocation2 + $0x110] sm:$0xff]
        %v512 = vld [vmem:[#allocation2 + $0x118] sm:$0xff]
        %v513 = vld [vmem:[#allocation2 + $0x120] sm:$0xff]
        %v514 = vld [vmem:[#allocation2 + $0x128] sm:$0xff]
        %v515 = vld [vmem:[#allocation2 + $0x130] sm:$0xff]
        %v516 = vld [vmem:[#allocation2 + $0x138] sm:$0xff]
        %v517 = vld [vmem:[#allocation2 + $0x140] sm:$0xff]
        %v518 = vld [vmem:[#allocation2 + $0x148] sm:$0xff]
        %v519 = vld [vmem:[%s251] sm:$0xff]
        %v520 = vld [vmem:[%s251 + $0x8] sm:$0xff]
        %v521 = vld [vmem:[%s251 + $0x10] sm:$0xff]
        %v522 = vld [vmem:[%s251 + $0x18] sm:$0xff]
        %v523 = vld [vmem:[%s251 + $0x20] sm:$0xff]
        %v524 = vld [vmem:[%s251 + $0x28] sm:$0xff]
        %v525 = vld [vmem:[%s251 + $0x30] sm:$0xff]
        %v526 = vld [vmem:[%s251 + $0x38] sm:$0xff]
        %v527 = vld [vmem:[%s251 + $0x40] sm:$0xff]
        %v528 = vld [vmem:[%s251 + $0x48] sm:$0xff]
        %v529 = vld [vmem:[%s251 + $0x50] sm:$0xff]
        %v530 = vld [vmem:[%s251 + $0x58] sm:$0xff]
        %v531 = vld [vmem:[%s251 + $0x60] sm:$0xff]
        %v532 = vld [vmem:[%s251 + $0x68] sm:$0xff]
        %v533 = vld [vmem:[%s251 + $0x70] sm:$0xff]
        %v534 = vld [vmem:[%s251 + $0x78] sm:$0xff]
        %v535 = vld [vmem:[%s251 + $0x80] sm:$0xff]
        %v536 = vld [vmem:[%s251 + $0x88] sm:$0xff]
        %v537 = vld [vmem:[%s251 + $0x90] sm:$0xff]
        %v538 = vld [vmem:[%s251 + $0x98] sm:$0xff]
        %v539 = vld [vmem:[%s251 + $0xa0] sm:$0xff]
        %v540 = vld [vmem:[%s251 + $0xa8] sm:$0xff]
        %v541 = vld [vmem:[%s251 + $0xb0] sm:$0xff]
        %v542 = vld [vmem:[%s251 + $0xb8] sm:$0xff]
        %v543 = vld [vmem:[%s251 + $0xc0] sm:$0xff]
        %v544 = vld [vmem:[%s251 + $0xc8] sm:$0xff]
        %v545 = vld [vmem:[%s251 + $0xd0] sm:$0xff]
        %v546 = vld [vmem:[%s251 + $0xd8] sm:$0xff]
        %v547 = vld [vmem:[%s251 + $0xe0] sm:$0xff]
        %v548 = vld [vmem:[%s251 + $0xe8] sm:$0xff]
        %v549 = vld [vmem:[%s251 + $0xf0] sm:$0xff]
        %v550 = vld [vmem:[%s251 + $0xf8] sm:$0xff]
        %v551 = vld [vmem:[%s251 + $0x100] sm:$0xff]
        %v552 = vld [vmem:[%s251 + $0x108] sm:$0xff]
        %v553 = vld [vmem:[%s251 + $0x110] sm:$0xff]
        %v554 = vld [vmem:[%s251 + $0x118] sm:$0xff]
        %v555 = vld [vmem:[%s251 + $0x120] sm:$0xff]
        %v556 = vld [vmem:[%s251 + $0x128] sm:$0xff]
        %v557 = vld [vmem:[%s251 + $0x130] sm:$0xff]
        %v558 = vld [vmem:[%s251 + $0x138] sm:$0xff]
        %v559 = vld [vmem:[%s251 + $0x140] sm:$0xff]
        %v560 = vld [vmem:[%s251 + $0x148] sm:$0xff]
        %v561 = vld [vmem:[%s251 + $0x150] sm:$0xff]
        %v562 = vld [vmem:[%s251 + $0x158] sm:$0xff]
        %v563 = vld [vmem:[%s251 + $0x160] sm:$0xff]
        %v564 = vld [vmem:[%s251 + $0x168] sm:$0xff]
        %v565 = vld [vmem:[%s251 + $0x170] sm:$0xff]
        %v566 = vld [vmem:[%s251 + $0x178] sm:$0xff]
        %v567 = vld [vmem:[%s251 + $0x180] sm:$0xff]
        %v568 = vld [vmem:[%s251 + $0x188] sm:$0xff]
        %v569 = vld [vmem:[%s251 + $0x190] sm:$0xff]
        %v570 = vld [vmem:[%s251 + $0x198] sm:$0xff]
        %v571 = vld [vmem:[%s251 + $0x1a0] sm:$0xff]
        %v572 = vld [vmem:[%s251 + $0x1a8] sm:$0xff]
        %v573 = vld [vmem:[%s251 + $0x1b0] sm:$0xff]
        %v574 = vld [vmem:[%s251 + $0x1b8] sm:$0xff]
        %v575 = vld [vmem:[%s251 + $0x1c0] sm:$0xff]
        %v576 = vld [vmem:[%s251 + $0x1c8] sm:$0xff]
        %v577 = vld [vmem:[%s251 + $0x1d0] sm:$0xff]
        %v578 = vld [vmem:[%s251 + $0x1d8] sm:$0xff]
        %v579 = vld [vmem:[%s251 + $0x1e0] sm:$0xff]
        %v580 = vld [vmem:[%s251 + $0x1e8] sm:$0xff]
        %v581 = vld [vmem:[%s251 + $0x1f0] sm:$0xff]
        %v582 = vld [vmem:[%s251 + $0x1f8] sm:$0xff]
        %v583 = vld [vmem:[%s251 + $0x200] sm:$0xff]
        %v584 = vld [vmem:[%s251 + $0x208] sm:$0xff]
        %v585 = vld [vmem:[%s251 + $0x210] sm:$0xff]
        %v586 = vld [vmem:[%s251 + $0x218] sm:$0xff]
        %v587 = vld [vmem:[%s251 + $0x220] sm:$0xff]
        %v588 = vld [vmem:[%s251 + $0x228] sm:$0xff]
        %v589 = vld [vmem:[%s251 + $0x230] sm:$0xff]
        %v590 = vld [vmem:[%s251 + $0x238] sm:$0xff]
        %v591 = vld [vmem:[%s251 + $0x240] sm:$0xff]
        %v592 = vld [vmem:[%s251 + $0x248] sm:$0xff]
        %v593 = vld [vmem:[%s251 + $0x250] sm:$0xff]
        %v594 = vld [vmem:[%s251 + $0x258] sm:$0xff]
        %v595 = vld [vmem:[%s251 + $0x260] sm:$0xff]
        %v596 = vld [vmem:[%s251 + $0x268] sm:$0xff]
        %v597 = vld [vmem:[%s251 + $0x270] sm:$0xff]
        %v598 = vld [vmem:[%s251 + $0x278] sm:$0xff]
        %v599 = vld [vmem:[%s251 + $0x280] sm:$0xff]
        %v600 = vld [vmem:[%s251 + $0x288] sm:$0xff]
        %v601 = vld [vmem:[%s251 + $0x290] sm:$0xff]
        %v602 = vld [vmem:[%s251 + $0x298] sm:$0xff]
        %v603 = vld [vmem:[%s251 + $0x2a0] sm:$0xff]
        %v604 = vld [vmem:[%s251 + $0x2a8] sm:$0xff]
        %v605 = vld [vmem:[%s251 + $0x2b0] sm:$0xff]
        %v606 = vld [vmem:[%s251 + $0x2b8] sm:$0xff]
        %v607 = vld [vmem:[%s251 + $0x2c0] sm:$0xff]
        %v608 = vld [vmem:[%s251 + $0x2c8] sm:$0xff]
        %v609 = vld [vmem:[%s251 + $0x2d0] sm:$0xff]
        %v610 = vld [vmem:[%s251 + $0x2d8] sm:$0xff]
        %v611 = vld [vmem:[%s251 + $0x2e0] sm:$0xff]
        %v612 = vld [vmem:[%s251 + $0x2e8] sm:$0xff]
        %v613 = vld [vmem:[%s251 + $0x2f0] sm:$0xff]
        %v614 = vld [vmem:[%s251 + $0x2f8] sm:$0xff]
        %v615 = vld [vmem:[%s251 + $0x300] sm:$0xff]
        %v616 = vld [vmem:[%s251 + $0x308] sm:$0xff]
        %v617 = vld [vmem:[%s251 + $0x310] sm:$0xff]
        %v618 = vld [vmem:[%s251 + $0x318] sm:$0xff]
        %v619 = vld [vmem:[%s251 + $0x320] sm:$0xff]
        %v620 = vld [vmem:[%s251 + $0x328] sm:$0xff]
        %v621 = vld [vmem:[%s251 + $0x330] sm:$0xff]
        %v622 = vld [vmem:[%s251 + $0x338] sm:$0xff]
        %v623 = vld [vmem:[%s251 + $0x340] sm:$0xff]
        %v624 = vld [vmem:[%s251 + $0x348] sm:$0xff]
        %v625 = vld [vmem:[%s251 + $0x350] sm:$0xff]
        %v626 = vld [vmem:[%s251 + $0x358] sm:$0xff]
        %v627 = vld [vmem:[%s251 + $0x360] sm:$0xff]
        %v628 = vld [vmem:[%s251 + $0x368] sm:$0xff]
        %v629 = vld [vmem:[%s251 + $0x370] sm:$0xff]
        %v630 = vld [vmem:[%s251 + $0x378] sm:$0xff]
        %v631 = vld [vmem:[%s251 + $0x380] sm:$0xff]
        %v632 = vld [vmem:[%s251 + $0x388] sm:$0xff]
        %v633 = vld [vmem:[%s251 + $0x390] sm:$0xff]
        %v634 = vld [vmem:[%s251 + $0x398] sm:$0xff]
        %v635 = vld [vmem:[%s251 + $0x3a0] sm:$0xff]
        %v636 = vld [vmem:[%s251 + $0x3a8] sm:$0xff]
        %v637 = vld [vmem:[%s251 + $0x3b0] sm:$0xff]
        %v638 = vld [vmem:[%s251 + $0x3b8] sm:$0xff]
        %v639 = vld [vmem:[%s251 + $0x3c0] sm:$0xff]
        %v640 = vld [vmem:[%s251 + $0x3c8] sm:$0xff]
        %v641 = vld [vmem:[%s251 + $0x3d0] sm:$0xff]
        %v642 = vld [vmem:[%s251 + $0x3d8] sm:$0xff]
        %v643 = vld [vmem:[%s251 + $0x3e0] sm:$0xff]
        %v644 = vld [vmem:[%s251 + $0x3e8] sm:$0xff]
        %v645 = vld [vmem:[%s251 + $0x3f0] sm:$0xff]
        %v646 = vld [vmem:[%s251 + $0x3f8] sm:$0xff]
        %v647 = vld [vmem:[%s251 + $0x400] sm:$0xff]
        %v648 = vld [vmem:[%s251 + $0x408] sm:$0xff]
        %v649 = vld [vmem:[%s251 + $0x410] sm:$0xff]
        %v650 = vld [vmem:[%s251 + $0x418] sm:$0xff]
        %v651 = vld [vmem:[%s251 + $0x420] sm:$0xff]
        %v652 = vld [vmem:[%s251 + $0x428] sm:$0xff]
        %v653 = vld [vmem:[%s251 + $0x430] sm:$0xff]
        %v654 = vld [vmem:[%s251 + $0x438] sm:$0xff]
        %v655 = vld [vmem:[%s251 + $0x440] sm:$0xff]
        %v656 = vld [vmem:[%s251 + $0x448] sm:$0xff]
        %v657 = vld [vmem:[%s251 + $0x450] sm:$0xff]
        %v658 = vld [vmem:[%s251 + $0x458] sm:$0xff]
        %v659 = vld [vmem:[%s251 + $0x460] sm:$0xff]
        %v660 = vld [vmem:[%s251 + $0x468] sm:$0xff]
        %v661 = vld [vmem:[%s251 + $0x470] sm:$0xff]
        %v662 = vld [vmem:[%s251 + $0x478] sm:$0xff]
        %v663 = vld [vmem:[%s251 + $0x480] sm:$0xff]
        %v664 = vld [vmem:[%s251 + $0x488] sm:$0xff]
        %v665 = vld [vmem:[%s251 + $0x490] sm:$0xff]
        %v666 = vld [vmem:[%s251 + $0x498] sm:$0xff]
        %v667 = vld [vmem:[%s251 + $0x4a0] sm:$0xff]
        %v668 = vld [vmem:[%s251 + $0x4a8] sm:$0xff]
        %v669 = vld [vmem:[%s251 + $0x4b0] sm:$0xff]
        %v670 = vld [vmem:[%s251 + $0x4b8] sm:$0xff]
        %v671 = vld [vmem:[%s251 + $0x4c0] sm:$0xff]
        %v672 = vld [vmem:[%s251 + $0x4c8] sm:$0xff]
        %v673 = vld [vmem:[%s251 + $0x4d0] sm:$0xff]
        %v674 = vld [vmem:[%s251 + $0x4d8] sm:$0xff]
        %v675 = vld [vmem:[%s251 + $0x4e0] sm:$0xff]
        %v676 = vld [vmem:[%s251 + $0x4e8] sm:$0xff]
        %v677 = vld [vmem:[%s251 + $0x4f0] sm:$0xff]
        %v678 = vld [vmem:[%s251 + $0x4f8] sm:$0xff]
        %v679 = vld [vmem:[%s251 + $0x500] sm:$0xff]
        %v680 = vld [vmem:[%s251 + $0x508] sm:$0xff]
        %v681 = vld [vmem:[%s251 + $0x510] sm:$0xff]
        %v682 = vld [vmem:[%s251 + $0x518] sm:$0xff]
        %v683 = vld [vmem:[%s251 + $0x520] sm:$0xff]
        %v684 = vld [vmem:[%s251 + $0x528] sm:$0xff]
        %v685 = vld [vmem:[%s251 + $0x530] sm:$0xff]
        %v686 = vld [vmem:[%s251 + $0x538] sm:$0xff]
        %v855 = vunpack.c.l.b16 %v519
        %v856 = vunpack.c.h.b16 %v519
        %v857 = vunpack.c.l.b16 %v520
        %v858 = vunpack.c.h.b16 %v520
        %v859 = vunpack.c.l.b16 %v521
        %v860 = vunpack.c.h.b16 %v521
        %v861 = vunpack.c.l.b16 %v522
        %v862 = vunpack.c.h.b16 %v522
        %v863 = vunpack.c.l.b16 %v523
        %v864 = vunpack.c.h.b16 %v523
        %v865 = vunpack.c.l.b16 %v524
        %v866 = vunpack.c.h.b16 %v524
        %v867 = vunpack.c.l.b16 %v525
        %v868 = vunpack.c.h.b16 %v525
        %v869 = vunpack.c.l.b16 %v526
        %v870 = vunpack.c.h.b16 %v526
        %v871 = vunpack.c.l.b16 %v527
        %v872 = vunpack.c.h.b16 %v527
        %v873 = vunpack.c.l.b16 %v528
        %v874 = vunpack.c.h.b16 %v528
        %v875 = vunpack.c.l.b16 %v529
        %v876 = vunpack.c.h.b16 %v529
        %v877 = vunpack.c.l.b16 %v530
        %v878 = vunpack.c.h.b16 %v530
        %v879 = vunpack.c.l.b16 %v531
        %v880 = vunpack.c.h.b16 %v531
        %v881 = vunpack.c.l.b16 %v532
        %v882 = vunpack.c.h.b16 %v532
        %v883 = vunpack.c.l.b16 %v533
        %v884 = vunpack.c.h.b16 %v533
        %v885 = vunpack.c.l.b16 %v534
        %v886 = vunpack.c.h.b16 %v534
        %v887 = vunpack.c.l.b16 %v535
        %v888 = vunpack.c.h.b16 %v535
        %v889 = vunpack.c.l.b16 %v536
        %v890 = vunpack.c.h.b16 %v536
        %v891 = vunpack.c.l.b16 %v537
        %v892 = vunpack.c.h.b16 %v537
        %v893 = vunpack.c.l.b16 %v538
        %v894 = vunpack.c.h.b16 %v538
        %v895 = vunpack.c.l.b16 %v539
        %v896 = vunpack.c.h.b16 %v539
        %v897 = vunpack.c.l.b16 %v540
        %v898 = vunpack.c.h.b16 %v540
        %v899 = vunpack.c.l.b16 %v541
        %v900 = vunpack.c.h.b16 %v541
        %v901 = vunpack.c.l.b16 %v542
        %v902 = vunpack.c.h.b16 %v542
        %v903 = vunpack.c.l.b16 %v543
        %v904 = vunpack.c.h.b16 %v543
        %v905 = vunpack.c.l.b16 %v544
        %v906 = vunpack.c.h.b16 %v544
        %v907 = vunpack.c.l.b16 %v545
        %v908 = vunpack.c.h.b16 %v545
        %v909 = vunpack.c.l.b16 %v546
        %v910 = vunpack.c.h.b16 %v546
        %v911 = vunpack.c.l.b16 %v547
        %v912 = vunpack.c.h.b16 %v547
        %v913 = vunpack.c.l.b16 %v548
        %v914 = vunpack.c.h.b16 %v548
        %v915 = vunpack.c.l.b16 %v549
        %v916 = vunpack.c.h.b16 %v549
        %v917 = vunpack.c.l.b16 %v550
        %v918 = vunpack.c.h.b16 %v550
        %v919 = vunpack.c.l.b16 %v551
        %v920 = vunpack.c.h.b16 %v551
        %v921 = vunpack.c.l.b16 %v552
        %v922 = vunpack.c.h.b16 %v552
        %v923 = vunpack.c.l.b16 %v553
        %v924 = vunpack.c.h.b16 %v553
        %v925 = vunpack.c.l.b16 %v554
        %v926 = vunpack.c.h.b16 %v554
        %v927 = vunpack.c.l.b16 %v555
        %v928 = vunpack.c.h.b16 %v555
        %v929 = vunpack.c.l.b16 %v556
        %v930 = vunpack.c.h.b16 %v556
        %v931 = vunpack.c.l.b16 %v557
        %v932 = vunpack.c.h.b16 %v557
        %v933 = vunpack.c.l.b16 %v558
        %v934 = vunpack.c.h.b16 %v558
        %v935 = vunpack.c.l.b16 %v559
        %v936 = vunpack.c.h.b16 %v559
        %v937 = vunpack.c.l.b16 %v560
        %v938 = vunpack.c.h.b16 %v560
        %v939 = vunpack.c.l.b16 %v561
        %v940 = vunpack.c.h.b16 %v561
        %v941 = vunpack.c.l.b16 %v562
        %v942 = vunpack.c.h.b16 %v562
        %v943 = vunpack.c.l.b16 %v563
        %v944 = vunpack.c.h.b16 %v563
        %v945 = vunpack.c.l.b16 %v564
        %v946 = vunpack.c.h.b16 %v564
        %v947 = vunpack.c.l.b16 %v565
        %v948 = vunpack.c.h.b16 %v565
        %v949 = vunpack.c.l.b16 %v566
        %v950 = vunpack.c.h.b16 %v566
        %v951 = vunpack.c.l.b16 %v567
        %v952 = vunpack.c.h.b16 %v567
        %v953 = vunpack.c.l.b16 %v568
        %v954 = vunpack.c.h.b16 %v568
        %v955 = vunpack.c.l.b16 %v569
        %v956 = vunpack.c.h.b16 %v569
        %v957 = vunpack.c.l.b16 %v570
        %v958 = vunpack.c.h.b16 %v570
        %v959 = vunpack.c.l.b16 %v571
        %v960 = vunpack.c.h.b16 %v571
        %v961 = vunpack.c.l.b16 %v572
        %v962 = vunpack.c.h.b16 %v572
        %v963 = vunpack.c.l.b16 %v573
        %v964 = vunpack.c.h.b16 %v573
        %v965 = vunpack.c.l.b16 %v574
        %v966 = vunpack.c.h.b16 %v574
        %v967 = vunpack.c.l.b16 %v575
        %v968 = vunpack.c.h.b16 %v575
        %v969 = vunpack.c.l.b16 %v576
        %v970 = vunpack.c.h.b16 %v576
        %v971 = vunpack.c.l.b16 %v577
        %v972 = vunpack.c.h.b16 %v577
        %v973 = vunpack.c.l.b16 %v578
        %v974 = vunpack.c.h.b16 %v578
        %v975 = vunpack.c.l.b16 %v579
        %v976 = vunpack.c.h.b16 %v579
        %v977 = vunpack.c.l.b16 %v580
        %v978 = vunpack.c.h.b16 %v580
        %v979 = vunpack.c.l.b16 %v581
        %v980 = vunpack.c.h.b16 %v581
        %v981 = vunpack.c.l.b16 %v582
        %v982 = vunpack.c.h.b16 %v582
        %v983 = vunpack.c.l.b16 %v583
        %v984 = vunpack.c.h.b16 %v583
        %v985 = vunpack.c.l.b16 %v584
        %v986 = vunpack.c.h.b16 %v584
        %v987 = vunpack.c.l.b16 %v585
        %v988 = vunpack.c.h.b16 %v585
        %v989 = vunpack.c.l.b16 %v586
        %v990 = vunpack.c.h.b16 %v586
        %v991 = vunpack.c.l.b16 %v587
        %v992 = vunpack.c.h.b16 %v587
        %v993 = vunpack.c.l.b16 %v588
        %v994 = vunpack.c.h.b16 %v588
        %v995 = vunpack.c.l.b16 %v589
        %v996 = vunpack.c.h.b16 %v589
        %v997 = vunpack.c.l.b16 %v590
        %v998 = vunpack.c.h.b16 %v590
        %v999 = vunpack.c.l.b16 %v591
        %v1000 = vunpack.c.h.b16 %v591
        %v1001 = vunpack.c.l.b16 %v592
        %v1002 = vunpack.c.h.b16 %v592
        %v1003 = vunpack.c.l.b16 %v593
        %v1004 = vunpack.c.h.b16 %v593
        %v1005 = vunpack.c.l.b16 %v594
        %v1006 = vunpack.c.h.b16 %v594
        %v1007 = vunpack.c.l.b16 %v595
        %v1008 = vunpack.c.h.b16 %v595
        %v1009 = vunpack.c.l.b16 %v596
        %v1010 = vunpack.c.h.b16 %v596
        %v1011 = vunpack.c.l.b16 %v597
        %v1012 = vunpack.c.h.b16 %v597
        %v1013 = vunpack.c.l.b16 %v598
        %v1014 = vunpack.c.h.b16 %v598
        %v1015 = vunpack.c.l.b16 %v599
        %v1016 = vunpack.c.h.b16 %v599
        %v1017 = vunpack.c.l.b16 %v600
        %v1018 = vunpack.c.h.b16 %v600
        %v1019 = vunpack.c.l.b16 %v601
        %v1020 = vunpack.c.h.b16 %v601
        %v1021 = vunpack.c.l.b16 %v602
        %v1022 = vunpack.c.h.b16 %v602
        %v1023 = vunpack.c.l.b16 %v603
        %v1024 = vunpack.c.h.b16 %v603
        %v1025 = vunpack.c.l.b16 %v604
        %v1026 = vunpack.c.h.b16 %v604
        %v1027 = vunpack.c.l.b16 %v605
        %v1028 = vunpack.c.h.b16 %v605
        %v1029 = vunpack.c.l.b16 %v606
        %v1030 = vunpack.c.h.b16 %v606
        %v1031 = vunpack.c.l.b16 %v607
        %v1032 = vunpack.c.h.b16 %v607
        %v1033 = vunpack.c.l.b16 %v608
        %v1034 = vunpack.c.h.b16 %v608
        %v1035 = vunpack.c.l.b16 %v609
        %v1036 = vunpack.c.h.b16 %v609
        %v1037 = vunpack.c.l.b16 %v610
        %v1038 = vunpack.c.h.b16 %v610
        %v1039 = vunpack.c.l.b16 %v611
        %v1040 = vunpack.c.h.b16 %v611
        %v1041 = vunpack.c.l.b16 %v612
        %v1042 = vunpack.c.h.b16 %v612
        %v1043 = vunpack.c.l.b16 %v613
        %v1044 = vunpack.c.h.b16 %v613
        %v1045 = vunpack.c.l.b16 %v614
        %v1046 = vunpack.c.h.b16 %v614
        %v1047 = vunpack.c.l.b16 %v615
        %v1048 = vunpack.c.h.b16 %v615
        %v1049 = vunpack.c.l.b16 %v616
        %v1050 = vunpack.c.h.b16 %v616
        %v1051 = vunpack.c.l.b16 %v617
        %v1052 = vunpack.c.h.b16 %v617
        %v1053 = vunpack.c.l.b16 %v618
        %v1054 = vunpack.c.h.b16 %v618
        %v1055 = vunpack.c.l.b16 %v619
        %v1056 = vunpack.c.h.b16 %v619
        %v1057 = vunpack.c.l.b16 %v620
        %v1058 = vunpack.c.h.b16 %v620
        %v1059 = vunpack.c.l.b16 %v621
        %v1060 = vunpack.c.h.b16 %v621
        %v1061 = vunpack.c.l.b16 %v622
        %v1062 = vunpack.c.h.b16 %v622
        %v1063 = vunpack.c.l.b16 %v623
        %v1064 = vunpack.c.h.b16 %v623
        %v1065 = vunpack.c.l.b16 %v624
        %v1066 = vunpack.c.h.b16 %v624
        %v1067 = vunpack.c.l.b16 %v625
        %v1068 = vunpack.c.h.b16 %v625
        %v1069 = vunpack.c.l.b16 %v626
        %v1070 = vunpack.c.h.b16 %v626
        %v1071 = vunpack.c.l.b16 %v627
        %v1072 = vunpack.c.h.b16 %v627
        %v1073 = vunpack.c.l.b16 %v628
        %v1074 = vunpack.c.h.b16 %v628
        %v1075 = vunpack.c.l.b16 %v629
        %v1076 = vunpack.c.h.b16 %v629
        %v1077 = vunpack.c.l.b16 %v630
        %v1078 = vunpack.c.h.b16 %v630
        %v1079 = vunpack.c.l.b16 %v631
        %v1080 = vunpack.c.h.b16 %v631
        %v1081 = vunpack.c.l.b16 %v632
        %v1082 = vunpack.c.h.b16 %v632
        %v1083 = vunpack.c.l.b16 %v633
        %v1084 = vunpack.c.h.b16 %v633
        %v1085 = vunpack.c.l.b16 %v634
        %v1086 = vunpack.c.h.b16 %v634
        %v1087 = vunpack.c.l.b16 %v635
        %v1088 = vunpack.c.h.b16 %v635
        %v1089 = vunpack.c.l.b16 %v636
        %v1090 = vunpack.c.h.b16 %v636
        %v1091 = vunpack.c.l.b16 %v637
        %v1092 = vunpack.c.h.b16 %v637
        %v1093 = vunpack.c.l.b16 %v638
        %v1094 = vunpack.c.h.b16 %v638
        %v1095 = vunpack.c.l.b16 %v639
        %v1096 = vunpack.c.h.b16 %v639
        %v1097 = vunpack.c.l.b16 %v640
        %v1098 = vunpack.c.h.b16 %v640
        %v1099 = vunpack.c.l.b16 %v641
        %v1100 = vunpack.c.h.b16 %v641
        %v1101 = vunpack.c.l.b16 %v642
        %v1102 = vunpack.c.h.b16 %v642
        %v1103 = vunpack.c.l.b16 %v643
        %v1104 = vunpack.c.h.b16 %v643
        %v1105 = vunpack.c.l.b16 %v644
        %v1106 = vunpack.c.h.b16 %v644
        %v1107 = vunpack.c.l.b16 %v645
        %v1108 = vunpack.c.h.b16 %v645
        %v1109 = vunpack.c.l.b16 %v646
        %v1110 = vunpack.c.h.b16 %v646
        %v1111 = vunpack.c.l.b16 %v647
        %v1112 = vunpack.c.h.b16 %v647
        %v1113 = vunpack.c.l.b16 %v648
        %v1114 = vunpack.c.h.b16 %v648
        %v1115 = vunpack.c.l.b16 %v649
        %v1116 = vunpack.c.h.b16 %v649
        %v1117 = vunpack.c.l.b16 %v650
        %v1118 = vunpack.c.h.b16 %v650
        %v1119 = vunpack.c.l.b16 %v651
        %v1120 = vunpack.c.h.b16 %v651
        %v1121 = vunpack.c.l.b16 %v652
        %v1122 = vunpack.c.h.b16 %v652
        %v1123 = vunpack.c.l.b16 %v653
        %v1124 = vunpack.c.h.b16 %v653
        %v1125 = vunpack.c.l.b16 %v654
        %v1126 = vunpack.c.h.b16 %v654
        %v1127 = vunpack.c.l.b16 %v655
        %v1128 = vunpack.c.h.b16 %v655
        %v1129 = vunpack.c.l.b16 %v656
        %v1130 = vunpack.c.h.b16 %v656
        %v1131 = vunpack.c.l.b16 %v657
        %v1132 = vunpack.c.h.b16 %v657
        %v1133 = vunpack.c.l.b16 %v658
        %v1134 = vunpack.c.h.b16 %v658
        %v1135 = vunpack.c.l.b16 %v659
        %v1136 = vunpack.c.h.b16 %v659
        %v1137 = vunpack.c.l.b16 %v660
        %v1138 = vunpack.c.h.b16 %v660
        %v1139 = vunpack.c.l.b16 %v661
        %v1140 = vunpack.c.h.b16 %v661
        %v1141 = vunpack.c.l.b16 %v662
        %v1142 = vunpack.c.h.b16 %v662
        %v1143 = vunpack.c.l.b16 %v663
        %v1144 = vunpack.c.h.b16 %v663
        %v1145 = vunpack.c.l.b16 %v664
        %v1146 = vunpack.c.h.b16 %v664
        %v1147 = vunpack.c.l.b16 %v665
        %v1148 = vunpack.c.h.b16 %v665
        %v1149 = vunpack.c.l.b16 %v666
        %v1150 = vunpack.c.h.b16 %v666
        %v1151 = vunpack.c.l.b16 %v667
        %v1152 = vunpack.c.h.b16 %v667
        %v1153 = vunpack.c.l.b16 %v668
        %v1154 = vunpack.c.h.b16 %v668
        %v1155 = vunpack.c.l.b16 %v669
        %v1156 = vunpack.c.h.b16 %v669
        %v1157 = vunpack.c.l.b16 %v670
        %v1158 = vunpack.c.h.b16 %v670
        %v1159 = vunpack.c.l.b16 %v671
        %v1160 = vunpack.c.h.b16 %v671
        %v1161 = vunpack.c.l.b16 %v672
        %v1162 = vunpack.c.h.b16 %v672
        %v1163 = vunpack.c.l.b16 %v673
        %v1164 = vunpack.c.h.b16 %v673
        %v1165 = vunpack.c.l.b16 %v674
        %v1166 = vunpack.c.h.b16 %v674
        %v1167 = vunpack.c.l.b16 %v675
        %v1168 = vunpack.c.h.b16 %v675
        %v1169 = vunpack.c.l.b16 %v676
        %v1170 = vunpack.c.h.b16 %v676
        %v1171 = vunpack.c.l.b16 %v677
        %v1172 = vunpack.c.h.b16 %v677
        %v1173 = vunpack.c.l.b16 %v678
        %v1174 = vunpack.c.h.b16 %v678
        %v1175 = vunpack.c.l.b16 %v679
        %v1176 = vunpack.c.h.b16 %v679
        %v1177 = vunpack.c.l.b16 %v680
        %v1178 = vunpack.c.h.b16 %v680
        %v1179 = vunpack.c.l.b16 %v681
        %v1180 = vunpack.c.h.b16 %v681
        %v1181 = vunpack.c.l.b16 %v682
        %v1182 = vunpack.c.h.b16 %v682
        %v1183 = vunpack.c.l.b16 %v683
        %v1184 = vunpack.c.h.b16 %v683
        %v1185 = vunpack.c.l.b16 %v684
        %v1186 = vunpack.c.h.b16 %v684
        %v1187 = vunpack.c.l.b16 %v685
        %v1188 = vunpack.c.h.b16 %v685
        %v1189 = vunpack.c.l.b16 %v686
        %v1190 = vunpack.c.h.b16 %v686
        %v1191 = vpack.c.b16 %v863, %v855
        %v1192 = vpack.c.b16 %v864, %v856
        %v1193 = vpack.c.b16 %v865, %v857
        %v1194 = vpack.c.b16 %v866, %v858
        %v1195 = vpack.c.b16 %v867, %v859
        %v1196 = vpack.c.b16 %v868, %v860
        %v1197 = vpack.c.b16 %v869, %v861
        %v1198 = vpack.c.b16 %v870, %v862
        %v1199 = vpack.c.b16 %v879, %v871
        %v1200 = vpack.c.b16 %v880, %v872
        %v1201 = vpack.c.b16 %v881, %v873
        %v1202 = vpack.c.b16 %v882, %v874
        %v1203 = vpack.c.b16 %v883, %v875
        %v1204 = vpack.c.b16 %v884, %v876
        %v1205 = vpack.c.b16 %v885, %v877
        %v1206 = vpack.c.b16 %v886, %v878
        %v1207 = vpack.c.b16 %v895, %v887
        %v1208 = vpack.c.b16 %v896, %v888
        %v1209 = vpack.c.b16 %v897, %v889
        %v1210 = vpack.c.b16 %v898, %v890
        %v1211 = vpack.c.b16 %v899, %v891
        %v1212 = vpack.c.b16 %v900, %v892
        %v1213 = vpack.c.b16 %v901, %v893
        %v1214 = vpack.c.b16 %v902, %v894
        %v1215 = vpack.c.b16 %v911, %v903
        %v1216 = vpack.c.b16 %v912, %v904
        %v1217 = vpack.c.b16 %v913, %v905
        %v1218 = vpack.c.b16 %v914, %v906
        %v1219 = vpack.c.b16 %v915, %v907
        %v1220 = vpack.c.b16 %v916, %v908
        %v1221 = vpack.c.b16 %v917, %v909
        %v1222 = vpack.c.b16 %v918, %v910
        %v1223 = vpack.c.b16 %v927, %v919
        %v1224 = vpack.c.b16 %v928, %v920
        %v1225 = vpack.c.b16 %v929, %v921
        %v1226 = vpack.c.b16 %v930, %v922
        %v1227 = vpack.c.b16 %v931, %v923
        %v1228 = vpack.c.b16 %v932, %v924
        %v1229 = vpack.c.b16 %v933, %v925
        %v1230 = vpack.c.b16 %v934, %v926
        %v1231 = vpack.c.b16 %v943, %v935
        %v1232 = vpack.c.b16 %v944, %v936
        %v1233 = vpack.c.b16 %v945, %v937
        %v1234 = vpack.c.b16 %v946, %v938
        %v1235 = vpack.c.b16 %v947, %v939
        %v1236 = vpack.c.b16 %v948, %v940
        %v1237 = vpack.c.b16 %v949, %v941
        %v1238 = vpack.c.b16 %v950, %v942
        %v1239 = vpack.c.b16 %v959, %v951
        %v1240 = vpack.c.b16 %v960, %v952
        %v1241 = vpack.c.b16 %v961, %v953
        %v1242 = vpack.c.b16 %v962, %v954
        %v1243 = vpack.c.b16 %v963, %v955
        %v1244 = vpack.c.b16 %v964, %v956
        %v1245 = vpack.c.b16 %v965, %v957
        %v1246 = vpack.c.b16 %v966, %v958
        %v1247 = vpack.c.b16 %v975, %v967
        %v1248 = vpack.c.b16 %v976, %v968
        %v1249 = vpack.c.b16 %v977, %v969
        %v1250 = vpack.c.b16 %v978, %v970
        %v1251 = vpack.c.b16 %v979, %v971
        %v1252 = vpack.c.b16 %v980, %v972
        %v1253 = vpack.c.b16 %v981, %v973
        %v1254 = vpack.c.b16 %v982, %v974
        %v1255 = vpack.c.b16 %v991, %v983
        %v1256 = vpack.c.b16 %v992, %v984
        %v1257 = vpack.c.b16 %v993, %v985
        %v1258 = vpack.c.b16 %v994, %v986
        %v1259 = vpack.c.b16 %v995, %v987
        %v1260 = vpack.c.b16 %v996, %v988
        %v1261 = vpack.c.b16 %v997, %v989
        %v1262 = vpack.c.b16 %v998, %v990
        %v1263 = vpack.c.b16 %v1007, %v999
        %v1264 = vpack.c.b16 %v1008, %v1000
        %v1265 = vpack.c.b16 %v1009, %v1001
        %v1266 = vpack.c.b16 %v1010, %v1002
        %v1267 = vpack.c.b16 %v1011, %v1003
        %v1268 = vpack.c.b16 %v1012, %v1004
        %v1269 = vpack.c.b16 %v1013, %v1005
        %v1270 = vpack.c.b16 %v1014, %v1006
        %v1271 = vpack.c.b16 %v1023, %v1015
        %v1272 = vpack.c.b16 %v1024, %v1016
        %v1273 = vpack.c.b16 %v1025, %v1017
        %v1274 = vpack.c.b16 %v1026, %v1018
        %v1275 = vpack.c.b16 %v1027, %v1019
        %v1276 = vpack.c.b16 %v1028, %v1020
        %v1277 = vpack.c.b16 %v1029, %v1021
        %v1278 = vpack.c.b16 %v1030, %v1022
        %v1279 = vpack.c.b16 %v1039, %v1031
        %v1280 = vpack.c.b16 %v1040, %v1032
        %v1281 = vpack.c.b16 %v1041, %v1033
        %v1282 = vpack.c.b16 %v1042, %v1034
        %v1283 = vpack.c.b16 %v1043, %v1035
        %v1284 = vpack.c.b16 %v1044, %v1036
        %v1285 = vpack.c.b16 %v1045, %v1037
        %v1286 = vpack.c.b16 %v1046, %v1038
        %v1287 = vpack.c.b16 %v1055, %v1047
        %v1288 = vpack.c.b16 %v1056, %v1048
        %v1289 = vpack.c.b16 %v1057, %v1049
        %v1290 = vpack.c.b16 %v1058, %v1050
        %v1291 = vpack.c.b16 %v1059, %v1051
        %v1292 = vpack.c.b16 %v1060, %v1052
        %v1293 = vpack.c.b16 %v1061, %v1053
        %v1294 = vpack.c.b16 %v1062, %v1054
        %v1295 = vpack.c.b16 %v1071, %v1063
        %v1296 = vpack.c.b16 %v1072, %v1064
        %v1297 = vpack.c.b16 %v1073, %v1065
        %v1298 = vpack.c.b16 %v1074, %v1066
        %v1299 = vpack.c.b16 %v1075, %v1067
        %v1300 = vpack.c.b16 %v1076, %v1068
        %v1301 = vpack.c.b16 %v1077, %v1069
        %v1302 = vpack.c.b16 %v1078, %v1070
        %v1303 = vpack.c.b16 %v1087, %v1079
        %v1304 = vpack.c.b16 %v1088, %v1080
        %v1305 = vpack.c.b16 %v1089, %v1081
        %v1306 = vpack.c.b16 %v1090, %v1082
        %v1307 = vpack.c.b16 %v1091, %v1083
        %v1308 = vpack.c.b16 %v1092, %v1084
        %v1309 = vpack.c.b16 %v1093, %v1085
        %v1310 = vpack.c.b16 %v1094, %v1086
        %v1311 = vpack.c.b16 %v1103, %v1095
        %v1312 = vpack.c.b16 %v1104, %v1096
        %v1313 = vpack.c.b16 %v1105, %v1097
        %v1314 = vpack.c.b16 %v1106, %v1098
        %v1315 = vpack.c.b16 %v1107, %v1099
        %v1316 = vpack.c.b16 %v1108, %v1100
        %v1317 = vpack.c.b16 %v1109, %v1101
        %v1318 = vpack.c.b16 %v1110, %v1102
        %v1319 = vpack.c.b16 %v1119, %v1111
        %v1320 = vpack.c.b16 %v1120, %v1112
        %v1321 = vpack.c.b16 %v1121, %v1113
        %v1322 = vpack.c.b16 %v1122, %v1114
        %v1323 = vpack.c.b16 %v1123, %v1115
        %v1324 = vpack.c.b16 %v1124, %v1116
        %v1325 = vpack.c.b16 %v1125, %v1117
        %v1326 = vpack.c.b16 %v1126, %v1118
        %v1327 = vpack.c.b16 %v1135, %v1127
        %v1328 = vpack.c.b16 %v1136, %v1128
        %v1329 = vpack.c.b16 %v1137, %v1129
        %v1330 = vpack.c.b16 %v1138, %v1130
        %v1331 = vpack.c.b16 %v1139, %v1131
        %v1332 = vpack.c.b16 %v1140, %v1132
        %v1333 = vpack.c.b16 %v1141, %v1133
        %v1334 = vpack.c.b16 %v1142, %v1134
        %v1335 = vpack.c.b16 %v1151, %v1143
        %v1336 = vpack.c.b16 %v1152, %v1144
        %v1337 = vpack.c.b16 %v1153, %v1145
        %v1338 = vpack.c.b16 %v1154, %v1146
        %v1339 = vpack.c.b16 %v1155, %v1147
        %v1340 = vpack.c.b16 %v1156, %v1148
        %v1341 = vpack.c.b16 %v1157, %v1149
        %v1342 = vpack.c.b16 %v1158, %v1150
        %v1343 = vpack.c.b16 %v1167, %v1159
        %v1344 = vpack.c.b16 %v1168, %v1160
        %v1345 = vpack.c.b16 %v1169, %v1161
        %v1346 = vpack.c.b16 %v1170, %v1162
        %v1347 = vpack.c.b16 %v1171, %v1163
        %v1348 = vpack.c.b16 %v1172, %v1164
        %v1349 = vpack.c.b16 %v1173, %v1165
        %v1350 = vpack.c.b16 %v1174, %v1166
        %v1351 = vpack.c.b16 %v1183, %v1175
        %v1352 = vpack.c.b16 %v1184, %v1176
        %v1353 = vpack.c.b16 %v1185, %v1177
        %v1354 = vpack.c.b16 %v1186, %v1178
        %v1355 = vpack.c.b16 %v1187, %v1179
        %v1356 = vpack.c.b16 %v1188, %v1180
        %v1357 = vpack.c.b16 %v1189, %v1181
        %v1358 = vpack.c.b16 %v1190, %v1182
        %v1655 = vunpack.c.l.b16 %v349
        %v1656 = vunpack.c.l.b16 %v350
        %v1657 = vunpack.c.l.b16 %v351
        %v1658 = vunpack.c.l.b16 %v352
        %v1659 = vunpack.c.l.b16 %v353
        %v1660 = vunpack.c.l.b16 %v354
        %v1661 = vunpack.c.l.b16 %v355
        %v1662 = vunpack.c.l.b16 %v356
        %v1663 = vunpack.c.l.b16 %v357
        %v1664 = vunpack.c.l.b16 %v358
        %v1665 = vunpack.c.l.b16 %v359
        %v1666 = vunpack.c.l.b16 %v360
        %v1667 = vunpack.c.l.b16 %v361
        %v1668 = vunpack.c.l.b16 %v362
        %v1669 = vunpack.c.l.b16 %v363
        %v1670 = vunpack.c.l.b16 %v364
        %v1671 = vunpack.c.l.b16 %v365
        %v1672 = vunpack.c.l.b16 %v366
        %v1673 = vunpack.c.l.b16 %v367
        %v1674 = vunpack.c.l.b16 %v368
        %v1675 = vunpack.c.l.b16 %v369
        %v1676 = vunpack.c.l.b16 %v370
        %v1677 = vunpack.c.l.b16 %v371
        %v1678 = vunpack.c.l.b16 %v372
        %v1679 = vunpack.c.l.b16 %v373
        %v1680 = vunpack.c.l.b16 %v374
        %v1681 = vunpack.c.l.b16 %v375
        %v1682 = vunpack.c.l.b16 %v376
        %v1683 = vunpack.c.l.b16 %v377
        %v1684 = vunpack.c.l.b16 %v378
        %v1685 = vunpack.c.l.b16 %v379
        %v1686 = vunpack.c.l.b16 %v380
        %v1687 = vunpack.c.l.b16 %v381
        %v1688 = vunpack.c.l.b16 %v382
        %v1689 = vunpack.c.l.b16 %v383
        %v1690 = vunpack.c.l.b16 %v384
        %v1691 = vunpack.c.l.b16 %v385
        %v1692 = vunpack.c.l.b16 %v386
        %v1693 = vunpack.c.l.b16 %v387
        %v1694 = vunpack.c.l.b16 %v388
        %v1695 = vunpack.c.l.b16 %v389
        %v1696 = vunpack.c.l.b16 %v390
        %v1697 = vunpack.c.l.b16 %v391
        %v1698 = vunpack.c.l.b16 %v392
        %v1699 = vunpack.c.l.b16 %v393
        %v1700 = vunpack.c.l.b16 %v394
        %v1701 = vunpack.c.l.b16 %v395
        %v1702 = vunpack.c.l.b16 %v396
        %v1703 = vunpack.c.l.b16 %v397
        %v1704 = vunpack.c.l.b16 %v398
        %v1705 = vunpack.c.l.b16 %v399
        %v1706 = vunpack.c.l.b16 %v400
        %v1707 = vunpack.c.l.b16 %v401
        %v1708 = vunpack.c.l.b16 %v402
        %v1709 = vunpack.c.l.b16 %v403
        %v1710 = vunpack.c.l.b16 %v404
        %v1711 = vunpack.c.l.b16 %v405
        %v1712 = vunpack.c.l.b16 %v406
        %v1713 = vunpack.c.l.b16 %v407
        %v1714 = vunpack.c.l.b16 %v408
        %v1715 = vunpack.c.l.b16 %v409
        %v1716 = vunpack.c.l.b16 %v410
        %v1717 = vunpack.c.l.b16 %v411
        %v1718 = vunpack.c.l.b16 %v412
        %v1719 = vunpack.c.l.b16 %v413
        %v1720 = vunpack.c.l.b16 %v414
        %v1721 = vunpack.c.l.b16 %v415
        %v1722 = vunpack.c.l.b16 %v416
        %v1723 = vunpack.c.l.b16 %v417
        %v1724 = vunpack.c.l.b16 %v418
        %v1725 = vunpack.c.l.b16 %v419
        %v1726 = vunpack.c.l.b16 %v420
        %v1727 = vunpack.c.l.b16 %v421
        %v1728 = vunpack.c.l.b16 %v422
        %v1729 = vunpack.c.l.b16 %v423
        %v1730 = vunpack.c.l.b16 %v424
        %v1731 = vunpack.c.l.b16 %v425
        %v1732 = vunpack.c.l.b16 %v426
        %v1733 = vunpack.c.l.b16 %v427
        %v1734 = vunpack.c.l.b16 %v428
        %v1735 = vunpack.c.l.b16 %v429
        %v1736 = vunpack.c.l.b16 %v430
        %v1737 = vunpack.c.l.b16 %v431
        %v1738 = vunpack.c.l.b16 %v432
        %v1739 = vunpack.c.l.b16 %v433
        %v1740 = vunpack.c.l.b16 %v434
        %v1741 = vunpack.c.l.b16 %v435
        %v1742 = vunpack.c.l.b16 %v436
        %v1743 = vunpack.c.l.b16 %v437
        %v1744 = vunpack.c.l.b16 %v438
        %v1745 = vunpack.c.l.b16 %v439
        %v1746 = vunpack.c.l.b16 %v440
        %v1747 = vunpack.c.l.b16 %v441
        %v1748 = vunpack.c.l.b16 %v442
        %v1749 = vunpack.c.l.b16 %v443
        %v1750 = vunpack.c.l.b16 %v444
        %v1751 = vunpack.c.l.b16 %v445
        %v1752 = vunpack.c.l.b16 %v446
        %v1753 = vunpack.c.l.b16 %v447
        %v1754 = vunpack.c.l.b16 %v448
        %v1755 = vunpack.c.l.b16 %v449
        %v1756 = vunpack.c.l.b16 %v450
        %v1757 = vunpack.c.l.b16 %v451
        %v1758 = vunpack.c.l.b16 %v452
        %v1759 = vunpack.c.l.b16 %v453
        %v1760 = vunpack.c.l.b16 %v454
        %v1761 = vunpack.c.l.b16 %v455
        %v1762 = vunpack.c.l.b16 %v456
        %v1763 = vunpack.c.l.b16 %v457
        %v1764 = vunpack.c.l.b16 %v458
        %v1765 = vunpack.c.l.b16 %v459
        %v1766 = vunpack.c.l.b16 %v460
        %v1767 = vunpack.c.l.b16 %v461
        %v1768 = vunpack.c.l.b16 %v462
        %v1769 = vunpack.c.l.b16 %v463
        %v1770 = vunpack.c.l.b16 %v464
        %v1771 = vunpack.c.l.b16 %v465
        %v1772 = vunpack.c.l.b16 %v466
        %v1773 = vunpack.c.l.b16 %v467
        %v1774 = vunpack.c.l.b16 %v468
        %v1775 = vunpack.c.l.b16 %v469
        %v1776 = vunpack.c.l.b16 %v470
        %v1777 = vunpack.c.l.b16 %v471
        %v1778 = vunpack.c.l.b16 %v472
        %v1779 = vunpack.c.l.b16 %v473
        %v1780 = vunpack.c.l.b16 %v474
        %v1781 = vunpack.c.l.b16 %v475
        %v1782 = vunpack.c.l.b16 %v476
        %v1783 = vpack.c.b16 %v1656, %v1655
        %v1784 = vpack.c.b16 %v1658, %v1657
        %v1785 = vpack.c.b16 %v1660, %v1659
        %v1786 = vpack.c.b16 %v1662, %v1661
        %v1787 = vpack.c.b16 %v1664, %v1663
        %v1788 = vpack.c.b16 %v1666, %v1665
        %v1789 = vpack.c.b16 %v1668, %v1667
        %v1790 = vpack.c.b16 %v1670, %v1669
        %v1791 = vpack.c.b16 %v1672, %v1671
        %v1792 = vpack.c.b16 %v1674, %v1673
        %v1793 = vpack.c.b16 %v1676, %v1675
        %v1794 = vpack.c.b16 %v1678, %v1677
        %v1795 = vpack.c.b16 %v1680, %v1679
        %v1796 = vpack.c.b16 %v1682, %v1681
        %v1797 = vpack.c.b16 %v1684, %v1683
        %v1798 = vpack.c.b16 %v1686, %v1685
        %v1799 = vpack.c.b16 %v1688, %v1687
        %v1800 = vpack.c.b16 %v1690, %v1689
        %v1801 = vpack.c.b16 %v1692, %v1691
        %v1802 = vpack.c.b16 %v1694, %v1693
        %v1803 = vpack.c.b16 %v1696, %v1695
        %v1804 = vpack.c.b16 %v1698, %v1697
        %v1805 = vpack.c.b16 %v1700, %v1699
        %v1806 = vpack.c.b16 %v1702, %v1701
        %v1807 = vpack.c.b16 %v1704, %v1703
        %v1808 = vpack.c.b16 %v1706, %v1705
        %v1809 = vpack.c.b16 %v1708, %v1707
        %v1810 = vpack.c.b16 %v1710, %v1709
        %v1811 = vpack.c.b16 %v1712, %v1711
        %v1812 = vpack.c.b16 %v1714, %v1713
        %v1813 = vpack.c.b16 %v1716, %v1715
        %v1814 = vpack.c.b16 %v1718, %v1717
        %v1815 = vpack.c.b16 %v1720, %v1719
        %v1816 = vpack.c.b16 %v1722, %v1721
        %v1817 = vpack.c.b16 %v1724, %v1723
        %v1818 = vpack.c.b16 %v1726, %v1725
        %v1819 = vpack.c.b16 %v1728, %v1727
        %v1820 = vpack.c.b16 %v1730, %v1729
        %v1821 = vpack.c.b16 %v1732, %v1731
        %v1822 = vpack.c.b16 %v1734, %v1733
        %v1823 = vpack.c.b16 %v1736, %v1735
        %v1824 = vpack.c.b16 %v1738, %v1737
        %v1825 = vpack.c.b16 %v1740, %v1739
        %v1826 = vpack.c.b16 %v1742, %v1741
        %v1827 = vpack.c.b16 %v1744, %v1743
        %v1828 = vpack.c.b16 %v1746, %v1745
        %v1829 = vpack.c.b16 %v1748, %v1747
        %v1830 = vpack.c.b16 %v1750, %v1749
        %v1831 = vpack.c.b16 %v1752, %v1751
        %v1832 = vpack.c.b16 %v1754, %v1753
        %v1833 = vpack.c.b16 %v1756, %v1755
        %v1834 = vpack.c.b16 %v1758, %v1757
        %v1835 = vpack.c.b16 %v1760, %v1759
        %v1836 = vpack.c.b16 %v1762, %v1761
        %v1837 = vpack.c.b16 %v1764, %v1763
        %v1838 = vpack.c.b16 %v1766, %v1765
        %v1839 = vpack.c.b16 %v1768, %v1767
        %v1840 = vpack.c.b16 %v1770, %v1769
        %v1841 = vpack.c.b16 %v1772, %v1771
        %v1842 = vpack.c.b16 %v1774, %v1773
        %v1843 = vpack.c.b16 %v1776, %v1775
        %v1844 = vpack.c.b16 %v1778, %v1777
        %v1845 = vpack.c.b16 %v1780, %v1779
        %v1846 = vpack.c.b16 %v1782, %v1781
        %1911 = vmatpush.bf16.msra.mxu0 %v1790
        %1912 = vmatpush.bf16.msra.mxu0 %v1789
        %1913 = vmatpush.bf16.msra.mxu0 %v1788
        %1914 = vmatpush.bf16.msra.mxu0 %v1787
        %1915 = vmatpush.bf16.msra.mxu0 %v1786
        %1916 = vmatpush.bf16.msra.mxu0 %v1785
        %1917 = vmatpush.bf16.msra.mxu0 %v1784
        %1918 = vmatpush.bf16.msra.mxu0 %v1783
        %1919 = vmatmul.bf16.gmra.mxu0 %v1191
        %v1920 = vpop.f32.mrf.mxu0
        %v1921 = vadd.f32 0.0, %v1920
        %v1922 = vpop.f32.mrf.mxu0
        %v1923 = vadd.f32 0.0, %v1922
        %1924 = vmatmul.bf16.gmra.mxu0 %v1199
        %v1925 = vpop.f32.mrf.mxu0
        %v1926 = vadd.f32 0.0, %v1925
        %v1927 = vpop.f32.mrf.mxu0
        %v1928 = vadd.f32 0.0, %v1927
        %1929 = vmatmul.bf16.gmra.mxu0 %v1207
        %v1930 = vpop.f32.mrf.mxu0
        %v1931 = vadd.f32 0.0, %v1930
        %v1932 = vpop.f32.mrf.mxu0
        %v1933 = vadd.f32 0.0, %v1932
        %1934 = vmatmul.bf16.gmra.mxu0 %v1215
        %v1935 = vpop.f32.mrf.mxu0
        %v1936 = vadd.f32 0.0, %v1935
        %v1937 = vpop.f32.mrf.mxu0
        %v1938 = vadd.f32 0.0, %v1937
        %1939 = vmatmul.bf16.gmra.mxu0 %v1223
        %v1940 = vpop.f32.mrf.mxu0
        %v1941 = vadd.f32 0.0, %v1940
        %v1942 = vpop.f32.mrf.mxu0
        %v1943 = vadd.f32 0.0, %v1942
        %1944 = vmatmul.bf16.gmra.mxu0 %v1231
        %v1945 = vpop.f32.mrf.mxu0
        %v1946 = vadd.f32 0.0, %v1945
        %v1947 = vpop.f32.mrf.mxu0
        %v1948 = vadd.f32 0.0, %v1947
        %1949 = vmatmul.bf16.gmra.mxu0 %v1239
        %v1950 = vpop.f32.mrf.mxu0
        %v1951 = vadd.f32 0.0, %v1950
        %v1952 = vpop.f32.mrf.mxu0
        %v1953 = vadd.f32 0.0, %v1952
        %1954 = vmatmul.bf16.gmra.mxu0 %v1247
        %v1955 = vpop.f32.mrf.mxu0
        %v1956 = vadd.f32 0.0, %v1955
        %v1957 = vpop.f32.mrf.mxu0
        %v1958 = vadd.f32 0.0, %v1957
        %1959 = vmatmul.bf16.gmra.mxu0 %v1255
        %v1960 = vpop.f32.mrf.mxu0
        %v1961 = vadd.f32 0.0, %v1960
        %v1962 = vpop.f32.mrf.mxu0
        %v1963 = vadd.f32 0.0, %v1962
        %1964 = vmatmul.bf16.gmra.mxu0 %v1263
        %v1965 = vpop.f32.mrf.mxu0
        %v1966 = vadd.f32 0.0, %v1965
        %v1967 = vpop.f32.mrf.mxu0
        %v1968 = vadd.f32 0.0, %v1967
        %1969 = vmatmul.bf16.gmra.mxu0 %v1271
        %v1970 = vpop.f32.mrf.mxu0
        %v1971 = vadd.f32 0.0, %v1970
        %v1972 = vpop.f32.mrf.mxu0
        %v1973 = vadd.f32 0.0, %v1972
        %1974 = vmatmul.bf16.gmra.mxu0 %v1279
        %v1975 = vpop.f32.mrf.mxu0
        %v1976 = vadd.f32 0.0, %v1975
        %v1977 = vpop.f32.mrf.mxu0
        %v1978 = vadd.f32 0.0, %v1977
        %1979 = vmatmul.bf16.gmra.mxu0 %v1287
        %v1980 = vpop.f32.mrf.mxu0
        %v1981 = vadd.f32 0.0, %v1980
        %v1982 = vpop.f32.mrf.mxu0
        %v1983 = vadd.f32 0.0, %v1982
        %1984 = vmatmul.bf16.gmra.mxu0 %v1295
        %v1985 = vpop.f32.mrf.mxu0
        %v1986 = vadd.f32 0.0, %v1985
        %v1987 = vpop.f32.mrf.mxu0
        %v1988 = vadd.f32 0.0, %v1987
        %1989 = vmatmul.bf16.gmra.mxu0 %v1303
        %v1990 = vpop.f32.mrf.mxu0
        %v1991 = vadd.f32 0.0, %v1990
        %v1992 = vpop.f32.mrf.mxu0
        %v1993 = vadd.f32 0.0, %v1992
        %1994 = vmatmul.bf16.gmra.mxu0 %v1311
        %v1995 = vpop.f32.mrf.mxu0
        %v1996 = vadd.f32 0.0, %v1995
        %v1997 = vpop.f32.mrf.mxu0
        %v1998 = vadd.f32 0.0, %v1997
        %1999 = vmatmul.bf16.gmra.mxu0 %v1319
        %v2000 = vpop.f32.mrf.mxu0
        %v2001 = vadd.f32 0.0, %v2000
        %v2002 = vpop.f32.mrf.mxu0
        %v2003 = vadd.f32 0.0, %v2002
        %2004 = vmatmul.bf16.gmra.mxu0 %v1327
        %v2005 = vpop.f32.mrf.mxu0
        %v2006 = vadd.f32 0.0, %v2005
        %v2007 = vpop.f32.mrf.mxu0
        %v2008 = vadd.f32 0.0, %v2007
        %2009 = vmatmul.bf16.gmra.mxu0 %v1335
        %v2010 = vpop.f32.mrf.mxu0
        %v2011 = vadd.f32 0.0, %v2010
        %v2012 = vpop.f32.mrf.mxu0
        %v2013 = vadd.f32 0.0, %v2012
        %2014 = vmatmul.bf16.gmra.mxu0 %v1343
        %v2015 = vpop.f32.mrf.mxu0
        %v2016 = vadd.f32 0.0, %v2015
        %v2017 = vpop.f32.mrf.mxu0
        %v2018 = vadd.f32 0.0, %v2017
        %2019 = vmatmul.bf16.gmra.mxu0 %v1351
        %v2020 = vpop.f32.mrf.mxu0
        %v2021 = vadd.f32 0.0, %v2020
        %v2022 = vpop.f32.mrf.mxu0
        %v2023 = vadd.f32 0.0, %v2022
        %2024 = vdwg.mxu0
        %2025 = vmatpush.bf16.msra.mxu0 %v1798
        %2026 = vmatpush.bf16.msra.mxu0 %v1797
        %2027 = vmatpush.bf16.msra.mxu0 %v1796
        %2028 = vmatpush.bf16.msra.mxu0 %v1795
        %2029 = vmatpush.bf16.msra.mxu0 %v1794
        %2030 = vmatpush.bf16.msra.mxu0 %v1793
        %2031 = vmatpush.bf16.msra.mxu0 %v1792
        %2032 = vmatpush.bf16.msra.mxu0 %v1791
        %2033 = vmatmul.bf16.gmra.mxu0 %v1192
        %v2034 = vpop.f32.mrf.mxu0
        %v2035 = vadd.f32 %v1921, %v2034
        %v2036 = vpop.f32.mrf.mxu0
        %v2037 = vadd.f32 %v1923, %v2036
        %2038 = vmatmul.bf16.gmra.mxu0 %v1200
        %v2039 = vpop.f32.mrf.mxu0
        %v2040 = vadd.f32 %v1926, %v2039
        %v2041 = vpop.f32.mrf.mxu0
        %v2042 = vadd.f32 %v1928, %v2041
        %2043 = vmatmul.bf16.gmra.mxu0 %v1208
        %v2044 = vpop.f32.mrf.mxu0
        %v2045 = vadd.f32 %v1931, %v2044
        %v2046 = vpop.f32.mrf.mxu0
        %v2047 = vadd.f32 %v1933, %v2046
        %2048 = vmatmul.bf16.gmra.mxu0 %v1216
        %v2049 = vpop.f32.mrf.mxu0
        %v2050 = vadd.f32 %v1936, %v2049
        %v2051 = vpop.f32.mrf.mxu0
        %v2052 = vadd.f32 %v1938, %v2051
        %2053 = vmatmul.bf16.gmra.mxu0 %v1224
        %v2054 = vpop.f32.mrf.mxu0
        %v2055 = vadd.f32 %v1941, %v2054
        %v2056 = vpop.f32.mrf.mxu0
        %v2057 = vadd.f32 %v1943, %v2056
        %2058 = vmatmul.bf16.gmra.mxu0 %v1232
        %v2059 = vpop.f32.mrf.mxu0
        %v2060 = vadd.f32 %v1946, %v2059
        %v2061 = vpop.f32.mrf.mxu0
        %v2062 = vadd.f32 %v1948, %v2061
        %2063 = vmatmul.bf16.gmra.mxu0 %v1240
        %v2064 = vpop.f32.mrf.mxu0
        %v2065 = vadd.f32 %v1951, %v2064
        %v2066 = vpop.f32.mrf.mxu0
        %v2067 = vadd.f32 %v1953, %v2066
        %2068 = vmatmul.bf16.gmra.mxu0 %v1248
        %v2069 = vpop.f32.mrf.mxu0
        %v2070 = vadd.f32 %v1956, %v2069
        %v2071 = vpop.f32.mrf.mxu0
        %v2072 = vadd.f32 %v1958, %v2071
        %2073 = vmatmul.bf16.gmra.mxu0 %v1256
        %v2074 = vpop.f32.mrf.mxu0
        %v2075 = vadd.f32 %v1961, %v2074
        %v2076 = vpop.f32.mrf.mxu0
        %v2077 = vadd.f32 %v1963, %v2076
        %2078 = vmatmul.bf16.gmra.mxu0 %v1264
        %v2079 = vpop.f32.mrf.mxu0
        %v2080 = vadd.f32 %v1966, %v2079
        %v2081 = vpop.f32.mrf.mxu0
        %v2082 = vadd.f32 %v1968, %v2081
        %2083 = vmatmul.bf16.gmra.mxu0 %v1272
        %v2084 = vpop.f32.mrf.mxu0
        %v2085 = vadd.f32 %v1971, %v2084
        %v2086 = vpop.f32.mrf.mxu0
        %v2087 = vadd.f32 %v1973, %v2086
        %2088 = vmatmul.bf16.gmra.mxu0 %v1280
        %v2089 = vpop.f32.mrf.mxu0
        %v2090 = vadd.f32 %v1976, %v2089
        %v2091 = vpop.f32.mrf.mxu0
        %v2092 = vadd.f32 %v1978, %v2091
        %2093 = vmatmul.bf16.gmra.mxu0 %v1288
        %v2094 = vpop.f32.mrf.mxu0
        %v2095 = vadd.f32 %v1981, %v2094
        %v2096 = vpop.f32.mrf.mxu0
        %v2097 = vadd.f32 %v1983, %v2096
        %2098 = vmatmul.bf16.gmra.mxu0 %v1296
        %v2099 = vpop.f32.mrf.mxu0
        %v2100 = vadd.f32 %v1986, %v2099
        %v2101 = vpop.f32.mrf.mxu0
        %v2102 = vadd.f32 %v1988, %v2101
        %2103 = vmatmul.bf16.gmra.mxu0 %v1304
        %v2104 = vpop.f32.mrf.mxu0
        %v2105 = vadd.f32 %v1991, %v2104
        %v2106 = vpop.f32.mrf.mxu0
        %v2107 = vadd.f32 %v1993, %v2106
        %2108 = vmatmul.bf16.gmra.mxu0 %v1312
        %v2109 = vpop.f32.mrf.mxu0
        %v2110 = vadd.f32 %v1996, %v2109
        %v2111 = vpop.f32.mrf.mxu0
        %v2112 = vadd.f32 %v1998, %v2111
        %2113 = vmatmul.bf16.gmra.mxu0 %v1320
        %v2114 = vpop.f32.mrf.mxu0
        %v2115 = vadd.f32 %v2001, %v2114
        %v2116 = vpop.f32.mrf.mxu0
        %v2117 = vadd.f32 %v2003, %v2116
        %2118 = vmatmul.bf16.gmra.mxu0 %v1328
        %v2119 = vpop.f32.mrf.mxu0
        %v2120 = vadd.f32 %v2006, %v2119
        %v2121 = vpop.f32.mrf.mxu0
        %v2122 = vadd.f32 %v2008, %v2121
        %2123 = vmatmul.bf16.gmra.mxu0 %v1336
        %v2124 = vpop.f32.mrf.mxu0
        %v2125 = vadd.f32 %v2011, %v2124
        %v2126 = vpop.f32.mrf.mxu0
        %v2127 = vadd.f32 %v2013, %v2126
        %2128 = vmatmul.bf16.gmra.mxu0 %v1344
        %v2129 = vpop.f32.mrf.mxu0
        %v2130 = vadd.f32 %v2016, %v2129
        %v2131 = vpop.f32.mrf.mxu0
        %v2132 = vadd.f32 %v2018, %v2131
        %2133 = vmatmul.bf16.gmra.mxu0 %v1352
        %v2134 = vpop.f32.mrf.mxu0
        %v2135 = vadd.f32 %v2021, %v2134
        %v2136 = vpop.f32.mrf.mxu0
        %v2137 = vadd.f32 %v2023, %v2136
        %2138 = vdwg.mxu0
        %2139 = vmatpush.bf16.msra.mxu0 %v1806
        %2140 = vmatpush.bf16.msra.mxu0 %v1805
        %2141 = vmatpush.bf16.msra.mxu0 %v1804
        %2142 = vmatpush.bf16.msra.mxu0 %v1803
        %2143 = vmatpush.bf16.msra.mxu0 %v1802
        %2144 = vmatpush.bf16.msra.mxu0 %v1801
        %2145 = vmatpush.bf16.msra.mxu0 %v1800
        %2146 = vmatpush.bf16.msra.mxu0 %v1799
        %2147 = vmatmul.bf16.gmra.mxu0 %v1193
        %v2148 = vpop.f32.mrf.mxu0
        %v2149 = vadd.f32 %v2035, %v2148
        %v2150 = vpop.f32.mrf.mxu0
        %v2151 = vadd.f32 %v2037, %v2150
        %2152 = vmatmul.bf16.gmra.mxu0 %v1201
        %v2153 = vpop.f32.mrf.mxu0
        %v2154 = vadd.f32 %v2040, %v2153
        %v2155 = vpop.f32.mrf.mxu0
        %v2156 = vadd.f32 %v2042, %v2155
        %2157 = vmatmul.bf16.gmra.mxu0 %v1209
        %v2158 = vpop.f32.mrf.mxu0
        %v2159 = vadd.f32 %v2045, %v2158
        %v2160 = vpop.f32.mrf.mxu0
        %v2161 = vadd.f32 %v2047, %v2160
        %2162 = vmatmul.bf16.gmra.mxu0 %v1217
        %v2163 = vpop.f32.mrf.mxu0
        %v2164 = vadd.f32 %v2050, %v2163
        %v2165 = vpop.f32.mrf.mxu0
        %v2166 = vadd.f32 %v2052, %v2165
        %2167 = vmatmul.bf16.gmra.mxu0 %v1225
        %v2168 = vpop.f32.mrf.mxu0
        %v2169 = vadd.f32 %v2055, %v2168
        %v2170 = vpop.f32.mrf.mxu0
        %v2171 = vadd.f32 %v2057, %v2170
        %2172 = vmatmul.bf16.gmra.mxu0 %v1233
        %v2173 = vpop.f32.mrf.mxu0
        %v2174 = vadd.f32 %v2060, %v2173
        %v2175 = vpop.f32.mrf.mxu0
        %v2176 = vadd.f32 %v2062, %v2175
        %2177 = vmatmul.bf16.gmra.mxu0 %v1241
        %v2178 = vpop.f32.mrf.mxu0
        %v2179 = vadd.f32 %v2065, %v2178
        %v2180 = vpop.f32.mrf.mxu0
        %v2181 = vadd.f32 %v2067, %v2180
        %2182 = vmatmul.bf16.gmra.mxu0 %v1249
        %v2183 = vpop.f32.mrf.mxu0
        %v2184 = vadd.f32 %v2070, %v2183
        %v2185 = vpop.f32.mrf.mxu0
        %v2186 = vadd.f32 %v2072, %v2185
        %2187 = vmatmul.bf16.gmra.mxu0 %v1257
        %v2188 = vpop.f32.mrf.mxu0
        %v2189 = vadd.f32 %v2075, %v2188
        %v2190 = vpop.f32.mrf.mxu0
        %v2191 = vadd.f32 %v2077, %v2190
        %2192 = vmatmul.bf16.gmra.mxu0 %v1265
        %v2193 = vpop.f32.mrf.mxu0
        %v2194 = vadd.f32 %v2080, %v2193
        %v2195 = vpop.f32.mrf.mxu0
        %v2196 = vadd.f32 %v2082, %v2195
        %2197 = vmatmul.bf16.gmra.mxu0 %v1273
        %v2198 = vpop.f32.mrf.mxu0
        %v2199 = vadd.f32 %v2085, %v2198
        %v2200 = vpop.f32.mrf.mxu0
        %v2201 = vadd.f32 %v2087, %v2200
        %2202 = vmatmul.bf16.gmra.mxu0 %v1281
        %v2203 = vpop.f32.mrf.mxu0
        %v2204 = vadd.f32 %v2090, %v2203
        %v2205 = vpop.f32.mrf.mxu0
        %v2206 = vadd.f32 %v2092, %v2205
        %2207 = vmatmul.bf16.gmra.mxu0 %v1289
        %v2208 = vpop.f32.mrf.mxu0
        %v2209 = vadd.f32 %v2095, %v2208
        %v2210 = vpop.f32.mrf.mxu0
        %v2211 = vadd.f32 %v2097, %v2210
        %2212 = vmatmul.bf16.gmra.mxu0 %v1297
        %v2213 = vpop.f32.mrf.mxu0
        %v2214 = vadd.f32 %v2100, %v2213
        %v2215 = vpop.f32.mrf.mxu0
        %v2216 = vadd.f32 %v2102, %v2215
        %2217 = vmatmul.bf16.gmra.mxu0 %v1305
        %v2218 = vpop.f32.mrf.mxu0
        %v2219 = vadd.f32 %v2105, %v2218
        %v2220 = vpop.f32.mrf.mxu0
        %v2221 = vadd.f32 %v2107, %v2220
        %2222 = vmatmul.bf16.gmra.mxu0 %v1313
        %v2223 = vpop.f32.mrf.mxu0
        %v2224 = vadd.f32 %v2110, %v2223
        %v2225 = vpop.f32.mrf.mxu0
        %v2226 = vadd.f32 %v2112, %v2225
        %2227 = vmatmul.bf16.gmra.mxu0 %v1321
        %v2228 = vpop.f32.mrf.mxu0
        %v2229 = vadd.f32 %v2115, %v2228
        %v2230 = vpop.f32.mrf.mxu0
        %v2231 = vadd.f32 %v2117, %v2230
        %2232 = vmatmul.bf16.gmra.mxu0 %v1329
        %v2233 = vpop.f32.mrf.mxu0
        %v2234 = vadd.f32 %v2120, %v2233
        %v2235 = vpop.f32.mrf.mxu0
        %v2236 = vadd.f32 %v2122, %v2235
        %2237 = vmatmul.bf16.gmra.mxu0 %v1337
        %v2238 = vpop.f32.mrf.mxu0
        %v2239 = vadd.f32 %v2125, %v2238
        %v2240 = vpop.f32.mrf.mxu0
        %v2241 = vadd.f32 %v2127, %v2240
        %2242 = vmatmul.bf16.gmra.mxu0 %v1345
        %v2243 = vpop.f32.mrf.mxu0
        %v2244 = vadd.f32 %v2130, %v2243
        %v2245 = vpop.f32.mrf.mxu0
        %v2246 = vadd.f32 %v2132, %v2245
        %2247 = vmatmul.bf16.gmra.mxu0 %v1353
        %v2248 = vpop.f32.mrf.mxu0
        %v2249 = vadd.f32 %v2135, %v2248
        %v2250 = vpop.f32.mrf.mxu0
        %v2251 = vadd.f32 %v2137, %v2250
        %2252 = vdwg.mxu0
        %2253 = vmatpush.bf16.msra.mxu0 %v1814
        %2254 = vmatpush.bf16.msra.mxu0 %v1813
        %2255 = vmatpush.bf16.msra.mxu0 %v1812
        %2256 = vmatpush.bf16.msra.mxu0 %v1811
        %2257 = vmatpush.bf16.msra.mxu0 %v1810
        %2258 = vmatpush.bf16.msra.mxu0 %v1809
        %2259 = vmatpush.bf16.msra.mxu0 %v1808
        %2260 = vmatpush.bf16.msra.mxu0 %v1807
        %2261 = vmatmul.bf16.gmra.mxu0 %v1194
        %v2262 = vpop.f32.mrf.mxu0
        %v2263 = vadd.f32 %v2149, %v2262
        %v2264 = vpop.f32.mrf.mxu0
        %v2265 = vadd.f32 %v2151, %v2264
        %2266 = vmatmul.bf16.gmra.mxu0 %v1202
        %v2267 = vpop.f32.mrf.mxu0
        %v2268 = vadd.f32 %v2154, %v2267
        %v2269 = vpop.f32.mrf.mxu0
        %v2270 = vadd.f32 %v2156, %v2269
        %2271 = vmatmul.bf16.gmra.mxu0 %v1210
        %v2272 = vpop.f32.mrf.mxu0
        %v2273 = vadd.f32 %v2159, %v2272
        %v2274 = vpop.f32.mrf.mxu0
        %v2275 = vadd.f32 %v2161, %v2274
        %2276 = vmatmul.bf16.gmra.mxu0 %v1218
        %v2277 = vpop.f32.mrf.mxu0
        %v2278 = vadd.f32 %v2164, %v2277
        %v2279 = vpop.f32.mrf.mxu0
        %v2280 = vadd.f32 %v2166, %v2279
        %2281 = vmatmul.bf16.gmra.mxu0 %v1226
        %v2282 = vpop.f32.mrf.mxu0
        %v2283 = vadd.f32 %v2169, %v2282
        %v2284 = vpop.f32.mrf.mxu0
        %v2285 = vadd.f32 %v2171, %v2284
        %2286 = vmatmul.bf16.gmra.mxu0 %v1234
        %v2287 = vpop.f32.mrf.mxu0
        %v2288 = vadd.f32 %v2174, %v2287
        %v2289 = vpop.f32.mrf.mxu0
        %v2290 = vadd.f32 %v2176, %v2289
        %2291 = vmatmul.bf16.gmra.mxu0 %v1242
        %v2292 = vpop.f32.mrf.mxu0
        %v2293 = vadd.f32 %v2179, %v2292
        %v2294 = vpop.f32.mrf.mxu0
        %v2295 = vadd.f32 %v2181, %v2294
        %2296 = vmatmul.bf16.gmra.mxu0 %v1250
        %v2297 = vpop.f32.mrf.mxu0
        %v2298 = vadd.f32 %v2184, %v2297
        %v2299 = vpop.f32.mrf.mxu0
        %v2300 = vadd.f32 %v2186, %v2299
        %2301 = vmatmul.bf16.gmra.mxu0 %v1258
        %v2302 = vpop.f32.mrf.mxu0
        %v2303 = vadd.f32 %v2189, %v2302
        %v2304 = vpop.f32.mrf.mxu0
        %v2305 = vadd.f32 %v2191, %v2304
        %2306 = vmatmul.bf16.gmra.mxu0 %v1266
        %v2307 = vpop.f32.mrf.mxu0
        %v2308 = vadd.f32 %v2194, %v2307
        %v2309 = vpop.f32.mrf.mxu0
        %v2310 = vadd.f32 %v2196, %v2309
        %2311 = vmatmul.bf16.gmra.mxu0 %v1274
        %v2312 = vpop.f32.mrf.mxu0
        %v2313 = vadd.f32 %v2199, %v2312
        %v2314 = vpop.f32.mrf.mxu0
        %v2315 = vadd.f32 %v2201, %v2314
        %2316 = vmatmul.bf16.gmra.mxu0 %v1282
        %v2317 = vpop.f32.mrf.mxu0
        %v2318 = vadd.f32 %v2204, %v2317
        %v2319 = vpop.f32.mrf.mxu0
        %v2320 = vadd.f32 %v2206, %v2319
        %2321 = vmatmul.bf16.gmra.mxu0 %v1290
        %v2322 = vpop.f32.mrf.mxu0
        %v2323 = vadd.f32 %v2209, %v2322
        %v2324 = vpop.f32.mrf.mxu0
        %v2325 = vadd.f32 %v2211, %v2324
        %2326 = vmatmul.bf16.gmra.mxu0 %v1298
        %v2327 = vpop.f32.mrf.mxu0
        %v2328 = vadd.f32 %v2214, %v2327
        %v2329 = vpop.f32.mrf.mxu0
        %v2330 = vadd.f32 %v2216, %v2329
        %2331 = vmatmul.bf16.gmra.mxu0 %v1306
        %v2332 = vpop.f32.mrf.mxu0
        %v2333 = vadd.f32 %v2219, %v2332
        %v2334 = vpop.f32.mrf.mxu0
        %v2335 = vadd.f32 %v2221, %v2334
        %2336 = vmatmul.bf16.gmra.mxu0 %v1314
        %v2337 = vpop.f32.mrf.mxu0
        %v2338 = vadd.f32 %v2224, %v2337
        %v2339 = vpop.f32.mrf.mxu0
        %v2340 = vadd.f32 %v2226, %v2339
        %2341 = vmatmul.bf16.gmra.mxu0 %v1322
        %v2342 = vpop.f32.mrf.mxu0
        %v2343 = vadd.f32 %v2229, %v2342
        %v2344 = vpop.f32.mrf.mxu0
        %v2345 = vadd.f32 %v2231, %v2344
        %2346 = vmatmul.bf16.gmra.mxu0 %v1330
        %v2347 = vpop.f32.mrf.mxu0
        %v2348 = vadd.f32 %v2234, %v2347
        %v2349 = vpop.f32.mrf.mxu0
        %v2350 = vadd.f32 %v2236, %v2349
        %2351 = vmatmul.bf16.gmra.mxu0 %v1338
        %v2352 = vpop.f32.mrf.mxu0
        %v2353 = vadd.f32 %v2239, %v2352
        %v2354 = vpop.f32.mrf.mxu0
        %v2355 = vadd.f32 %v2241, %v2354
        %2356 = vmatmul.bf16.gmra.mxu0 %v1346
        %v2357 = vpop.f32.mrf.mxu0
        %v2358 = vadd.f32 %v2244, %v2357
        %v2359 = vpop.f32.mrf.mxu0
        %v2360 = vadd.f32 %v2246, %v2359
        %2361 = vmatmul.bf16.gmra.mxu0 %v1354
        %v2362 = vpop.f32.mrf.mxu0
        %v2363 = vadd.f32 %v2249, %v2362
        %v2364 = vpop.f32.mrf.mxu0
        %v2365 = vadd.f32 %v2251, %v2364
        %2366 = vdwg.mxu0
        %2367 = vmatpush.bf16.msra.mxu0 %v1822
        %2368 = vmatpush.bf16.msra.mxu0 %v1821
        %2369 = vmatpush.bf16.msra.mxu0 %v1820
        %2370 = vmatpush.bf16.msra.mxu0 %v1819
        %2371 = vmatpush.bf16.msra.mxu0 %v1818
        %2372 = vmatpush.bf16.msra.mxu0 %v1817
        %2373 = vmatpush.bf16.msra.mxu0 %v1816
        %2374 = vmatpush.bf16.msra.mxu0 %v1815
        %2375 = vmatmul.bf16.gmra.mxu0 %v1195
        %v2376 = vpop.f32.mrf.mxu0
        %v2377 = vadd.f32 %v2263, %v2376
        %v2378 = vpop.f32.mrf.mxu0
        %v2379 = vadd.f32 %v2265, %v2378
        %2380 = vmatmul.bf16.gmra.mxu0 %v1203
        %v2381 = vpop.f32.mrf.mxu0
        %v2382 = vadd.f32 %v2268, %v2381
        %v2383 = vpop.f32.mrf.mxu0
        %v2384 = vadd.f32 %v2270, %v2383
        %2385 = vmatmul.bf16.gmra.mxu0 %v1211
        %v2386 = vpop.f32.mrf.mxu0
        %v2387 = vadd.f32 %v2273, %v2386
        %v2388 = vpop.f32.mrf.mxu0
        %v2389 = vadd.f32 %v2275, %v2388
        %2390 = vmatmul.bf16.gmra.mxu0 %v1219
        %v2391 = vpop.f32.mrf.mxu0
        %v2392 = vadd.f32 %v2278, %v2391
        %v2393 = vpop.f32.mrf.mxu0
        %v2394 = vadd.f32 %v2280, %v2393
        %2395 = vmatmul.bf16.gmra.mxu0 %v1227
        %v2396 = vpop.f32.mrf.mxu0
        %v2397 = vadd.f32 %v2283, %v2396
        %v2398 = vpop.f32.mrf.mxu0
        %v2399 = vadd.f32 %v2285, %v2398
        %2400 = vmatmul.bf16.gmra.mxu0 %v1235
        %v2401 = vpop.f32.mrf.mxu0
        %v2402 = vadd.f32 %v2288, %v2401
        %v2403 = vpop.f32.mrf.mxu0
        %v2404 = vadd.f32 %v2290, %v2403
        %2405 = vmatmul.bf16.gmra.mxu0 %v1243
        %v2406 = vpop.f32.mrf.mxu0
        %v2407 = vadd.f32 %v2293, %v2406
        %v2408 = vpop.f32.mrf.mxu0
        %v2409 = vadd.f32 %v2295, %v2408
        %2410 = vmatmul.bf16.gmra.mxu0 %v1251
        %v2411 = vpop.f32.mrf.mxu0
        %v2412 = vadd.f32 %v2298, %v2411
        %v2413 = vpop.f32.mrf.mxu0
        %v2414 = vadd.f32 %v2300, %v2413
        %2415 = vmatmul.bf16.gmra.mxu0 %v1259
        %v2416 = vpop.f32.mrf.mxu0
        %v2417 = vadd.f32 %v2303, %v2416
        %v2418 = vpop.f32.mrf.mxu0
        %v2419 = vadd.f32 %v2305, %v2418
        %2420 = vmatmul.bf16.gmra.mxu0 %v1267
        %v2421 = vpop.f32.mrf.mxu0
        %v2422 = vadd.f32 %v2308, %v2421
        %v2423 = vpop.f32.mrf.mxu0
        %v2424 = vadd.f32 %v2310, %v2423
        %2425 = vmatmul.bf16.gmra.mxu0 %v1275
        %v2426 = vpop.f32.mrf.mxu0
        %v2427 = vadd.f32 %v2313, %v2426
        %v2428 = vpop.f32.mrf.mxu0
        %v2429 = vadd.f32 %v2315, %v2428
        %2430 = vmatmul.bf16.gmra.mxu0 %v1283
        %v2431 = vpop.f32.mrf.mxu0
        %v2432 = vadd.f32 %v2318, %v2431
        %v2433 = vpop.f32.mrf.mxu0
        %v2434 = vadd.f32 %v2320, %v2433
        %2435 = vmatmul.bf16.gmra.mxu0 %v1291
        %v2436 = vpop.f32.mrf.mxu0
        %v2437 = vadd.f32 %v2323, %v2436
        %v2438 = vpop.f32.mrf.mxu0
        %v2439 = vadd.f32 %v2325, %v2438
        %2440 = vmatmul.bf16.gmra.mxu0 %v1299
        %v2441 = vpop.f32.mrf.mxu0
        %v2442 = vadd.f32 %v2328, %v2441
        %v2443 = vpop.f32.mrf.mxu0
        %v2444 = vadd.f32 %v2330, %v2443
        %2445 = vmatmul.bf16.gmra.mxu0 %v1307
        %v2446 = vpop.f32.mrf.mxu0
        %v2447 = vadd.f32 %v2333, %v2446
        %v2448 = vpop.f32.mrf.mxu0
        %v2449 = vadd.f32 %v2335, %v2448
        %2450 = vmatmul.bf16.gmra.mxu0 %v1315
        %v2451 = vpop.f32.mrf.mxu0
        %v2452 = vadd.f32 %v2338, %v2451
        %v2453 = vpop.f32.mrf.mxu0
        %v2454 = vadd.f32 %v2340, %v2453
        %2455 = vmatmul.bf16.gmra.mxu0 %v1323
        %v2456 = vpop.f32.mrf.mxu0
        %v2457 = vadd.f32 %v2343, %v2456
        %v2458 = vpop.f32.mrf.mxu0
        %v2459 = vadd.f32 %v2345, %v2458
        %2460 = vmatmul.bf16.gmra.mxu0 %v1331
        %v2461 = vpop.f32.mrf.mxu0
        %v2462 = vadd.f32 %v2348, %v2461
        %v2463 = vpop.f32.mrf.mxu0
        %v2464 = vadd.f32 %v2350, %v2463
        %2465 = vmatmul.bf16.gmra.mxu0 %v1339
        %v2466 = vpop.f32.mrf.mxu0
        %v2467 = vadd.f32 %v2353, %v2466
        %v2468 = vpop.f32.mrf.mxu0
        %v2469 = vadd.f32 %v2355, %v2468
        %2470 = vmatmul.bf16.gmra.mxu0 %v1347
        %v2471 = vpop.f32.mrf.mxu0
        %v2472 = vadd.f32 %v2358, %v2471
        %v2473 = vpop.f32.mrf.mxu0
        %v2474 = vadd.f32 %v2360, %v2473
        %2475 = vmatmul.bf16.gmra.mxu0 %v1355
        %v2476 = vpop.f32.mrf.mxu0
        %v2477 = vadd.f32 %v2363, %v2476
        %v2478 = vpop.f32.mrf.mxu0
        %v2479 = vadd.f32 %v2365, %v2478
        %2480 = vdwg.mxu0
        %2481 = vmatpush.bf16.msra.mxu0 %v1830
        %2482 = vmatpush.bf16.msra.mxu0 %v1829
        %2483 = vmatpush.bf16.msra.mxu0 %v1828
        %2484 = vmatpush.bf16.msra.mxu0 %v1827
        %2485 = vmatpush.bf16.msra.mxu0 %v1826
        %2486 = vmatpush.bf16.msra.mxu0 %v1825
        %2487 = vmatpush.bf16.msra.mxu0 %v1824
        %2488 = vmatpush.bf16.msra.mxu0 %v1823
        %2489 = vmatmul.bf16.gmra.mxu0 %v1196
        %v2490 = vpop.f32.mrf.mxu0
        %v2491 = vadd.f32 %v2377, %v2490
        %v2492 = vpop.f32.mrf.mxu0
        %v2493 = vadd.f32 %v2379, %v2492
        %2494 = vmatmul.bf16.gmra.mxu0 %v1204
        %v2495 = vpop.f32.mrf.mxu0
        %v2496 = vadd.f32 %v2382, %v2495
        %v2497 = vpop.f32.mrf.mxu0
        %v2498 = vadd.f32 %v2384, %v2497
        %2499 = vmatmul.bf16.gmra.mxu0 %v1212
        %v2500 = vpop.f32.mrf.mxu0
        %v2501 = vadd.f32 %v2387, %v2500
        %v2502 = vpop.f32.mrf.mxu0
        %v2503 = vadd.f32 %v2389, %v2502
        %2504 = vmatmul.bf16.gmra.mxu0 %v1220
        %v2505 = vpop.f32.mrf.mxu0
        %v2506 = vadd.f32 %v2392, %v2505
        %v2507 = vpop.f32.mrf.mxu0
        %v2508 = vadd.f32 %v2394, %v2507
        %2509 = vmatmul.bf16.gmra.mxu0 %v1228
        %v2510 = vpop.f32.mrf.mxu0
        %v2511 = vadd.f32 %v2397, %v2510
        %v2512 = vpop.f32.mrf.mxu0
        %v2513 = vadd.f32 %v2399, %v2512
        %2514 = vmatmul.bf16.gmra.mxu0 %v1236
        %v2515 = vpop.f32.mrf.mxu0
        %v2516 = vadd.f32 %v2402, %v2515
        %v2517 = vpop.f32.mrf.mxu0
        %v2518 = vadd.f32 %v2404, %v2517
        %2519 = vmatmul.bf16.gmra.mxu0 %v1244
        %v2520 = vpop.f32.mrf.mxu0
        %v2521 = vadd.f32 %v2407, %v2520
        %v2522 = vpop.f32.mrf.mxu0
        %v2523 = vadd.f32 %v2409, %v2522
        %2524 = vmatmul.bf16.gmra.mxu0 %v1252
        %v2525 = vpop.f32.mrf.mxu0
        %v2526 = vadd.f32 %v2412, %v2525
        %v2527 = vpop.f32.mrf.mxu0
        %v2528 = vadd.f32 %v2414, %v2527
        %2529 = vmatmul.bf16.gmra.mxu0 %v1260
        %v2530 = vpop.f32.mrf.mxu0
        %v2531 = vadd.f32 %v2417, %v2530
        %v2532 = vpop.f32.mrf.mxu0
        %v2533 = vadd.f32 %v2419, %v2532
        %2534 = vmatmul.bf16.gmra.mxu0 %v1268
        %v2535 = vpop.f32.mrf.mxu0
        %v2536 = vadd.f32 %v2422, %v2535
        %v2537 = vpop.f32.mrf.mxu0
        %v2538 = vadd.f32 %v2424, %v2537
        %2539 = vmatmul.bf16.gmra.mxu0 %v1276
        %v2540 = vpop.f32.mrf.mxu0
        %v2541 = vadd.f32 %v2427, %v2540
        %v2542 = vpop.f32.mrf.mxu0
        %v2543 = vadd.f32 %v2429, %v2542
        %2544 = vmatmul.bf16.gmra.mxu0 %v1284
        %v2545 = vpop.f32.mrf.mxu0
        %v2546 = vadd.f32 %v2432, %v2545
        %v2547 = vpop.f32.mrf.mxu0
        %v2548 = vadd.f32 %v2434, %v2547
        %2549 = vmatmul.bf16.gmra.mxu0 %v1292
        %v2550 = vpop.f32.mrf.mxu0
        %v2551 = vadd.f32 %v2437, %v2550
        %v2552 = vpop.f32.mrf.mxu0
        %v2553 = vadd.f32 %v2439, %v2552
        %2554 = vmatmul.bf16.gmra.mxu0 %v1300
        %v2555 = vpop.f32.mrf.mxu0
        %v2556 = vadd.f32 %v2442, %v2555
        %v2557 = vpop.f32.mrf.mxu0
        %v2558 = vadd.f32 %v2444, %v2557
        %2559 = vmatmul.bf16.gmra.mxu0 %v1308
        %v2560 = vpop.f32.mrf.mxu0
        %v2561 = vadd.f32 %v2447, %v2560
        %v2562 = vpop.f32.mrf.mxu0
        %v2563 = vadd.f32 %v2449, %v2562
        %2564 = vmatmul.bf16.gmra.mxu0 %v1316
        %v2565 = vpop.f32.mrf.mxu0
        %v2566 = vadd.f32 %v2452, %v2565
        %v2567 = vpop.f32.mrf.mxu0
        %v2568 = vadd.f32 %v2454, %v2567
        %2569 = vmatmul.bf16.gmra.mxu0 %v1324
        %v2570 = vpop.f32.mrf.mxu0
        %v2571 = vadd.f32 %v2457, %v2570
        %v2572 = vpop.f32.mrf.mxu0
        %v2573 = vadd.f32 %v2459, %v2572
        %2574 = vmatmul.bf16.gmra.mxu0 %v1332
        %v2575 = vpop.f32.mrf.mxu0
        %v2576 = vadd.f32 %v2462, %v2575
        %v2577 = vpop.f32.mrf.mxu0
        %v2578 = vadd.f32 %v2464, %v2577
        %2579 = vmatmul.bf16.gmra.mxu0 %v1340
        %v2580 = vpop.f32.mrf.mxu0
        %v2581 = vadd.f32 %v2467, %v2580
        %v2582 = vpop.f32.mrf.mxu0
        %v2583 = vadd.f32 %v2469, %v2582
        %2584 = vmatmul.bf16.gmra.mxu0 %v1348
        %v2585 = vpop.f32.mrf.mxu0
        %v2586 = vadd.f32 %v2472, %v2585
        %v2587 = vpop.f32.mrf.mxu0
        %v2588 = vadd.f32 %v2474, %v2587
        %2589 = vmatmul.bf16.gmra.mxu0 %v1356
        %v2590 = vpop.f32.mrf.mxu0
        %v2591 = vadd.f32 %v2477, %v2590
        %v2592 = vpop.f32.mrf.mxu0
        %v2593 = vadd.f32 %v2479, %v2592
        %2594 = vdwg.mxu0
        %2595 = vmatpush.bf16.msra.mxu0 %v1838
        %2596 = vmatpush.bf16.msra.mxu0 %v1837
        %2597 = vmatpush.bf16.msra.mxu0 %v1836
        %2598 = vmatpush.bf16.msra.mxu0 %v1835
        %2599 = vmatpush.bf16.msra.mxu0 %v1834
        %2600 = vmatpush.bf16.msra.mxu0 %v1833
        %2601 = vmatpush.bf16.msra.mxu0 %v1832
        %2602 = vmatpush.bf16.msra.mxu0 %v1831
        %2603 = vmatmul.bf16.gmra.mxu0 %v1197
        %v2604 = vpop.f32.mrf.mxu0
        %v2605 = vadd.f32 %v2491, %v2604
        %v2606 = vpop.f32.mrf.mxu0
        %v2607 = vadd.f32 %v2493, %v2606
        %2608 = vmatmul.bf16.gmra.mxu0 %v1205
        %v2609 = vpop.f32.mrf.mxu0
        %v2610 = vadd.f32 %v2496, %v2609
        %v2611 = vpop.f32.mrf.mxu0
        %v2612 = vadd.f32 %v2498, %v2611
        %2613 = vmatmul.bf16.gmra.mxu0 %v1213
        %v2614 = vpop.f32.mrf.mxu0
        %v2615 = vadd.f32 %v2501, %v2614
        %v2616 = vpop.f32.mrf.mxu0
        %v2617 = vadd.f32 %v2503, %v2616
        %2618 = vmatmul.bf16.gmra.mxu0 %v1221
        %v2619 = vpop.f32.mrf.mxu0
        %v2620 = vadd.f32 %v2506, %v2619
        %v2621 = vpop.f32.mrf.mxu0
        %v2622 = vadd.f32 %v2508, %v2621
        %2623 = vmatmul.bf16.gmra.mxu0 %v1229
        %v2624 = vpop.f32.mrf.mxu0
        %v2625 = vadd.f32 %v2511, %v2624
        %v2626 = vpop.f32.mrf.mxu0
        %v2627 = vadd.f32 %v2513, %v2626
        %2628 = vmatmul.bf16.gmra.mxu0 %v1237
        %v2629 = vpop.f32.mrf.mxu0
        %v2630 = vadd.f32 %v2516, %v2629
        %v2631 = vpop.f32.mrf.mxu0
        %v2632 = vadd.f32 %v2518, %v2631
        %2633 = vmatmul.bf16.gmra.mxu0 %v1245
        %v2634 = vpop.f32.mrf.mxu0
        %v2635 = vadd.f32 %v2521, %v2634
        %v2636 = vpop.f32.mrf.mxu0
        %v2637 = vadd.f32 %v2523, %v2636
        %2638 = vmatmul.bf16.gmra.mxu0 %v1253
        %v2639 = vpop.f32.mrf.mxu0
        %v2640 = vadd.f32 %v2526, %v2639
        %v2641 = vpop.f32.mrf.mxu0
        %v2642 = vadd.f32 %v2528, %v2641
        %2643 = vmatmul.bf16.gmra.mxu0 %v1261
        %v2644 = vpop.f32.mrf.mxu0
        %v2645 = vadd.f32 %v2531, %v2644
        %v2646 = vpop.f32.mrf.mxu0
        %v2647 = vadd.f32 %v2533, %v2646
        %2648 = vmatmul.bf16.gmra.mxu0 %v1269
        %v2649 = vpop.f32.mrf.mxu0
        %v2650 = vadd.f32 %v2536, %v2649
        %v2651 = vpop.f32.mrf.mxu0
        %v2652 = vadd.f32 %v2538, %v2651
        %2653 = vmatmul.bf16.gmra.mxu0 %v1277
        %v2654 = vpop.f32.mrf.mxu0
        %v2655 = vadd.f32 %v2541, %v2654
        %v2656 = vpop.f32.mrf.mxu0
        %v2657 = vadd.f32 %v2543, %v2656
        %2658 = vmatmul.bf16.gmra.mxu0 %v1285
        %v2659 = vpop.f32.mrf.mxu0
        %v2660 = vadd.f32 %v2546, %v2659
        %v2661 = vpop.f32.mrf.mxu0
        %v2662 = vadd.f32 %v2548, %v2661
        %2663 = vmatmul.bf16.gmra.mxu0 %v1293
        %v2664 = vpop.f32.mrf.mxu0
        %v2665 = vadd.f32 %v2551, %v2664
        %v2666 = vpop.f32.mrf.mxu0
        %v2667 = vadd.f32 %v2553, %v2666
        %2668 = vmatmul.bf16.gmra.mxu0 %v1301
        %v2669 = vpop.f32.mrf.mxu0
        %v2670 = vadd.f32 %v2556, %v2669
        %v2671 = vpop.f32.mrf.mxu0
        %v2672 = vadd.f32 %v2558, %v2671
        %2673 = vmatmul.bf16.gmra.mxu0 %v1309
        %v2674 = vpop.f32.mrf.mxu0
        %v2675 = vadd.f32 %v2561, %v2674
        %v2676 = vpop.f32.mrf.mxu0
        %v2677 = vadd.f32 %v2563, %v2676
        %2678 = vmatmul.bf16.gmra.mxu0 %v1317
        %v2679 = vpop.f32.mrf.mxu0
        %v2680 = vadd.f32 %v2566, %v2679
        %v2681 = vpop.f32.mrf.mxu0
        %v2682 = vadd.f32 %v2568, %v2681
        %2683 = vmatmul.bf16.gmra.mxu0 %v1325
        %v2684 = vpop.f32.mrf.mxu0
        %v2685 = vadd.f32 %v2571, %v2684
        %v2686 = vpop.f32.mrf.mxu0
        %v2687 = vadd.f32 %v2573, %v2686
        %2688 = vmatmul.bf16.gmra.mxu0 %v1333
        %v2689 = vpop.f32.mrf.mxu0
        %v2690 = vadd.f32 %v2576, %v2689
        %v2691 = vpop.f32.mrf.mxu0
        %v2692 = vadd.f32 %v2578, %v2691
        %2693 = vmatmul.bf16.gmra.mxu0 %v1341
        %v2694 = vpop.f32.mrf.mxu0
        %v2695 = vadd.f32 %v2581, %v2694
        %v2696 = vpop.f32.mrf.mxu0
        %v2697 = vadd.f32 %v2583, %v2696
        %2698 = vmatmul.bf16.gmra.mxu0 %v1349
        %v2699 = vpop.f32.mrf.mxu0
        %v2700 = vadd.f32 %v2586, %v2699
        %v2701 = vpop.f32.mrf.mxu0
        %v2702 = vadd.f32 %v2588, %v2701
        %2703 = vmatmul.bf16.gmra.mxu0 %v1357
        %v2704 = vpop.f32.mrf.mxu0
        %v2705 = vadd.f32 %v2591, %v2704
        %v2706 = vpop.f32.mrf.mxu0
        %v2707 = vadd.f32 %v2593, %v2706
        %2708 = vdwg.mxu0
        %2709 = vmatpush.bf16.msra.mxu0 %v1846
        %2710 = vmatpush.bf16.msra.mxu0 %v1845
        %2711 = vmatpush.bf16.msra.mxu0 %v1844
        %2712 = vmatpush.bf16.msra.mxu0 %v1843
        %2713 = vmatpush.bf16.msra.mxu0 %v1842
        %2714 = vmatpush.bf16.msra.mxu0 %v1841
        %2715 = vmatpush.bf16.msra.mxu0 %v1840
        %2716 = vmatpush.bf16.msra.mxu0 %v1839
        %2717 = vmatmul.bf16.gmra.mxu0 %v1198
        %v2718 = vpop.f32.mrf.mxu0
        %v2719 = vadd.f32 %v2605, %v2718
        %v2720 = vpop.f32.mrf.mxu0
        %v2721 = vadd.f32 %v2607, %v2720
        %2722 = vmatmul.bf16.gmra.mxu0 %v1206
        %v2723 = vpop.f32.mrf.mxu0
        %v2724 = vadd.f32 %v2610, %v2723
        %v2725 = vpop.f32.mrf.mxu0
        %v2726 = vadd.f32 %v2612, %v2725
        %2727 = vmatmul.bf16.gmra.mxu0 %v1214
        %v2728 = vpop.f32.mrf.mxu0
        %v2729 = vadd.f32 %v2615, %v2728
        %v2730 = vpop.f32.mrf.mxu0
        %v2731 = vadd.f32 %v2617, %v2730
        %2732 = vmatmul.bf16.gmra.mxu0 %v1222
        %v2733 = vpop.f32.mrf.mxu0
        %v2734 = vadd.f32 %v2620, %v2733
        %v2735 = vpop.f32.mrf.mxu0
        %v2736 = vadd.f32 %v2622, %v2735
        %2737 = vmatmul.bf16.gmra.mxu0 %v1230
        %v2738 = vpop.f32.mrf.mxu0
        %v2739 = vadd.f32 %v2625, %v2738
        %v2740 = vpop.f32.mrf.mxu0
        %v2741 = vadd.f32 %v2627, %v2740
        %2742 = vmatmul.bf16.gmra.mxu0 %v1238
        %v2743 = vpop.f32.mrf.mxu0
        %v2744 = vadd.f32 %v2630, %v2743
        %v2745 = vpop.f32.mrf.mxu0
        %v2746 = vadd.f32 %v2632, %v2745
        %2747 = vmatmul.bf16.gmra.mxu0 %v1246
        %v2748 = vpop.f32.mrf.mxu0
        %v2749 = vadd.f32 %v2635, %v2748
        %v2750 = vpop.f32.mrf.mxu0
        %v2751 = vadd.f32 %v2637, %v2750
        %2752 = vmatmul.bf16.gmra.mxu0 %v1254
        %v2753 = vpop.f32.mrf.mxu0
        %v2754 = vadd.f32 %v2640, %v2753
        %v2755 = vpop.f32.mrf.mxu0
        %v2756 = vadd.f32 %v2642, %v2755
        %2757 = vmatmul.bf16.gmra.mxu0 %v1262
        %v2758 = vpop.f32.mrf.mxu0
        %v2759 = vadd.f32 %v2645, %v2758
        %v2760 = vpop.f32.mrf.mxu0
        %v2761 = vadd.f32 %v2647, %v2760
        %2762 = vmatmul.bf16.gmra.mxu0 %v1270
        %v2763 = vpop.f32.mrf.mxu0
        %v2764 = vadd.f32 %v2650, %v2763
        %v2765 = vpop.f32.mrf.mxu0
        %v2766 = vadd.f32 %v2652, %v2765
        %2767 = vmatmul.bf16.gmra.mxu0 %v1278
        %v2768 = vpop.f32.mrf.mxu0
        %v2769 = vadd.f32 %v2655, %v2768
        %v2770 = vpop.f32.mrf.mxu0
        %v2771 = vadd.f32 %v2657, %v2770
        %2772 = vmatmul.bf16.gmra.mxu0 %v1286
        %v2773 = vpop.f32.mrf.mxu0
        %v2774 = vadd.f32 %v2660, %v2773
        %v2775 = vpop.f32.mrf.mxu0
        %v2776 = vadd.f32 %v2662, %v2775
        %2777 = vmatmul.bf16.gmra.mxu0 %v1294
        %v2778 = vpop.f32.mrf.mxu0
        %v2779 = vadd.f32 %v2665, %v2778
        %v2780 = vpop.f32.mrf.mxu0
        %v2781 = vadd.f32 %v2667, %v2780
        %2782 = vmatmul.bf16.gmra.mxu0 %v1302
        %v2783 = vpop.f32.mrf.mxu0
        %v2784 = vadd.f32 %v2670, %v2783
        %v2785 = vpop.f32.mrf.mxu0
        %v2786 = vadd.f32 %v2672, %v2785
        %2787 = vmatmul.bf16.gmra.mxu0 %v1310
        %v2788 = vpop.f32.mrf.mxu0
        %v2789 = vadd.f32 %v2675, %v2788
        %v2790 = vpop.f32.mrf.mxu0
        %v2791 = vadd.f32 %v2677, %v2790
        %2792 = vmatmul.bf16.gmra.mxu0 %v1318
        %v2793 = vpop.f32.mrf.mxu0
        %v2794 = vadd.f32 %v2680, %v2793
        %v2795 = vpop.f32.mrf.mxu0
        %v2796 = vadd.f32 %v2682, %v2795
        %2797 = vmatmul.bf16.gmra.mxu0 %v1326
        %v2798 = vpop.f32.mrf.mxu0
        %v2799 = vadd.f32 %v2685, %v2798
        %v2800 = vpop.f32.mrf.mxu0
        %v2801 = vadd.f32 %v2687, %v2800
        %2802 = vmatmul.bf16.gmra.mxu0 %v1334
        %v2803 = vpop.f32.mrf.mxu0
        %v2804 = vadd.f32 %v2690, %v2803
        %v2805 = vpop.f32.mrf.mxu0
        %v2806 = vadd.f32 %v2692, %v2805
        %2807 = vmatmul.bf16.gmra.mxu0 %v1342
        %v2808 = vpop.f32.mrf.mxu0
        %v2809 = vadd.f32 %v2695, %v2808
        %v2810 = vpop.f32.mrf.mxu0
        %v2811 = vadd.f32 %v2697, %v2810
        %2812 = vmatmul.bf16.gmra.mxu0 %v1350
        %v2813 = vpop.f32.mrf.mxu0
        %v2814 = vadd.f32 %v2700, %v2813
        %v2815 = vpop.f32.mrf.mxu0
        %v2816 = vadd.f32 %v2702, %v2815
        %2817 = vmatmul.bf16.gmra.mxu0 %v1358
        %v2818 = vpop.f32.mrf.mxu0
        %v2819 = vadd.f32 %v2705, %v2818
        %v2820 = vpop.f32.mrf.mxu0
        %v2821 = vadd.f32 %v2707, %v2820
        %2822 = vdwg.mxu0
        %v2823 = vadd.f32 %v477, %v2719
        %v2824 = vadd.f32 %v478, %v2721
        %v2825 = vadd.f32 %v479, %v2724
        %v2826 = vadd.f32 %v480, %v2726
        %v2827 = vadd.f32 %v481, %v2729
        %v2828 = vadd.f32 %v482, %v2731
        %v2829 = vadd.f32 %v483, %v2734
        %v2830 = vadd.f32 %v484, %v2736
        %v2831 = vadd.f32 %v485, %v2739
        %v2832 = vadd.f32 %v486, %v2741
        %v2833 = vadd.f32 %v487, %v2744
        %v2834 = vadd.f32 %v488, %v2746
        %v2835 = vadd.f32 %v489, %v2749
        %v2836 = vadd.f32 %v490, %v2751
        %v2837 = vadd.f32 %v491, %v2754
        %v2838 = vadd.f32 %v492, %v2756
        %v2839 = vadd.f32 %v493, %v2759
        %v2840 = vadd.f32 %v494, %v2761
        %v2841 = vadd.f32 %v495, %v2764
        %v2842 = vadd.f32 %v496, %v2766
        %v2843 = vadd.f32 %v497, %v2769
        %v2844 = vadd.f32 %v498, %v2771
        %v2845 = vadd.f32 %v499, %v2774
        %v2846 = vadd.f32 %v500, %v2776
        %v2847 = vadd.f32 %v501, %v2779
        %v2848 = vadd.f32 %v502, %v2781
        %v2849 = vadd.f32 %v503, %v2784
        %v2850 = vadd.f32 %v504, %v2786
        %v2851 = vadd.f32 %v505, %v2789
        %v2852 = vadd.f32 %v506, %v2791
        %v2853 = vadd.f32 %v507, %v2794
        %v2854 = vadd.f32 %v508, %v2796
        %v2855 = vadd.f32 %v509, %v2799
        %v2856 = vadd.f32 %v510, %v2801
        %v2857 = vadd.f32 %v511, %v2804
        %v2858 = vadd.f32 %v512, %v2806
        %v2859 = vadd.f32 %v513, %v2809
        %v2860 = vadd.f32 %v514, %v2811
        %v2861 = vadd.f32 %v515, %v2814
        %v2862 = vadd.f32 %v516, %v2816
        %v2863 = vadd.f32 %v517, %v2819
        %v2864 = vadd.f32 %v518, %v2821
        %vm2865 = vcmask 261120
        %2866 = vst.msk [vmem:[#allocation2] sm:$0xff] %vm2865, %v2823
        %2867 = vst.msk [vmem:[#allocation2 + $0x8] sm:$0xff] %vm2865, %v2824
        %2868 = vst.msk [vmem:[#allocation2 + $0x10] sm:$0xff] %vm2865, %v2825
        %2869 = vst.msk [vmem:[#allocation2 + $0x18] sm:$0xff] %vm2865, %v2826
        %2870 = vst.msk [vmem:[#allocation2 + $0x20] sm:$0xff] %vm2865, %v2827
        %2871 = vst.msk [vmem:[#allocation2 + $0x28] sm:$0xff] %vm2865, %v2828
        %2872 = vst.msk [vmem:[#allocation2 + $0x30] sm:$0xff] %vm2865, %v2829
        %2873 = vst.msk [vmem:[#allocation2 + $0x38] sm:$0xff] %vm2865, %v2830
        %2874 = vst.msk [vmem:[#allocation2 + $0x40] sm:$0xff] %vm2865, %v2831
        %2875 = vst.msk [vmem:[#allocation2 + $0x48] sm:$0xff] %vm2865, %v2832
        %2876 = vst.msk [vmem:[#allocation2 + $0x50] sm:$0xff] %vm2865, %v2833
        %2877 = vst.msk [vmem:[#allocation2 + $0x58] sm:$0xff] %vm2865, %v2834
        %2878 = vst.msk [vmem:[#allocation2 + $0x60] sm:$0xff] %vm2865, %v2835
        %2879 = vst.msk [vmem:[#allocation2 + $0x68] sm:$0xff] %vm2865, %v2836
        %2880 = vst.msk [vmem:[#allocation2 + $0x70] sm:$0xff] %vm2865, %v2837
        %2881 = vst.msk [vmem:[#allocation2 + $0x78] sm:$0xff] %vm2865, %v2838
        %2882 = vst.msk [vmem:[#allocation2 + $0x80] sm:$0xff] %vm2865, %v2839
        %2883 = vst.msk [vmem:[#allocation2 + $0x88] sm:$0xff] %vm2865, %v2840
        %2884 = vst.msk [vmem:[#allocation2 + $0x90] sm:$0xff] %vm2865, %v2841
        %2885 = vst.msk [vmem:[#allocation2 + $0x98] sm:$0xff] %vm2865, %v2842
        %2886 = vst.msk [vmem:[#allocation2 + $0xa0] sm:$0xff] %vm2865, %v2843
        %2887 = vst.msk [vmem:[#allocation2 + $0xa8] sm:$0xff] %vm2865, %v2844
        %2888 = vst.msk [vmem:[#allocation2 + $0xb0] sm:$0xff] %vm2865, %v2845
        %2889 = vst.msk [vmem:[#allocation2 + $0xb8] sm:$0xff] %vm2865, %v2846
        %2890 = vst.msk [vmem:[#allocation2 + $0xc0] sm:$0xff] %vm2865, %v2847
        %2891 = vst.msk [vmem:[#allocation2 + $0xc8] sm:$0xff] %vm2865, %v2848
        %2892 = vst.msk [vmem:[#allocation2 + $0xd0] sm:$0xff] %vm2865, %v2849
        %2893 = vst.msk [vmem:[#allocation2 + $0xd8] sm:$0xff] %vm2865, %v2850
        %2894 = vst.msk [vmem:[#allocation2 + $0xe0] sm:$0xff] %vm2865, %v2851
        %2895 = vst.msk [vmem:[#allocation2 + $0xe8] sm:$0xff] %vm2865, %v2852
        %2896 = vst.msk [vmem:[#allocation2 + $0xf0] sm:$0xff] %vm2865, %v2853
        %2897 = vst.msk [vmem:[#allocation2 + $0xf8] sm:$0xff] %vm2865, %v2854
        %2898 = vst.msk [vmem:[#allocation2 + $0x100] sm:$0xff] %vm2865, %v2855
        %2899 = vst.msk [vmem:[#allocation2 + $0x108] sm:$0xff] %vm2865, %v2856
        %2900 = vst.msk [vmem:[#allocation2 + $0x110] sm:$0xff] %vm2865, %v2857
        %2901 = vst.msk [vmem:[#allocation2 + $0x118] sm:$0xff] %vm2865, %v2858
        %2902 = vst.msk [vmem:[#allocation2 + $0x120] sm:$0xff] %vm2865, %v2859
        %2903 = vst.msk [vmem:[#allocation2 + $0x128] sm:$0xff] %vm2865, %v2860
        %2904 = vst.msk [vmem:[#allocation2 + $0x130] sm:$0xff] %vm2865, %v2861
        %2905 = vst.msk [vmem:[#allocation2 + $0x138] sm:$0xff] %vm2865, %v2862
        %2906 = vst.msk [vmem:[#allocation2 + $0x140] sm:$0xff] %vm2865, %v2863
        %2907 = vst.msk [vmem:[#allocation2 + $0x148] sm:$0xff] %vm2865, %v2864
        // Predicated region
        $region57: #{tpu_custom_call.1} parent=39 // pred_check
          %p2908 = pneg %p297
        $region58: #{tpu_custom_call.1} parent=39 // pred_check_branch
          %2910 = sbr.rel (%p2908) target = $region60
        $region59: #{tpu_custom_call.1} parent=39 // pred_region
          %v2911 = vld [vmem:[#allocation2] sm:$0xff]
          %v2912 = vld [vmem:[#allocation2 + $0x8] sm:$0xff]
          %v2913 = vld [vmem:[#allocation2 + $0x10] sm:$0xff]
          %v2914 = vld [vmem:[#allocation2 + $0x18] sm:$0xff]
          %v2915 = vld [vmem:[#allocation2 + $0x20] sm:$0xff]
          %v2916 = vld [vmem:[#allocation2 + $0x28] sm:$0xff]
          %v2917 = vld [vmem:[#allocation2 + $0x30] sm:$0xff]
          %v2918 = vld [vmem:[#allocation2 + $0x38] sm:$0xff]
          %v2919 = vld [vmem:[#allocation2 + $0x40] sm:$0xff]
          %v2920 = vld [vmem:[#allocation2 + $0x48] sm:$0xff]
          %v2921 = vld [vmem:[#allocation2 + $0x50] sm:$0xff]
          %v2922 = vld [vmem:[#allocation2 + $0x58] sm:$0xff]
          %v2923 = vld [vmem:[#allocation2 + $0x60] sm:$0xff]
          %v2924 = vld [vmem:[#allocation2 + $0x68] sm:$0xff]
          %v2925 = vld [vmem:[#allocation2 + $0x70] sm:$0xff]
          %v2926 = vld [vmem:[#allocation2 + $0x78] sm:$0xff]
          %v2927 = vld [vmem:[#allocation2 + $0x80] sm:$0xff]
          %v2928 = vld [vmem:[#allocation2 + $0x88] sm:$0xff]
          %v2929 = vld [vmem:[#allocation2 + $0x90] sm:$0xff]
          %v2930 = vld [vmem:[#allocation2 + $0x98] sm:$0xff]
          %v2931 = vld [vmem:[#allocation2 + $0xa0] sm:$0xff]
          %v2932 = vld [vmem:[#allocation2 + $0xa8] sm:$0xff]
          %v2933 = vld [vmem:[#allocation2 + $0xb0] sm:$0xff]
          %v2934 = vld [vmem:[#allocation2 + $0xb8] sm:$0xff]
          %v2935 = vld [vmem:[#allocation2 + $0xc0] sm:$0xff]
          %v2936 = vld [vmem:[#allocation2 + $0xc8] sm:$0xff]
          %v2937 = vld [vmem:[#allocation2 + $0xd0] sm:$0xff]
          %v2938 = vld [vmem:[#allocation2 + $0xd8] sm:$0xff]
          %v2939 = vld [vmem:[#allocation2 + $0xe0] sm:$0xff]
          %v2940 = vld [vmem:[#allocation2 + $0xe8] sm:$0xff]
          %v2941 = vld [vmem:[#allocation2 + $0xf0] sm:$0xff]
          %v2942 = vld [vmem:[#allocation2 + $0xf8] sm:$0xff]
          %v2943 = vld [vmem:[#allocation2 + $0x100] sm:$0xff]
          %v2944 = vld [vmem:[#allocation2 + $0x108] sm:$0xff]
          %v2945 = vld [vmem:[#allocation2 + $0x110] sm:$0xff]
          %v2946 = vld [vmem:[#allocation2 + $0x118] sm:$0xff]
          %v2947 = vld [vmem:[#allocation2 + $0x120] sm:$0xff]
          %v2948 = vld [vmem:[#allocation2 + $0x128] sm:$0xff]
          %v2949 = vld [vmem:[#allocation2 + $0x130] sm:$0xff]
          %v2950 = vld [vmem:[#allocation2 + $0x138] sm:$0xff]
          %v2951 = vld [vmem:[#allocation2 + $0x140] sm:$0xff]
          %v2952 = vld [vmem:[#allocation2 + $0x148] sm:$0xff]
          %v2953 = vld [vmem:[#allocation6] sm:$0x1]
          %v2955 = vperm.slane %v2953, 0
          %v2957 = vadd.f32 %v2911, %v2955
          %v2958 = vadd.f32 %v2912, %v2955
          %v2959 = vadd.f32 %v2913, %v2955
          %v2960 = vadd.f32 %v2914, %v2955
          %v2961 = vadd.f32 %v2915, %v2955
          %v2962 = vadd.f32 %v2916, %v2955
          %v2963 = vadd.f32 %v2917, %v2955
          %v2964 = vadd.f32 %v2918, %v2955
          %v2965 = vadd.f32 %v2919, %v2955
          %v2966 = vadd.f32 %v2920, %v2955
          %v2967 = vadd.f32 %v2921, %v2955
          %v2968 = vadd.f32 %v2922, %v2955
          %v2969 = vadd.f32 %v2923, %v2955
          %v2970 = vadd.f32 %v2924, %v2955
          %v2971 = vadd.f32 %v2925, %v2955
          %v2972 = vadd.f32 %v2926, %v2955
          %v2973 = vadd.f32 %v2927, %v2955
          %v2974 = vadd.f32 %v2928, %v2955
          %v2975 = vadd.f32 %v2929, %v2955
          %v2976 = vadd.f32 %v2930, %v2955
          %v2977 = vadd.f32 %v2931, %v2955
          %v2978 = vadd.f32 %v2932, %v2955
          %v2979 = vadd.f32 %v2933, %v2955
          %v2980 = vadd.f32 %v2934, %v2955
          %v2981 = vadd.f32 %v2935, %v2955
          %v2982 = vadd.f32 %v2936, %v2955
          %v2983 = vadd.f32 %v2937, %v2955
          %v2984 = vadd.f32 %v2938, %v2955
          %v2985 = vadd.f32 %v2939, %v2955
          %v2986 = vadd.f32 %v2940, %v2955
          %v2987 = vadd.f32 %v2941, %v2955
          %v2988 = vadd.f32 %v2942, %v2955
          %v2989 = vadd.f32 %v2943, %v2955
          %v2990 = vadd.f32 %v2944, %v2955
          %v2991 = vadd.f32 %v2945, %v2955
          %v2992 = vadd.f32 %v2946, %v2955
          %v2993 = vadd.f32 %v2947, %v2955
          %v2994 = vadd.f32 %v2948, %v2955
          %v2995 = vadd.f32 %v2949, %v2955
          %v2996 = vadd.f32 %v2950, %v2955
          %v2997 = vadd.f32 %v2951, %v2955
          %v2998 = vadd.f32 %v2952, %v2955
          %v2999 = vtanh.pop %v2957
          %v3000 = vtanh.pop %v2958
          %v3001 = vtanh.pop %v2959
          %v3002 = vtanh.pop %v2960
          %v3003 = vtanh.pop %v2961
          %v3004 = vtanh.pop %v2962
          %v3005 = vtanh.pop %v2963
          %v3006 = vtanh.pop %v2964
          %v3007 = vtanh.pop %v2965
          %v3008 = vtanh.pop %v2966
          %v3009 = vtanh.pop %v2967
          %v3010 = vtanh.pop %v2968
          %v3011 = vtanh.pop %v2969
          %v3012 = vtanh.pop %v2970
          %v3013 = vtanh.pop %v2971
          %v3014 = vtanh.pop %v2972
          %v3015 = vtanh.pop %v2973
          %v3016 = vtanh.pop %v2974
          %v3017 = vtanh.pop %v2975
          %v3018 = vtanh.pop %v2976
          %v3019 = vtanh.pop %v2977
          %v3020 = vtanh.pop %v2978
          %v3021 = vtanh.pop %v2979
          %v3022 = vtanh.pop %v2980
          %v3023 = vtanh.pop %v2981
          %v3024 = vtanh.pop %v2982
          %v3025 = vtanh.pop %v2983
          %v3026 = vtanh.pop %v2984
          %v3027 = vtanh.pop %v2985
          %v3028 = vtanh.pop %v2986
          %v3029 = vtanh.pop %v2987
          %v3030 = vtanh.pop %v2988
          %v3031 = vtanh.pop %v2989
          %v3032 = vtanh.pop %v2990
          %v3033 = vtanh.pop %v2991
          %v3034 = vtanh.pop %v2992
          %v3035 = vtanh.pop %v2993
          %v3036 = vtanh.pop %v2994
          %v3037 = vtanh.pop %v2995
          %v3038 = vtanh.pop %v2996
          %v3039 = vtanh.pop %v2997
          %v3040 = vtanh.pop %v2998
          %v3041 = vld [vmem:[#allocation8] sm:$0x1]
          %v3043 = vperm.slane %v3041, 0
          %v3045 = vmul.f32 %v2999, %v3043
          %v3046 = vmul.f32 %v3000, %v3043
          %v3047 = vmul.f32 %v3001, %v3043
          %v3048 = vmul.f32 %v3002, %v3043
          %v3049 = vmul.f32 %v3003, %v3043
          %v3050 = vmul.f32 %v3004, %v3043
          %v3051 = vmul.f32 %v3005, %v3043
          %v3052 = vmul.f32 %v3006, %v3043
          %v3053 = vmul.f32 %v3007, %v3043
          %v3054 = vmul.f32 %v3008, %v3043
          %v3055 = vmul.f32 %v3009, %v3043
          %v3056 = vmul.f32 %v3010, %v3043
          %v3057 = vmul.f32 %v3011, %v3043
          %v3058 = vmul.f32 %v3012, %v3043
          %v3059 = vmul.f32 %v3013, %v3043
          %v3060 = vmul.f32 %v3014, %v3043
          %v3061 = vmul.f32 %v3015, %v3043
          %v3062 = vmul.f32 %v3016, %v3043
          %v3063 = vmul.f32 %v3017, %v3043
          %v3064 = vmul.f32 %v3018, %v3043
          %v3065 = vmul.f32 %v3019, %v3043
          %v3066 = vmul.f32 %v3020, %v3043
          %v3067 = vmul.f32 %v3021, %v3043
          %v3068 = vmul.f32 %v3022, %v3043
          %v3069 = vmul.f32 %v3023, %v3043
          %v3070 = vmul.f32 %v3024, %v3043
          %v3071 = vmul.f32 %v3025, %v3043
          %v3072 = vmul.f32 %v3026, %v3043
          %v3073 = vmul.f32 %v3027, %v3043
          %v3074 = vmul.f32 %v3028, %v3043
          %v3075 = vmul.f32 %v3029, %v3043
          %v3076 = vmul.f32 %v3030, %v3043
          %v3077 = vmul.f32 %v3031, %v3043
          %v3078 = vmul.f32 %v3032, %v3043
          %v3079 = vmul.f32 %v3033, %v3043
          %v3080 = vmul.f32 %v3034, %v3043
          %v3081 = vmul.f32 %v3035, %v3043
          %v3082 = vmul.f32 %v3036, %v3043
          %v3083 = vmul.f32 %v3037, %v3043
          %v3084 = vmul.f32 %v3038, %v3043
          %v3085 = vmul.f32 %v3039, %v3043
          %v3086 = vmul.f32 %v3040, %v3043
          %v3087 = vsel %vm2865, %v3045, 0.0
          %3088 = vadd.xlane.f32.xlu0 %v3087
          %v3089 = vpop.xlane.xlu0 %3088
          %v3090 = vsel %vm2865, %v3046, 0.0
          %3091 = vadd.xlane.f32.xlu0 %v3090
          %v3092 = vpop.xlane.xlu0 %3091
          %v3093 = vsel %vm2865, %v3047, 0.0
          %3094 = vadd.xlane.f32.xlu0 %v3093
          %v3095 = vpop.xlane.xlu0 %3094
          %v3096 = vsel %vm2865, %v3048, 0.0
          %3097 = vadd.xlane.f32.xlu0 %v3096
          %v3098 = vpop.xlane.xlu0 %3097
          %v3099 = vsel %vm2865, %v3049, 0.0
          %3100 = vadd.xlane.f32.xlu0 %v3099
          %v3101 = vpop.xlane.xlu0 %3100
          %v3102 = vsel %vm2865, %v3050, 0.0
          %3103 = vadd.xlane.f32.xlu0 %v3102
          %v3104 = vpop.xlane.xlu0 %3103
          %v3105 = vsel %vm2865, %v3051, 0.0
          %3106 = vadd.xlane.f32.xlu0 %v3105
          %v3107 = vpop.xlane.xlu0 %3106
          %v3108 = vsel %vm2865, %v3052, 0.0
          %3109 = vadd.xlane.f32.xlu0 %v3108
          %v3110 = vpop.xlane.xlu0 %3109
          %v3111 = vsel %vm2865, %v3053, 0.0
          %3112 = vadd.xlane.f32.xlu0 %v3111
          %v3113 = vpop.xlane.xlu0 %3112
          %v3114 = vsel %vm2865, %v3054, 0.0
          %3115 = vadd.xlane.f32.xlu0 %v3114
          %v3116 = vpop.xlane.xlu0 %3115
          %v3117 = vsel %vm2865, %v3055, 0.0
          %3118 = vadd.xlane.f32.xlu0 %v3117
          %v3119 = vpop.xlane.xlu0 %3118
          %v3120 = vsel %vm2865, %v3056, 0.0
          %3121 = vadd.xlane.f32.xlu0 %v3120
          %v3122 = vpop.xlane.xlu0 %3121
          %v3123 = vsel %vm2865, %v3057, 0.0
          %3124 = vadd.xlane.f32.xlu0 %v3123
          %v3125 = vpop.xlane.xlu0 %3124
          %v3126 = vsel %vm2865, %v3058, 0.0
          %3127 = vadd.xlane.f32.xlu0 %v3126
          %v3128 = vpop.xlane.xlu0 %3127
          %v3129 = vsel %vm2865, %v3059, 0.0
          %3130 = vadd.xlane.f32.xlu0 %v3129
          %v3131 = vpop.xlane.xlu0 %3130
          %v3132 = vsel %vm2865, %v3060, 0.0
          %3133 = vadd.xlane.f32.xlu0 %v3132
          %v3134 = vpop.xlane.xlu0 %3133
          %v3135 = vsel %vm2865, %v3061, 0.0
          %3136 = vadd.xlane.f32.xlu0 %v3135
          %v3137 = vpop.xlane.xlu0 %3136
          %v3138 = vsel %vm2865, %v3062, 0.0
          %3139 = vadd.xlane.f32.xlu0 %v3138
          %v3140 = vpop.xlane.xlu0 %3139
          %v3141 = vsel %vm2865, %v3063, 0.0
          %3142 = vadd.xlane.f32.xlu0 %v3141
          %v3143 = vpop.xlane.xlu0 %3142
          %v3144 = vsel %vm2865, %v3064, 0.0
          %3145 = vadd.xlane.f32.xlu0 %v3144
          %v3146 = vpop.xlane.xlu0 %3145
          %v3147 = vsel %vm2865, %v3065, 0.0
          %3148 = vadd.xlane.f32.xlu0 %v3147
          %v3149 = vpop.xlane.xlu0 %3148
          %v3150 = vsel %vm2865, %v3066, 0.0
          %3151 = vadd.xlane.f32.xlu0 %v3150
          %v3152 = vpop.xlane.xlu0 %3151
          %v3153 = vsel %vm2865, %v3067, 0.0
          %3154 = vadd.xlane.f32.xlu0 %v3153
          %v3155 = vpop.xlane.xlu0 %3154
          %v3156 = vsel %vm2865, %v3068, 0.0
          %3157 = vadd.xlane.f32.xlu0 %v3156
          %v3158 = vpop.xlane.xlu0 %3157
          %v3159 = vsel %vm2865, %v3069, 0.0
          %3160 = vadd.xlane.f32.xlu0 %v3159
          %v3161 = vpop.xlane.xlu0 %3160
          %v3162 = vsel %vm2865, %v3070, 0.0
          %3163 = vadd.xlane.f32.xlu0 %v3162
          %v3164 = vpop.xlane.xlu0 %3163
          %v3165 = vsel %vm2865, %v3071, 0.0
          %3166 = vadd.xlane.f32.xlu0 %v3165
          %v3167 = vpop.xlane.xlu0 %3166
          %v3168 = vsel %vm2865, %v3072, 0.0
          %3169 = vadd.xlane.f32.xlu0 %v3168
          %v3170 = vpop.xlane.xlu0 %3169
          %v3171 = vsel %vm2865, %v3073, 0.0
          %3172 = vadd.xlane.f32.xlu0 %v3171
          %v3173 = vpop.xlane.xlu0 %3172
          %v3174 = vsel %vm2865, %v3074, 0.0
          %3175 = vadd.xlane.f32.xlu0 %v3174
          %v3176 = vpop.xlane.xlu0 %3175
          %v3177 = vsel %vm2865, %v3075, 0.0
          %3178 = vadd.xlane.f32.xlu0 %v3177
          %v3179 = vpop.xlane.xlu0 %3178
          %v3180 = vsel %vm2865, %v3076, 0.0
          %3181 = vadd.xlane.f32.xlu0 %v3180
          %v3182 = vpop.xlane.xlu0 %3181
          %v3183 = vsel %vm2865, %v3077, 0.0
          %3184 = vadd.xlane.f32.xlu0 %v3183
          %v3185 = vpop.xlane.xlu0 %3184
          %v3186 = vsel %vm2865, %v3078, 0.0
          %3187 = vadd.xlane.f32.xlu0 %v3186
          %v3188 = vpop.xlane.xlu0 %3187
          %v3189 = vsel %vm2865, %v3079, 0.0
          %3190 = vadd.xlane.f32.xlu0 %v3189
          %v3191 = vpop.xlane.xlu0 %3190
          %v3192 = vsel %vm2865, %v3080, 0.0
          %3193 = vadd.xlane.f32.xlu0 %v3192
          %v3194 = vpop.xlane.xlu0 %3193
          %v3195 = vsel %vm2865, %v3081, 0.0
          %3196 = vadd.xlane.f32.xlu0 %v3195
          %v3197 = vpop.xlane.xlu0 %3196
          %v3198 = vsel %vm2865, %v3082, 0.0
          %3199 = vadd.xlane.f32.xlu0 %v3198
          %v3200 = vpop.xlane.xlu0 %3199
          %v3201 = vsel %vm2865, %v3083, 0.0
          %3202 = vadd.xlane.f32.xlu0 %v3201
          %v3203 = vpop.xlane.xlu0 %3202
          %v3204 = vsel %vm2865, %v3084, 0.0
          %3205 = vadd.xlane.f32.xlu0 %v3204
          %v3206 = vpop.xlane.xlu0 %3205
          %v3207 = vsel %vm2865, %v3085, 0.0
          %3208 = vadd.xlane.f32.xlu0 %v3207
          %v3209 = vpop.xlane.xlu0 %3208
          %v3210 = vsel %vm2865, %v3086, 0.0
          %3211 = vadd.xlane.f32.xlu0 %v3210
          %v3212 = vpop.xlane.xlu0 %3211
          %s3213 = sld [smem:[#allocation3]]
          %v3214 = vstv %s3213
          %v3215 = vadd.f32 %v3089, %v3214
          %v3216 = vadd.f32 %v3092, %v3214
          %v3217 = vadd.f32 %v3095, %v3214
          %v3218 = vadd.f32 %v3098, %v3214
          %v3219 = vadd.f32 %v3101, %v3214
          %v3220 = vadd.f32 %v3104, %v3214
          %v3221 = vadd.f32 %v3107, %v3214
          %v3222 = vadd.f32 %v3110, %v3214
          %v3223 = vadd.f32 %v3113, %v3214
          %v3224 = vadd.f32 %v3116, %v3214
          %v3225 = vadd.f32 %v3119, %v3214
          %v3226 = vadd.f32 %v3122, %v3214
          %v3227 = vadd.f32 %v3125, %v3214
          %v3228 = vadd.f32 %v3128, %v3214
          %v3229 = vadd.f32 %v3131, %v3214
          %v3230 = vadd.f32 %v3134, %v3214
          %v3231 = vadd.f32 %v3137, %v3214
          %v3232 = vadd.f32 %v3140, %v3214
          %v3233 = vadd.f32 %v3143, %v3214
          %v3234 = vadd.f32 %v3146, %v3214
          %v3235 = vadd.f32 %v3149, %v3214
          %v3236 = vadd.f32 %v3152, %v3214
          %v3237 = vadd.f32 %v3155, %v3214
          %v3238 = vadd.f32 %v3158, %v3214
          %v3239 = vadd.f32 %v3161, %v3214
          %v3240 = vadd.f32 %v3164, %v3214
          %v3241 = vadd.f32 %v3167, %v3214
          %v3242 = vadd.f32 %v3170, %v3214
          %v3243 = vadd.f32 %v3173, %v3214
          %v3244 = vadd.f32 %v3176, %v3214
          %v3245 = vadd.f32 %v3179, %v3214
          %v3246 = vadd.f32 %v3182, %v3214
          %v3247 = vadd.f32 %v3185, %v3214
          %v3248 = vadd.f32 %v3188, %v3214
          %v3249 = vadd.f32 %v3191, %v3214
          %v3250 = vadd.f32 %v3194, %v3214
          %v3251 = vadd.f32 %v3197, %v3214
          %v3252 = vadd.f32 %v3200, %v3214
          %v3253 = vadd.f32 %v3203, %v3214
          %v3254 = vadd.f32 %v3206, %v3214
          %v3255 = vadd.f32 %v3209, %v3214
          %v3256 = vadd.f32 %v3212, %v3214
          %v3257 = vxor.u32 %v3215, 2147483648
          %v3258 = vxor.u32 %v3216, 2147483648
          %v3259 = vxor.u32 %v3217, 2147483648
          %v3260 = vxor.u32 %v3218, 2147483648
          %v3261 = vxor.u32 %v3219, 2147483648
          %v3262 = vxor.u32 %v3220, 2147483648
          %v3263 = vxor.u32 %v3221, 2147483648
          %v3264 = vxor.u32 %v3222, 2147483648
          %v3265 = vxor.u32 %v3223, 2147483648
          %v3266 = vxor.u32 %v3224, 2147483648
          %v3267 = vxor.u32 %v3225, 2147483648
          %v3268 = vxor.u32 %v3226, 2147483648
          %v3269 = vxor.u32 %v3227, 2147483648
          %v3270 = vxor.u32 %v3228, 2147483648
          %v3271 = vxor.u32 %v3229, 2147483648
          %v3272 = vxor.u32 %v3230, 2147483648
          %v3273 = vxor.u32 %v3231, 2147483648
          %v3274 = vxor.u32 %v3232, 2147483648
          %v3275 = vxor.u32 %v3233, 2147483648
          %v3276 = vxor.u32 %v3234, 2147483648
          %v3277 = vxor.u32 %v3235, 2147483648
          %v3278 = vxor.u32 %v3236, 2147483648
          %v3279 = vxor.u32 %v3237, 2147483648
          %v3280 = vxor.u32 %v3238, 2147483648
          %v3281 = vxor.u32 %v3239, 2147483648
          %v3282 = vxor.u32 %v3240, 2147483648
          %v3283 = vxor.u32 %v3241, 2147483648
          %v3284 = vxor.u32 %v3242, 2147483648
          %v3285 = vxor.u32 %v3243, 2147483648
          %v3286 = vxor.u32 %v3244, 2147483648
          %v3287 = vxor.u32 %v3245, 2147483648
          %v3288 = vxor.u32 %v3246, 2147483648
          %v3289 = vxor.u32 %v3247, 2147483648
          %v3290 = vxor.u32 %v3248, 2147483648
          %v3291 = vxor.u32 %v3249, 2147483648
          %v3292 = vxor.u32 %v3250, 2147483648
          %v3293 = vxor.u32 %v3251, 2147483648
          %v3294 = vxor.u32 %v3252, 2147483648
          %v3295 = vxor.u32 %v3253, 2147483648
          %v3296 = vxor.u32 %v3254, 2147483648
          %v3297 = vxor.u32 %v3255, 2147483648
          %v3298 = vxor.u32 %v3256, 2147483648
          %v3299 = vmul.f32 %v3257, 1.442695
          %v3300 = vpow.pop %v3299
          %v3301 = vmul.f32 %v3258, 1.442695
          %v3302 = vpow.pop %v3301
          %v3303 = vmul.f32 %v3259, 1.442695
          %v3304 = vpow.pop %v3303
          %v3305 = vmul.f32 %v3260, 1.442695
          %v3306 = vpow.pop %v3305
          %v3307 = vmul.f32 %v3261, 1.442695
          %v3308 = vpow.pop %v3307
          %v3309 = vmul.f32 %v3262, 1.442695
          %v3310 = vpow.pop %v3309
          %v3311 = vmul.f32 %v3263, 1.442695
          %v3312 = vpow.pop %v3311
          %v3313 = vmul.f32 %v3264, 1.442695
          %v3314 = vpow.pop %v3313
          %v3315 = vmul.f32 %v3265, 1.442695
          %v3316 = vpow.pop %v3315
          %v3317 = vmul.f32 %v3266, 1.442695
          %v3318 = vpow.pop %v3317
          %v3319 = vmul.f32 %v3267, 1.442695
          %v3320 = vpow.pop %v3319
          %v3321 = vmul.f32 %v3268, 1.442695
          %v3322 = vpow.pop %v3321
          %v3323 = vmul.f32 %v3269, 1.442695
          %v3324 = vpow.pop %v3323
          %v3325 = vmul.f32 %v3270, 1.442695
          %v3326 = vpow.pop %v3325
          %v3327 = vmul.f32 %v3271, 1.442695
          %v3328 = vpow.pop %v3327
          %v3329 = vmul.f32 %v3272, 1.442695
          %v3330 = vpow.pop %v3329
          %v3331 = vmul.f32 %v3273, 1.442695
          %v3332 = vpow.pop %v3331
          %v3333 = vmul.f32 %v3274, 1.442695
          %v3334 = vpow.pop %v3333
          %v3335 = vmul.f32 %v3275, 1.442695
          %v3336 = vpow.pop %v3335
          %v3337 = vmul.f32 %v3276, 1.442695
          %v3338 = vpow.pop %v3337
          %v3339 = vmul.f32 %v3277, 1.442695
          %v3340 = vpow.pop %v3339
          %v3341 = vmul.f32 %v3278, 1.442695
          %v3342 = vpow.pop %v3341
          %v3343 = vmul.f32 %v3279, 1.442695
          %v3344 = vpow.pop %v3343
          %v3345 = vmul.f32 %v3280, 1.442695
          %v3346 = vpow.pop %v3345
          %v3347 = vmul.f32 %v3281, 1.442695
          %v3348 = vpow.pop %v3347
          %v3349 = vmul.f32 %v3282, 1.442695
          %v3350 = vpow.pop %v3349
          %v3351 = vmul.f32 %v3283, 1.442695
          %v3352 = vpow.pop %v3351
          %v3353 = vmul.f32 %v3284, 1.442695
          %v3354 = vpow.pop %v3353
          %v3355 = vmul.f32 %v3285, 1.442695
          %v3356 = vpow.pop %v3355
          %v3357 = vmul.f32 %v3286, 1.442695
          %v3358 = vpow.pop %v3357
          %v3359 = vmul.f32 %v3287, 1.442695
          %v3360 = vpow.pop %v3359
          %v3361 = vmul.f32 %v3288, 1.442695
          %v3362 = vpow.pop %v3361
          %v3363 = vmul.f32 %v3289, 1.442695
          %v3364 = vpow.pop %v3363
          %v3365 = vmul.f32 %v3290, 1.442695
          %v3366 = vpow.pop %v3365
          %v3367 = vmul.f32 %v3291, 1.442695
          %v3368 = vpow.pop %v3367
          %v3369 = vmul.f32 %v3292, 1.442695
          %v3370 = vpow.pop %v3369
          %v3371 = vmul.f32 %v3293, 1.442695
          %v3372 = vpow.pop %v3371
          %v3373 = vmul.f32 %v3294, 1.442695
          %v3374 = vpow.pop %v3373
          %v3375 = vmul.f32 %v3295, 1.442695
          %v3376 = vpow.pop %v3375
          %v3377 = vmul.f32 %v3296, 1.442695
          %v3378 = vpow.pop %v3377
          %v3379 = vmul.f32 %v3297, 1.442695
          %v3380 = vpow.pop %v3379
          %v3381 = vmul.f32 %v3298, 1.442695
          %v3382 = vpow.pop %v3381
          %v3383 = vadd.f32 %v3300, 1.0
          %v3384 = vadd.f32 %v3302, 1.0
          %v3385 = vadd.f32 %v3304, 1.0
          %v3386 = vadd.f32 %v3306, 1.0
          %v3387 = vadd.f32 %v3308, 1.0
          %v3388 = vadd.f32 %v3310, 1.0
          %v3389 = vadd.f32 %v3312, 1.0
          %v3390 = vadd.f32 %v3314, 1.0
          %v3391 = vadd.f32 %v3316, 1.0
          %v3392 = vadd.f32 %v3318, 1.0
          %v3393 = vadd.f32 %v3320, 1.0
          %v3394 = vadd.f32 %v3322, 1.0
          %v3395 = vadd.f32 %v3324, 1.0
          %v3396 = vadd.f32 %v3326, 1.0
          %v3397 = vadd.f32 %v3328, 1.0
          %v3398 = vadd.f32 %v3330, 1.0
          %v3399 = vadd.f32 %v3332, 1.0
          %v3400 = vadd.f32 %v3334, 1.0
          %v3401 = vadd.f32 %v3336, 1.0
          %v3402 = vadd.f32 %v3338, 1.0
          %v3403 = vadd.f32 %v3340, 1.0
          %v3404 = vadd.f32 %v3342, 1.0
          %v3405 = vadd.f32 %v3344, 1.0
          %v3406 = vadd.f32 %v3346, 1.0
          %v3407 = vadd.f32 %v3348, 1.0
          %v3408 = vadd.f32 %v3350, 1.0
          %v3409 = vadd.f32 %v3352, 1.0
          %v3410 = vadd.f32 %v3354, 1.0
          %v3411 = vadd.f32 %v3356, 1.0
          %v3412 = vadd.f32 %v3358, 1.0
          %v3413 = vadd.f32 %v3360, 1.0
          %v3414 = vadd.f32 %v3362, 1.0
          %v3415 = vadd.f32 %v3364, 1.0
          %v3416 = vadd.f32 %v3366, 1.0
          %v3417 = vadd.f32 %v3368, 1.0
          %v3418 = vadd.f32 %v3370, 1.0
          %v3419 = vadd.f32 %v3372, 1.0
          %v3420 = vadd.f32 %v3374, 1.0
          %v3421 = vadd.f32 %v3376, 1.0
          %v3422 = vadd.f32 %v3378, 1.0
          %v3423 = vadd.f32 %v3380, 1.0
          %v3424 = vadd.f32 %v3382, 1.0
          %v3425 = vrcp.pop %v3383
          %v3426 = vmul.f32 %v3383, %v3425
          %v3427 = vsub.f32 1.0, %v3426
          %v3428 = vmul.f32 %v3425, %v3427
          %v3429 = vadd.f32 %v3425, %v3428
          %vm3430 = vweird.f32 %v3383
          %vm3431 = vweird.f32 %v3425
          %vm3432 = vmor %vm3430, %vm3431
          %v3433 = vsel %vm3432, %v3425, %v3429
          %v3434 = vand.u32 2147483647, %v3383
          %vm3435 = vcmp.eq.f32.partialorder %v3434, 8.507059e+37
          %v3436 = vand.u32 %v3383, 2147483648
          %v3437 = vor.u32 1.1754944e-38, %v3436
          %v3438 = vsel %vm3435, %v3437, %v3433
          %v3439 = vmul.f32 1.0, %v3438
          %v3440 = vrcp.pop %v3384
          %v3441 = vmul.f32 %v3384, %v3440
          %v3442 = vsub.f32 1.0, %v3441
          %v3443 = vmul.f32 %v3440, %v3442
          %v3444 = vadd.f32 %v3440, %v3443
          %vm3445 = vweird.f32 %v3384
          %vm3446 = vweird.f32 %v3440
          %vm3447 = vmor %vm3445, %vm3446
          %v3448 = vsel %vm3447, %v3440, %v3444
          %v3449 = vand.u32 2147483647, %v3384
          %vm3450 = vcmp.eq.f32.partialorder %v3449, 8.507059e+37
          %v3451 = vand.u32 %v3384, 2147483648
          %v3452 = vor.u32 1.1754944e-38, %v3451
          %v3453 = vsel %vm3450, %v3452, %v3448
          %v3454 = vmul.f32 1.0, %v3453
          %v3455 = vrcp.pop %v3385
          %v3456 = vmul.f32 %v3385, %v3455
          %v3457 = vsub.f32 1.0, %v3456
          %v3458 = vmul.f32 %v3455, %v3457
          %v3459 = vadd.f32 %v3455, %v3458
          %vm3460 = vweird.f32 %v3385
          %vm3461 = vweird.f32 %v3455
          %vm3462 = vmor %vm3460, %vm3461
          %v3463 = vsel %vm3462, %v3455, %v3459
          %v3464 = vand.u32 2147483647, %v3385
          %vm3465 = vcmp.eq.f32.partialorder %v3464, 8.507059e+37
          %v3466 = vand.u32 %v3385, 2147483648
          %v3467 = vor.u32 1.1754944e-38, %v3466
          %v3468 = vsel %vm3465, %v3467, %v3463
          %v3469 = vmul.f32 1.0, %v3468
          %v3470 = vrcp.pop %v3386
          %v3471 = vmul.f32 %v3386, %v3470
          %v3472 = vsub.f32 1.0, %v3471
          %v3473 = vmul.f32 %v3470, %v3472
          %v3474 = vadd.f32 %v3470, %v3473
          %vm3475 = vweird.f32 %v3386
          %vm3476 = vweird.f32 %v3470
          %vm3477 = vmor %vm3475, %vm3476
          %v3478 = vsel %vm3477, %v3470, %v3474
          %v3479 = vand.u32 2147483647, %v3386
          %vm3480 = vcmp.eq.f32.partialorder %v3479, 8.507059e+37
          %v3481 = vand.u32 %v3386, 2147483648
          %v3482 = vor.u32 1.1754944e-38, %v3481
          %v3483 = vsel %vm3480, %v3482, %v3478
          %v3484 = vmul.f32 1.0, %v3483
          %v3485 = vrcp.pop %v3387
          %v3486 = vmul.f32 %v3387, %v3485
          %v3487 = vsub.f32 1.0, %v3486
          %v3488 = vmul.f32 %v3485, %v3487
          %v3489 = vadd.f32 %v3485, %v3488
          %vm3490 = vweird.f32 %v3387
          %vm3491 = vweird.f32 %v3485
          %vm3492 = vmor %vm3490, %vm3491
          %v3493 = vsel %vm3492, %v3485, %v3489
          %v3494 = vand.u32 2147483647, %v3387
          %vm3495 = vcmp.eq.f32.partialorder %v3494, 8.507059e+37
          %v3496 = vand.u32 %v3387, 2147483648
          %v3497 = vor.u32 1.1754944e-38, %v3496
          %v3498 = vsel %vm3495, %v3497, %v3493
          %v3499 = vmul.f32 1.0, %v3498
          %v3500 = vrcp.pop %v3388
          %v3501 = vmul.f32 %v3388, %v3500
          %v3502 = vsub.f32 1.0, %v3501
          %v3503 = vmul.f32 %v3500, %v3502
          %v3504 = vadd.f32 %v3500, %v3503
          %vm3505 = vweird.f32 %v3388
          %vm3506 = vweird.f32 %v3500
          %vm3507 = vmor %vm3505, %vm3506
          %v3508 = vsel %vm3507, %v3500, %v3504
          %v3509 = vand.u32 2147483647, %v3388
          %vm3510 = vcmp.eq.f32.partialorder %v3509, 8.507059e+37
          %v3511 = vand.u32 %v3388, 2147483648
          %v3512 = vor.u32 1.1754944e-38, %v3511
          %v3513 = vsel %vm3510, %v3512, %v3508
          %v3514 = vmul.f32 1.0, %v3513
          %v3515 = vrcp.pop %v3389
          %v3516 = vmul.f32 %v3389, %v3515
          %v3517 = vsub.f32 1.0, %v3516
          %v3518 = vmul.f32 %v3515, %v3517
          %v3519 = vadd.f32 %v3515, %v3518
          %vm3520 = vweird.f32 %v3389
          %vm3521 = vweird.f32 %v3515
          %vm3522 = vmor %vm3520, %vm3521
          %v3523 = vsel %vm3522, %v3515, %v3519
          %v3524 = vand.u32 2147483647, %v3389
          %vm3525 = vcmp.eq.f32.partialorder %v3524, 8.507059e+37
          %v3526 = vand.u32 %v3389, 2147483648
          %v3527 = vor.u32 1.1754944e-38, %v3526
          %v3528 = vsel %vm3525, %v3527, %v3523
          %v3529 = vmul.f32 1.0, %v3528
          %v3530 = vrcp.pop %v3390
          %v3531 = vmul.f32 %v3390, %v3530
          %v3532 = vsub.f32 1.0, %v3531
          %v3533 = vmul.f32 %v3530, %v3532
          %v3534 = vadd.f32 %v3530, %v3533
          %vm3535 = vweird.f32 %v3390
          %vm3536 = vweird.f32 %v3530
          %vm3537 = vmor %vm3535, %vm3536
          %v3538 = vsel %vm3537, %v3530, %v3534
          %v3539 = vand.u32 2147483647, %v3390
          %vm3540 = vcmp.eq.f32.partialorder %v3539, 8.507059e+37
          %v3541 = vand.u32 %v3390, 2147483648
          %v3542 = vor.u32 1.1754944e-38, %v3541
          %v3543 = vsel %vm3540, %v3542, %v3538
          %v3544 = vmul.f32 1.0, %v3543
          %v3545 = vrcp.pop %v3391
          %v3546 = vmul.f32 %v3391, %v3545
          %v3547 = vsub.f32 1.0, %v3546
          %v3548 = vmul.f32 %v3545, %v3547
          %v3549 = vadd.f32 %v3545, %v3548
          %vm3550 = vweird.f32 %v3391
          %vm3551 = vweird.f32 %v3545
          %vm3552 = vmor %vm3550, %vm3551
          %v3553 = vsel %vm3552, %v3545, %v3549
          %v3554 = vand.u32 2147483647, %v3391
          %vm3555 = vcmp.eq.f32.partialorder %v3554, 8.507059e+37
          %v3556 = vand.u32 %v3391, 2147483648
          %v3557 = vor.u32 1.1754944e-38, %v3556
          %v3558 = vsel %vm3555, %v3557, %v3553
          %v3559 = vmul.f32 1.0, %v3558
          %v3560 = vrcp.pop %v3392
          %v3561 = vmul.f32 %v3392, %v3560
          %v3562 = vsub.f32 1.0, %v3561
          %v3563 = vmul.f32 %v3560, %v3562
          %v3564 = vadd.f32 %v3560, %v3563
          %vm3565 = vweird.f32 %v3392
          %vm3566 = vweird.f32 %v3560
          %vm3567 = vmor %vm3565, %vm3566
          %v3568 = vsel %vm3567, %v3560, %v3564
          %v3569 = vand.u32 2147483647, %v3392
          %vm3570 = vcmp.eq.f32.partialorder %v3569, 8.507059e+37
          %v3571 = vand.u32 %v3392, 2147483648
          %v3572 = vor.u32 1.1754944e-38, %v3571
          %v3573 = vsel %vm3570, %v3572, %v3568
          %v3574 = vmul.f32 1.0, %v3573
          %v3575 = vrcp.pop %v3393
          %v3576 = vmul.f32 %v3393, %v3575
          %v3577 = vsub.f32 1.0, %v3576
          %v3578 = vmul.f32 %v3575, %v3577
          %v3579 = vadd.f32 %v3575, %v3578
          %vm3580 = vweird.f32 %v3393
          %vm3581 = vweird.f32 %v3575
          %vm3582 = vmor %vm3580, %vm3581
          %v3583 = vsel %vm3582, %v3575, %v3579
          %v3584 = vand.u32 2147483647, %v3393
          %vm3585 = vcmp.eq.f32.partialorder %v3584, 8.507059e+37
          %v3586 = vand.u32 %v3393, 2147483648
          %v3587 = vor.u32 1.1754944e-38, %v3586
          %v3588 = vsel %vm3585, %v3587, %v3583
          %v3589 = vmul.f32 1.0, %v3588
          %v3590 = vrcp.pop %v3394
          %v3591 = vmul.f32 %v3394, %v3590
          %v3592 = vsub.f32 1.0, %v3591
          %v3593 = vmul.f32 %v3590, %v3592
          %v3594 = vadd.f32 %v3590, %v3593
          %vm3595 = vweird.f32 %v3394
          %vm3596 = vweird.f32 %v3590
          %vm3597 = vmor %vm3595, %vm3596
          %v3598 = vsel %vm3597, %v3590, %v3594
          %v3599 = vand.u32 2147483647, %v3394
          %vm3600 = vcmp.eq.f32.partialorder %v3599, 8.507059e+37
          %v3601 = vand.u32 %v3394, 2147483648
          %v3602 = vor.u32 1.1754944e-38, %v3601
          %v3603 = vsel %vm3600, %v3602, %v3598
          %v3604 = vmul.f32 1.0, %v3603
          %v3605 = vrcp.pop %v3395
          %v3606 = vmul.f32 %v3395, %v3605
          %v3607 = vsub.f32 1.0, %v3606
          %v3608 = vmul.f32 %v3605, %v3607
          %v3609 = vadd.f32 %v3605, %v3608
          %vm3610 = vweird.f32 %v3395
          %vm3611 = vweird.f32 %v3605
          %vm3612 = vmor %vm3610, %vm3611
          %v3613 = vsel %vm3612, %v3605, %v3609
          %v3614 = vand.u32 2147483647, %v3395
          %vm3615 = vcmp.eq.f32.partialorder %v3614, 8.507059e+37
          %v3616 = vand.u32 %v3395, 2147483648
          %v3617 = vor.u32 1.1754944e-38, %v3616
          %v3618 = vsel %vm3615, %v3617, %v3613
          %v3619 = vmul.f32 1.0, %v3618
          %v3620 = vrcp.pop %v3396
          %v3621 = vmul.f32 %v3396, %v3620
          %v3622 = vsub.f32 1.0, %v3621
          %v3623 = vmul.f32 %v3620, %v3622
          %v3624 = vadd.f32 %v3620, %v3623
          %vm3625 = vweird.f32 %v3396
          %vm3626 = vweird.f32 %v3620
          %vm3627 = vmor %vm3625, %vm3626
          %v3628 = vsel %vm3627, %v3620, %v3624
          %v3629 = vand.u32 2147483647, %v3396
          %vm3630 = vcmp.eq.f32.partialorder %v3629, 8.507059e+37
          %v3631 = vand.u32 %v3396, 2147483648
          %v3632 = vor.u32 1.1754944e-38, %v3631
          %v3633 = vsel %vm3630, %v3632, %v3628
          %v3634 = vmul.f32 1.0, %v3633
          %v3635 = vrcp.pop %v3397
          %v3636 = vmul.f32 %v3397, %v3635
          %v3637 = vsub.f32 1.0, %v3636
          %v3638 = vmul.f32 %v3635, %v3637
          %v3639 = vadd.f32 %v3635, %v3638
          %vm3640 = vweird.f32 %v3397
          %vm3641 = vweird.f32 %v3635
          %vm3642 = vmor %vm3640, %vm3641
          %v3643 = vsel %vm3642, %v3635, %v3639
          %v3644 = vand.u32 2147483647, %v3397
          %vm3645 = vcmp.eq.f32.partialorder %v3644, 8.507059e+37
          %v3646 = vand.u32 %v3397, 2147483648
          %v3647 = vor.u32 1.1754944e-38, %v3646
          %v3648 = vsel %vm3645, %v3647, %v3643
          %v3649 = vmul.f32 1.0, %v3648
          %v3650 = vrcp.pop %v3398
          %v3651 = vmul.f32 %v3398, %v3650
          %v3652 = vsub.f32 1.0, %v3651
          %v3653 = vmul.f32 %v3650, %v3652
          %v3654 = vadd.f32 %v3650, %v3653
          %vm3655 = vweird.f32 %v3398
          %vm3656 = vweird.f32 %v3650
          %vm3657 = vmor %vm3655, %vm3656
          %v3658 = vsel %vm3657, %v3650, %v3654
          %v3659 = vand.u32 2147483647, %v3398
          %vm3660 = vcmp.eq.f32.partialorder %v3659, 8.507059e+37
          %v3661 = vand.u32 %v3398, 2147483648
          %v3662 = vor.u32 1.1754944e-38, %v3661
          %v3663 = vsel %vm3660, %v3662, %v3658
          %v3664 = vmul.f32 1.0, %v3663
          %v3665 = vrcp.pop %v3399
          %v3666 = vmul.f32 %v3399, %v3665
          %v3667 = vsub.f32 1.0, %v3666
          %v3668 = vmul.f32 %v3665, %v3667
          %v3669 = vadd.f32 %v3665, %v3668
          %vm3670 = vweird.f32 %v3399
          %vm3671 = vweird.f32 %v3665
          %vm3672 = vmor %vm3670, %vm3671
          %v3673 = vsel %vm3672, %v3665, %v3669
          %v3674 = vand.u32 2147483647, %v3399
          %vm3675 = vcmp.eq.f32.partialorder %v3674, 8.507059e+37
          %v3676 = vand.u32 %v3399, 2147483648
          %v3677 = vor.u32 1.1754944e-38, %v3676
          %v3678 = vsel %vm3675, %v3677, %v3673
          %v3679 = vmul.f32 1.0, %v3678
          %v3680 = vrcp.pop %v3400
          %v3681 = vmul.f32 %v3400, %v3680
          %v3682 = vsub.f32 1.0, %v3681
          %v3683 = vmul.f32 %v3680, %v3682
          %v3684 = vadd.f32 %v3680, %v3683
          %vm3685 = vweird.f32 %v3400
          %vm3686 = vweird.f32 %v3680
          %vm3687 = vmor %vm3685, %vm3686
          %v3688 = vsel %vm3687, %v3680, %v3684
          %v3689 = vand.u32 2147483647, %v3400
          %vm3690 = vcmp.eq.f32.partialorder %v3689, 8.507059e+37
          %v3691 = vand.u32 %v3400, 2147483648
          %v3692 = vor.u32 1.1754944e-38, %v3691
          %v3693 = vsel %vm3690, %v3692, %v3688
          %v3694 = vmul.f32 1.0, %v3693
          %v3695 = vrcp.pop %v3401
          %v3696 = vmul.f32 %v3401, %v3695
          %v3697 = vsub.f32 1.0, %v3696
          %v3698 = vmul.f32 %v3695, %v3697
          %v3699 = vadd.f32 %v3695, %v3698
          %vm3700 = vweird.f32 %v3401
          %vm3701 = vweird.f32 %v3695
          %vm3702 = vmor %vm3700, %vm3701
          %v3703 = vsel %vm3702, %v3695, %v3699
          %v3704 = vand.u32 2147483647, %v3401
          %vm3705 = vcmp.eq.f32.partialorder %v3704, 8.507059e+37
          %v3706 = vand.u32 %v3401, 2147483648
          %v3707 = vor.u32 1.1754944e-38, %v3706
          %v3708 = vsel %vm3705, %v3707, %v3703
          %v3709 = vmul.f32 1.0, %v3708
          %v3710 = vrcp.pop %v3402
          %v3711 = vmul.f32 %v3402, %v3710
          %v3712 = vsub.f32 1.0, %v3711
          %v3713 = vmul.f32 %v3710, %v3712
          %v3714 = vadd.f32 %v3710, %v3713
          %vm3715 = vweird.f32 %v3402
          %vm3716 = vweird.f32 %v3710
          %vm3717 = vmor %vm3715, %vm3716
          %v3718 = vsel %vm3717, %v3710, %v3714
          %v3719 = vand.u32 2147483647, %v3402
          %vm3720 = vcmp.eq.f32.partialorder %v3719, 8.507059e+37
          %v3721 = vand.u32 %v3402, 2147483648
          %v3722 = vor.u32 1.1754944e-38, %v3721
          %v3723 = vsel %vm3720, %v3722, %v3718
          %v3724 = vmul.f32 1.0, %v3723
          %v3725 = vrcp.pop %v3403
          %v3726 = vmul.f32 %v3403, %v3725
          %v3727 = vsub.f32 1.0, %v3726
          %v3728 = vmul.f32 %v3725, %v3727
          %v3729 = vadd.f32 %v3725, %v3728
          %vm3730 = vweird.f32 %v3403
          %vm3731 = vweird.f32 %v3725
          %vm3732 = vmor %vm3730, %vm3731
          %v3733 = vsel %vm3732, %v3725, %v3729
          %v3734 = vand.u32 2147483647, %v3403
          %vm3735 = vcmp.eq.f32.partialorder %v3734, 8.507059e+37
          %v3736 = vand.u32 %v3403, 2147483648
          %v3737 = vor.u32 1.1754944e-38, %v3736
          %v3738 = vsel %vm3735, %v3737, %v3733
          %v3739 = vmul.f32 1.0, %v3738
          %v3740 = vrcp.pop %v3404
          %v3741 = vmul.f32 %v3404, %v3740
          %v3742 = vsub.f32 1.0, %v3741
          %v3743 = vmul.f32 %v3740, %v3742
          %v3744 = vadd.f32 %v3740, %v3743
          %vm3745 = vweird.f32 %v3404
          %vm3746 = vweird.f32 %v3740
          %vm3747 = vmor %vm3745, %vm3746
          %v3748 = vsel %vm3747, %v3740, %v3744
          %v3749 = vand.u32 2147483647, %v3404
          %vm3750 = vcmp.eq.f32.partialorder %v3749, 8.507059e+37
          %v3751 = vand.u32 %v3404, 2147483648
          %v3752 = vor.u32 1.1754944e-38, %v3751
          %v3753 = vsel %vm3750, %v3752, %v3748
          %v3754 = vmul.f32 1.0, %v3753
          %v3755 = vrcp.pop %v3405
          %v3756 = vmul.f32 %v3405, %v3755
          %v3757 = vsub.f32 1.0, %v3756
          %v3758 = vmul.f32 %v3755, %v3757
          %v3759 = vadd.f32 %v3755, %v3758
          %vm3760 = vweird.f32 %v3405
          %vm3761 = vweird.f32 %v3755
          %vm3762 = vmor %vm3760, %vm3761
          %v3763 = vsel %vm3762, %v3755, %v3759
          %v3764 = vand.u32 2147483647, %v3405
          %vm3765 = vcmp.eq.f32.partialorder %v3764, 8.507059e+37
          %v3766 = vand.u32 %v3405, 2147483648
          %v3767 = vor.u32 1.1754944e-38, %v3766
          %v3768 = vsel %vm3765, %v3767, %v3763
          %v3769 = vmul.f32 1.0, %v3768
          %v3770 = vrcp.pop %v3406
          %v3771 = vmul.f32 %v3406, %v3770
          %v3772 = vsub.f32 1.0, %v3771
          %v3773 = vmul.f32 %v3770, %v3772
          %v3774 = vadd.f32 %v3770, %v3773
          %vm3775 = vweird.f32 %v3406
          %vm3776 = vweird.f32 %v3770
          %vm3777 = vmor %vm3775, %vm3776
          %v3778 = vsel %vm3777, %v3770, %v3774
          %v3779 = vand.u32 2147483647, %v3406
          %vm3780 = vcmp.eq.f32.partialorder %v3779, 8.507059e+37
          %v3781 = vand.u32 %v3406, 2147483648
          %v3782 = vor.u32 1.1754944e-38, %v3781
          %v3783 = vsel %vm3780, %v3782, %v3778
          %v3784 = vmul.f32 1.0, %v3783
          %v3785 = vrcp.pop %v3407
          %v3786 = vmul.f32 %v3407, %v3785
          %v3787 = vsub.f32 1.0, %v3786
          %v3788 = vmul.f32 %v3785, %v3787
          %v3789 = vadd.f32 %v3785, %v3788
          %vm3790 = vweird.f32 %v3407
          %vm3791 = vweird.f32 %v3785
          %vm3792 = vmor %vm3790, %vm3791
          %v3793 = vsel %vm3792, %v3785, %v3789
          %v3794 = vand.u32 2147483647, %v3407
          %vm3795 = vcmp.eq.f32.partialorder %v3794, 8.507059e+37
          %v3796 = vand.u32 %v3407, 2147483648
          %v3797 = vor.u32 1.1754944e-38, %v3796
          %v3798 = vsel %vm3795, %v3797, %v3793
          %v3799 = vmul.f32 1.0, %v3798
          %v3800 = vrcp.pop %v3408
          %v3801 = vmul.f32 %v3408, %v3800
          %v3802 = vsub.f32 1.0, %v3801
          %v3803 = vmul.f32 %v3800, %v3802
          %v3804 = vadd.f32 %v3800, %v3803
          %vm3805 = vweird.f32 %v3408
          %vm3806 = vweird.f32 %v3800
          %vm3807 = vmor %vm3805, %vm3806
          %v3808 = vsel %vm3807, %v3800, %v3804
          %v3809 = vand.u32 2147483647, %v3408
          %vm3810 = vcmp.eq.f32.partialorder %v3809, 8.507059e+37
          %v3811 = vand.u32 %v3408, 2147483648
          %v3812 = vor.u32 1.1754944e-38, %v3811
          %v3813 = vsel %vm3810, %v3812, %v3808
          %v3814 = vmul.f32 1.0, %v3813
          %v3815 = vrcp.pop %v3409
          %v3816 = vmul.f32 %v3409, %v3815
          %v3817 = vsub.f32 1.0, %v3816
          %v3818 = vmul.f32 %v3815, %v3817
          %v3819 = vadd.f32 %v3815, %v3818
          %vm3820 = vweird.f32 %v3409
          %vm3821 = vweird.f32 %v3815
          %vm3822 = vmor %vm3820, %vm3821
          %v3823 = vsel %vm3822, %v3815, %v3819
          %v3824 = vand.u32 2147483647, %v3409
          %vm3825 = vcmp.eq.f32.partialorder %v3824, 8.507059e+37
          %v3826 = vand.u32 %v3409, 2147483648
          %v3827 = vor.u32 1.1754944e-38, %v3826
          %v3828 = vsel %vm3825, %v3827, %v3823
          %v3829 = vmul.f32 1.0, %v3828
          %v3830 = vrcp.pop %v3410
          %v3831 = vmul.f32 %v3410, %v3830
          %v3832 = vsub.f32 1.0, %v3831
          %v3833 = vmul.f32 %v3830, %v3832
          %v3834 = vadd.f32 %v3830, %v3833
          %vm3835 = vweird.f32 %v3410
          %vm3836 = vweird.f32 %v3830
          %vm3837 = vmor %vm3835, %vm3836
          %v3838 = vsel %vm3837, %v3830, %v3834
          %v3839 = vand.u32 2147483647, %v3410
          %vm3840 = vcmp.eq.f32.partialorder %v3839, 8.507059e+37
          %v3841 = vand.u32 %v3410, 2147483648
          %v3842 = vor.u32 1.1754944e-38, %v3841
          %v3843 = vsel %vm3840, %v3842, %v3838
          %v3844 = vmul.f32 1.0, %v3843
          %v3845 = vrcp.pop %v3411
          %v3846 = vmul.f32 %v3411, %v3845
          %v3847 = vsub.f32 1.0, %v3846
          %v3848 = vmul.f32 %v3845, %v3847
          %v3849 = vadd.f32 %v3845, %v3848
          %vm3850 = vweird.f32 %v3411
          %vm3851 = vweird.f32 %v3845
          %vm3852 = vmor %vm3850, %vm3851
          %v3853 = vsel %vm3852, %v3845, %v3849
          %v3854 = vand.u32 2147483647, %v3411
          %vm3855 = vcmp.eq.f32.partialorder %v3854, 8.507059e+37
          %v3856 = vand.u32 %v3411, 2147483648
          %v3857 = vor.u32 1.1754944e-38, %v3856
          %v3858 = vsel %vm3855, %v3857, %v3853
          %v3859 = vmul.f32 1.0, %v3858
          %v3860 = vrcp.pop %v3412
          %v3861 = vmul.f32 %v3412, %v3860
          %v3862 = vsub.f32 1.0, %v3861
          %v3863 = vmul.f32 %v3860, %v3862
          %v3864 = vadd.f32 %v3860, %v3863
          %vm3865 = vweird.f32 %v3412
          %vm3866 = vweird.f32 %v3860
          %vm3867 = vmor %vm3865, %vm3866
          %v3868 = vsel %vm3867, %v3860, %v3864
          %v3869 = vand.u32 2147483647, %v3412
          %vm3870 = vcmp.eq.f32.partialorder %v3869, 8.507059e+37
          %v3871 = vand.u32 %v3412, 2147483648
          %v3872 = vor.u32 1.1754944e-38, %v3871
          %v3873 = vsel %vm3870, %v3872, %v3868
          %v3874 = vmul.f32 1.0, %v3873
          %v3875 = vrcp.pop %v3413
          %v3876 = vmul.f32 %v3413, %v3875
          %v3877 = vsub.f32 1.0, %v3876
          %v3878 = vmul.f32 %v3875, %v3877
          %v3879 = vadd.f32 %v3875, %v3878
          %vm3880 = vweird.f32 %v3413
          %vm3881 = vweird.f32 %v3875
          %vm3882 = vmor %vm3880, %vm3881
          %v3883 = vsel %vm3882, %v3875, %v3879
          %v3884 = vand.u32 2147483647, %v3413
          %vm3885 = vcmp.eq.f32.partialorder %v3884, 8.507059e+37
          %v3886 = vand.u32 %v3413, 2147483648
          %v3887 = vor.u32 1.1754944e-38, %v3886
          %v3888 = vsel %vm3885, %v3887, %v3883
          %v3889 = vmul.f32 1.0, %v3888
          %v3890 = vrcp.pop %v3414
          %v3891 = vmul.f32 %v3414, %v3890
          %v3892 = vsub.f32 1.0, %v3891
          %v3893 = vmul.f32 %v3890, %v3892
          %v3894 = vadd.f32 %v3890, %v3893
          %vm3895 = vweird.f32 %v3414
          %vm3896 = vweird.f32 %v3890
          %vm3897 = vmor %vm3895, %vm3896
          %v3898 = vsel %vm3897, %v3890, %v3894
          %v3899 = vand.u32 2147483647, %v3414
          %vm3900 = vcmp.eq.f32.partialorder %v3899, 8.507059e+37
          %v3901 = vand.u32 %v3414, 2147483648
          %v3902 = vor.u32 1.1754944e-38, %v3901
          %v3903 = vsel %vm3900, %v3902, %v3898
          %v3904 = vmul.f32 1.0, %v3903
          %v3905 = vrcp.pop %v3415
          %v3906 = vmul.f32 %v3415, %v3905
          %v3907 = vsub.f32 1.0, %v3906
          %v3908 = vmul.f32 %v3905, %v3907
          %v3909 = vadd.f32 %v3905, %v3908
          %vm3910 = vweird.f32 %v3415
          %vm3911 = vweird.f32 %v3905
          %vm3912 = vmor %vm3910, %vm3911
          %v3913 = vsel %vm3912, %v3905, %v3909
          %v3914 = vand.u32 2147483647, %v3415
          %vm3915 = vcmp.eq.f32.partialorder %v3914, 8.507059e+37
          %v3916 = vand.u32 %v3415, 2147483648
          %v3917 = vor.u32 1.1754944e-38, %v3916
          %v3918 = vsel %vm3915, %v3917, %v3913
          %v3919 = vmul.f32 1.0, %v3918
          %v3920 = vrcp.pop %v3416
          %v3921 = vmul.f32 %v3416, %v3920
          %v3922 = vsub.f32 1.0, %v3921
          %v3923 = vmul.f32 %v3920, %v3922
          %v3924 = vadd.f32 %v3920, %v3923
          %vm3925 = vweird.f32 %v3416
          %vm3926 = vweird.f32 %v3920
          %vm3927 = vmor %vm3925, %vm3926
          %v3928 = vsel %vm3927, %v3920, %v3924
          %v3929 = vand.u32 2147483647, %v3416
          %vm3930 = vcmp.eq.f32.partialorder %v3929, 8.507059e+37
          %v3931 = vand.u32 %v3416, 2147483648
          %v3932 = vor.u32 1.1754944e-38, %v3931
          %v3933 = vsel %vm3930, %v3932, %v3928
          %v3934 = vmul.f32 1.0, %v3933
          %v3935 = vrcp.pop %v3417
          %v3936 = vmul.f32 %v3417, %v3935
          %v3937 = vsub.f32 1.0, %v3936
          %v3938 = vmul.f32 %v3935, %v3937
          %v3939 = vadd.f32 %v3935, %v3938
          %vm3940 = vweird.f32 %v3417
          %vm3941 = vweird.f32 %v3935
          %vm3942 = vmor %vm3940, %vm3941
          %v3943 = vsel %vm3942, %v3935, %v3939
          %v3944 = vand.u32 2147483647, %v3417
          %vm3945 = vcmp.eq.f32.partialorder %v3944, 8.507059e+37
          %v3946 = vand.u32 %v3417, 2147483648
          %v3947 = vor.u32 1.1754944e-38, %v3946
          %v3948 = vsel %vm3945, %v3947, %v3943
          %v3949 = vmul.f32 1.0, %v3948
          %v3950 = vrcp.pop %v3418
          %v3951 = vmul.f32 %v3418, %v3950
          %v3952 = vsub.f32 1.0, %v3951
          %v3953 = vmul.f32 %v3950, %v3952
          %v3954 = vadd.f32 %v3950, %v3953
          %vm3955 = vweird.f32 %v3418
          %vm3956 = vweird.f32 %v3950
          %vm3957 = vmor %vm3955, %vm3956
          %v3958 = vsel %vm3957, %v3950, %v3954
          %v3959 = vand.u32 2147483647, %v3418
          %vm3960 = vcmp.eq.f32.partialorder %v3959, 8.507059e+37
          %v3961 = vand.u32 %v3418, 2147483648
          %v3962 = vor.u32 1.1754944e-38, %v3961
          %v3963 = vsel %vm3960, %v3962, %v3958
          %v3964 = vmul.f32 1.0, %v3963
          %v3965 = vrcp.pop %v3419
          %v3966 = vmul.f32 %v3419, %v3965
          %v3967 = vsub.f32 1.0, %v3966
          %v3968 = vmul.f32 %v3965, %v3967
          %v3969 = vadd.f32 %v3965, %v3968
          %vm3970 = vweird.f32 %v3419
          %vm3971 = vweird.f32 %v3965
          %vm3972 = vmor %vm3970, %vm3971
          %v3973 = vsel %vm3972, %v3965, %v3969
          %v3974 = vand.u32 2147483647, %v3419
          %vm3975 = vcmp.eq.f32.partialorder %v3974, 8.507059e+37
          %v3976 = vand.u32 %v3419, 2147483648
          %v3977 = vor.u32 1.1754944e-38, %v3976
          %v3978 = vsel %vm3975, %v3977, %v3973
          %v3979 = vmul.f32 1.0, %v3978
          %v3980 = vrcp.pop %v3420
          %v3981 = vmul.f32 %v3420, %v3980
          %v3982 = vsub.f32 1.0, %v3981
          %v3983 = vmul.f32 %v3980, %v3982
          %v3984 = vadd.f32 %v3980, %v3983
          %vm3985 = vweird.f32 %v3420
          %vm3986 = vweird.f32 %v3980
          %vm3987 = vmor %vm3985, %vm3986
          %v3988 = vsel %vm3987, %v3980, %v3984
          %v3989 = vand.u32 2147483647, %v3420
          %vm3990 = vcmp.eq.f32.partialorder %v3989, 8.507059e+37
          %v3991 = vand.u32 %v3420, 2147483648
          %v3992 = vor.u32 1.1754944e-38, %v3991
          %v3993 = vsel %vm3990, %v3992, %v3988
          %v3994 = vmul.f32 1.0, %v3993
          %v3995 = vrcp.pop %v3421
          %v3996 = vmul.f32 %v3421, %v3995
          %v3997 = vsub.f32 1.0, %v3996
          %v3998 = vmul.f32 %v3995, %v3997
          %v3999 = vadd.f32 %v3995, %v3998
          %vm4000 = vweird.f32 %v3421
          %vm4001 = vweird.f32 %v3995
          %vm4002 = vmor %vm4000, %vm4001
          %v4003 = vsel %vm4002, %v3995, %v3999
          %v4004 = vand.u32 2147483647, %v3421
          %vm4005 = vcmp.eq.f32.partialorder %v4004, 8.507059e+37
          %v4006 = vand.u32 %v3421, 2147483648
          %v4007 = vor.u32 1.1754944e-38, %v4006
          %v4008 = vsel %vm4005, %v4007, %v4003
          %v4009 = vmul.f32 1.0, %v4008
          %v4010 = vrcp.pop %v3422
          %v4011 = vmul.f32 %v3422, %v4010
          %v4012 = vsub.f32 1.0, %v4011
          %v4013 = vmul.f32 %v4010, %v4012
          %v4014 = vadd.f32 %v4010, %v4013
          %vm4015 = vweird.f32 %v3422
          %vm4016 = vweird.f32 %v4010
          %vm4017 = vmor %vm4015, %vm4016
          %v4018 = vsel %vm4017, %v4010, %v4014
          %v4019 = vand.u32 2147483647, %v3422
          %vm4020 = vcmp.eq.f32.partialorder %v4019, 8.507059e+37
          %v4021 = vand.u32 %v3422, 2147483648
          %v4022 = vor.u32 1.1754944e-38, %v4021
          %v4023 = vsel %vm4020, %v4022, %v4018
          %v4024 = vmul.f32 1.0, %v4023
          %v4025 = vrcp.pop %v3423
          %v4026 = vmul.f32 %v3423, %v4025
          %v4027 = vsub.f32 1.0, %v4026
          %v4028 = vmul.f32 %v4025, %v4027
          %v4029 = vadd.f32 %v4025, %v4028
          %vm4030 = vweird.f32 %v3423
          %vm4031 = vweird.f32 %v4025
          %vm4032 = vmor %vm4030, %vm4031
          %v4033 = vsel %vm4032, %v4025, %v4029
          %v4034 = vand.u32 2147483647, %v3423
          %vm4035 = vcmp.eq.f32.partialorder %v4034, 8.507059e+37
          %v4036 = vand.u32 %v3423, 2147483648
          %v4037 = vor.u32 1.1754944e-38, %v4036
          %v4038 = vsel %vm4035, %v4037, %v4033
          %v4039 = vmul.f32 1.0, %v4038
          %v4040 = vrcp.pop %v3424
          %v4041 = vmul.f32 %v3424, %v4040
          %v4042 = vsub.f32 1.0, %v4041
          %v4043 = vmul.f32 %v4040, %v4042
          %v4044 = vadd.f32 %v4040, %v4043
          %vm4045 = vweird.f32 %v3424
          %vm4046 = vweird.f32 %v4040
          %vm4047 = vmor %vm4045, %vm4046
          %v4048 = vsel %vm4047, %v4040, %v4044
          %v4049 = vand.u32 2147483647, %v3424
          %vm4050 = vcmp.eq.f32.partialorder %v4049, 8.507059e+37
          %v4051 = vand.u32 %v3424, 2147483648
          %v4052 = vor.u32 1.1754944e-38, %v4051
          %v4053 = vsel %vm4050, %v4052, %v4048
          %v4054 = vmul.f32 1.0, %v4053
          %vm4055 = vcmask 7168
          %4056 = vst.msk [vmem:[%s295] sm:$0xff] %vm4055, %v3439
          %4057 = vst.msk [vmem:[%s295 + $0x8] sm:$0xff] %vm4055, %v3454
          %4058 = vst.msk [vmem:[%s295 + $0x10] sm:$0xff] %vm4055, %v3469
          %4059 = vst.msk [vmem:[%s295 + $0x18] sm:$0xff] %vm4055, %v3484
          %4060 = vst.msk [vmem:[%s295 + $0x20] sm:$0xff] %vm4055, %v3499
          %4061 = vst.msk [vmem:[%s295 + $0x28] sm:$0xff] %vm4055, %v3514
          %4062 = vst.msk [vmem:[%s295 + $0x30] sm:$0xff] %vm4055, %v3529
          %4063 = vst.msk [vmem:[%s295 + $0x38] sm:$0xff] %vm4055, %v3544
          %4064 = vst.msk [vmem:[%s295 + $0x40] sm:$0xff] %vm4055, %v3559
          %4065 = vst.msk [vmem:[%s295 + $0x48] sm:$0xff] %vm4055, %v3574
          %4066 = vst.msk [vmem:[%s295 + $0x50] sm:$0xff] %vm4055, %v3589
          %4067 = vst.msk [vmem:[%s295 + $0x58] sm:$0xff] %vm4055, %v3604
          %4068 = vst.msk [vmem:[%s295 + $0x60] sm:$0xff] %vm4055, %v3619
          %4069 = vst.msk [vmem:[%s295 + $0x68] sm:$0xff] %vm4055, %v3634
          %4070 = vst.msk [vmem:[%s295 + $0x70] sm:$0xff] %vm4055, %v3649
          %4071 = vst.msk [vmem:[%s295 + $0x78] sm:$0xff] %vm4055, %v3664
          %4072 = vst.msk [vmem:[%s295 + $0x80] sm:$0xff] %vm4055, %v3679
          %4073 = vst.msk [vmem:[%s295 + $0x88] sm:$0xff] %vm4055, %v3694
          %4074 = vst.msk [vmem:[%s295 + $0x90] sm:$0xff] %vm4055, %v3709
          %4075 = vst.msk [vmem:[%s295 + $0x98] sm:$0xff] %vm4055, %v3724
          %4076 = vst.msk [vmem:[%s295 + $0xa0] sm:$0xff] %vm4055, %v3739
          %4077 = vst.msk [vmem:[%s295 + $0xa8] sm:$0xff] %vm4055, %v3754
          %4078 = vst.msk [vmem:[%s295 + $0xb0] sm:$0xff] %vm4055, %v3769
          %4079 = vst.msk [vmem:[%s295 + $0xb8] sm:$0xff] %vm4055, %v3784
          %4080 = vst.msk [vmem:[%s295 + $0xc0] sm:$0xff] %vm4055, %v3799
          %4081 = vst.msk [vmem:[%s295 + $0xc8] sm:$0xff] %vm4055, %v3814
          %4082 = vst.msk [vmem:[%s295 + $0xd0] sm:$0xff] %vm4055, %v3829
          %4083 = vst.msk [vmem:[%s295 + $0xd8] sm:$0xff] %vm4055, %v3844
          %4084 = vst.msk [vmem:[%s295 + $0xe0] sm:$0xff] %vm4055, %v3859
          %4085 = vst.msk [vmem:[%s295 + $0xe8] sm:$0xff] %vm4055, %v3874
          %4086 = vst.msk [vmem:[%s295 + $0xf0] sm:$0xff] %vm4055, %v3889
          %4087 = vst.msk [vmem:[%s295 + $0xf8] sm:$0xff] %vm4055, %v3904
          %4088 = vst.msk [vmem:[%s295 + $0x100] sm:$0xff] %vm4055, %v3919
          %4089 = vst.msk [vmem:[%s295 + $0x108] sm:$0xff] %vm4055, %v3934
          %4090 = vst.msk [vmem:[%s295 + $0x110] sm:$0xff] %vm4055, %v3949
          %4091 = vst.msk [vmem:[%s295 + $0x118] sm:$0xff] %vm4055, %v3964
          %4092 = vst.msk [vmem:[%s295 + $0x120] sm:$0xff] %vm4055, %v3979
          %4093 = vst.msk [vmem:[%s295 + $0x128] sm:$0xff] %vm4055, %v3994
          %4094 = vst.msk [vmem:[%s295 + $0x130] sm:$0xff] %vm4055, %v4009
          %4095 = vst.msk [vmem:[%s295 + $0x138] sm:$0xff] %vm4055, %v4024
          %4096 = vst.msk [vmem:[%s295 + $0x140] sm:$0xff] %vm4055, %v4039
          %4097 = vst.msk [vmem:[%s295 + $0x148] sm:$0xff] %vm4055, %v4054
        $region60: #{tpu_custom_call.1} parent=39 // pred_fallthru
          _
        %s4098 = smul.u32 42, %s25
        %p4099 = scmp.lt.s32.totalorder %s4098, 125
        %s4100 = scalar_select %p4099, %s4098, 125
        %s4101 = smul.addr %s4100, 8
        %s4102 = scalar_lea.vmem %s5, %s4101
        // Predicated region
        $region61: #{tpu_custom_call.1} parent=39 // pred_check
          %p4103 = pneg %p163
        $region62: #{tpu_custom_call.1} parent=39 // pred_check_branch
          %4105 = sbr.rel (%p4103) target = $region64
        $region63: #{tpu_custom_call.1} parent=39 // pred_region
          %s4106 = smul.u32 42, %s25
        $region64: #{tpu_custom_call.1} parent=39 // pred_fallthru
          _
      $region40: #{tpu_custom_call.1} parent=5 // pred_fallthru
        _
      %p4107 = scmp.le.s32.totalorder 2, %s16
      // Predicated region
      $region65: #{tpu_custom_call.1} parent=5 // pred_check
        %p4108 = pneg %p4107
      $region66: #{tpu_custom_call.1} parent=5 // pred_check_branch
        %4110 = sbr.rel (%p4108) target = $region68
      $region67: #{tpu_custom_call.1} parent=5 // pred_region
        %s4111 = ssub.s32 %s16, 2
        // Predicated region
        $region69: #{tpu_custom_call.1} parent=67 // pred_check
          %p4112 = pneg %p169
        $region70: #{tpu_custom_call.1} parent=67 // pred_check_branch
          %4114 = sbr.rel (%p4112) target = $region72
        $region71: #{tpu_custom_call.1} parent=67 // pred_region
          %s4115 = smul.u32 42, %s27
          %p4116 = scmp.lt.s32.totalorder %s4115, 125
          %s4117 = scalar_select %p4116, %s4115, 125
          %s4118 = smul.addr %s4117, 8
          %s4119 = scalar_lea.vmem %s5, %s4118
        $region72: #{tpu_custom_call.1} parent=67 // pred_fallthru
          _
      $region68: #{tpu_custom_call.1} parent=5 // pred_fallthru
        _
    $region6: #{tpu_custom_call.1} parent=1 // loop_footer
      %s20 = sadd.s32 1, %s16
    $region7: #{tpu_custom_call.1} parent=1 // loop_footer_branch
      %15 = sbr.rel target = $region3
    $region8: #{tpu_custom_call.1} parent=1 // loop_exit
      _
    %4120 = vsyncpa [#allocation5], 1
    %s4121 = scalar_lea.sflag [#allocation5], 1
    %4122 = vsyncpa %s4121, 1
    %4123 = vsyncpa [#allocation7], 1

</llo_original>
